<compile_context>
chip_gen: v7x
topology: tpu7x:2x2x1
jax: 0.10.0
libtpu: 0.0.40
codegen_flags: <defaults>
</compile_context>

<pallas_src>
import jax
import jax.numpy as jnp
from jax import lax
from jax.experimental import pallas as pl
from jax.experimental.pallas import tpu as pltpu


# --------------------------------------------------------------------------
# Kernel 1: LSTM recurrence over one T-chunk per grid step
# --------------------------------------------------------------------------
def _make_recurrence_kernel(T_valid, unroll):
    """T_valid: None if the time axis is not padded, else #real timesteps."""

    def kernel(x_ref, h0_ref, c0_ref,
               wih0_ref, whh0_ref, b0_ref,
               wih1_ref, whh1_ref, b1_ref,
               h1_ref, hn_ref, cn_ref,
               xw0_sc, state_sc):
        Tc, Bp, twoH = x_ref.shape
        H = whh0_ref.shape[0]
        chunk = pl.program_id(0)

        # Initialise carried state from (h0, c0) on the first chunk.
        @pl.when(chunk == 0)
        def _():
            state_sc[0] = h0_ref[0]
            state_sc[1] = c0_ref[0]
            state_sc[2] = h0_ref[1]
            state_sc[3] = c0_ref[1]

        # Invariant weights: load once per chunk, not per step.
        whh0 = whh0_ref[...]
        wih1 = wih1_ref[...]
        whh1 = whh1_ref[...]
        b1 = b1_ref[...]

        # Layer-0 input projection has no recurrent dependency: one batched
        # (Tc*Bp, 2H) x (2H, 4H) MXU matmul per chunk (bias folded in).
        x_flat = x_ref[...].reshape(Tc * Bp, twoH)
        xw0_sc[...] = (jnp.dot(x_flat, wih0_ref[...],
                               preferred_element_type=jnp.float32)
                       + b0_ref[...]).reshape(Tc, Bp, 4 * H)

        def lstm_gates(gates, c_prev):
            # sigmoid(z) == 0.5*tanh(z/2)+0.5; the 0.5 pre-scale of the i/f/o
            # gate columns is folded into the weights in the wrapper, so a
            # single tanh covers the whole 4H tile: 2 EUP passes per layer-step.
            th = jnp.tanh(gates)
            i = 0.5 * th[:, 0 * H:1 * H] + 0.5
            f = 0.5 * th[:, 1 * H:2 * H] + 0.5
            g = th[:, 2 * H:3 * H]
            o = 0.5 * th[:, 3 * H:4 * H] + 0.5
            c_new = f * c_prev + i * g
            h_new = o * jnp.tanh(c_new)
            return h_new, c_new

        def step(t, carry):
            h0, c0, h1, c1 = carry
            # Layer 0: only the recurrent half of the gate pre-activation.
            g0 = xw0_sc[t] + jnp.dot(h0, whh0, preferred_element_type=jnp.float32)
            h0n, c0n = lstm_gates(g0, c0)
            # Layer 1: two small dots (no per-step concatenate).
            # TODO(synk): inter-layer rnn_dropout is train-only; eval forward is identity.
            g1 = (jnp.dot(h0n, wih1, preferred_element_type=jnp.float32)
                  + jnp.dot(h1, whh1, preferred_element_type=jnp.float32)
                  + b1)
            h1n, c1n = lstm_gates(g1, c1)
            h1_ref[t] = h1n
            if T_valid is not None:
                # Only the carried state must ignore zero-padded tail steps;
                # padded h1 / logits rows are sliced off in the wrapper.
                valid = (chunk * Tc + t) < T_valid
                h0n = jnp.where(valid, h0n, h0)
                c0n = jnp.where(valid, c0n, c0)
                h1n = jnp.where(valid, h1n, h1)
                c1n = jnp.where(valid, c1n, c1)
            return (h0n, c0n, h1n, c1n)

        carry0 = (state_sc[0], state_sc[1], state_sc[2], state_sc[3])
        h0f, c0f, h1f, c1f = lax.fori_loop(0, Tc, step, carry0, unroll=unroll)

        # Persist recurrent state for the next chunk.
        state_sc[0] = h0f
        state_sc[1] = c0f
        state_sc[2] = h1f
        state_sc[3] = c1f

        # Final hidden state written exactly once, at the last chunk.
        @pl.when(chunk == pl.num_programs(0) - 1)
        def _():
            hn_ref[0] = state_sc[0]
            hn_ref[1] = state_sc[2]
            cn_ref[0] = state_sc[1]
            cn_ref[1] = state_sc[3]

    return kernel


# --------------------------------------------------------------------------
# Kernel 2: lm_head GEMM, tiled over (T-chunk, vocab tile)
# --------------------------------------------------------------------------
def _lm_head_kernel(h1_ref, w_ref, b_ref, out_ref):
    Bp, Tc, H = h1_ref.shape
    Vt = w_ref.shape[1]
    acts = h1_ref[...].reshape(Bp * Tc, H)
    logits = jnp.dot(acts, w_ref[...], preferred_element_type=jnp.float32) + b_ref[...]
    out_ref[...] = logits.reshape(Bp, Tc, Vt)


# --------------------------------------------------------------------------
# Wrapper
# --------------------------------------------------------------------------
def decoder_forward(params, input_seq, hidden_state, encoder_outputs,
                    *, t_chunk=32, v_tile=512):
    """
    input_seq:        (B, T)  int32
    hidden_state:     ((L, B, H), (L, B, H))
    encoder_outputs:  (B, T, H)
    returns: logits (B, T, V), (h_n, c_n)
    """
    h0, c0 = hidden_state
    L, B, H = h0.shape
    assert L == 2, "kernel is specialised for num_layers=2"
    T = input_seq.shape[1]
    V = params["w_lm"].shape[1]

    Bp = ((B + 7) // 8) * 8                         # sublane-pad the batch

    Vt = min(v_tile, ((V + 127) // 128) * 128)      # lane-dense vocab tile
    Vp = ((V + Vt - 1) // Vt) * Vt                  # padded vocab

    Tc = min(t_chunk, T)                            # time chunk
    if Tc < T:
        Tc = max(8, (Tc // 8) * 8)
    Tp = ((T + Tc - 1) // Tc) * Tc
    T_valid = T if Tp > T else None

    # ---- glue: embedding gather + concat with encoder outputs (time-major, padded)
    emb = params["embedding"][input_seq]                            # (B, T, H)
    rnn_in = jnp.concatenate([encoder_outputs, emb], axis=-1)       # (B, T, 2H)
    rnn_in = jnp.transpose(rnn_in, (1, 0, 2)).astype(jnp.float32)   # (T, B, 2H)
    rnn_in = jnp.pad(rnn_in, ((0, Tp - T), (0, Bp - B), (0, 0)))
    h0p = jnp.pad(h0.astype(jnp.float32), ((0, 0), (0, Bp - B), (0, 0)))
    c0p = jnp.pad(c0.astype(jnp.float32), ((0, 0), (0, Bp - B), (0, 0)))

    # ---- fold the sigmoid-as-tanh 0.5 pre-scale into the i/f/o gate columns
    gate_scale = jnp.concatenate(
        [jnp.full((H,), 0.5), jnp.full((H,), 0.5),
         jnp.ones((H,)), jnp.full((H,), 0.5)]).astype(jnp.float32)
    w_ih0 = params["w_ih0"] * gate_scale
    w_hh0 = params["w_hh0"] * gate_scale
    b0 = params["b0"] * gate_scale
    w_ih1 = params["w_ih1"] * gate_scale
    w_hh1 = params["w_hh1"] * gate_scale
    b1 = params["b1"] * gate_scale

    n_chunks = Tp // Tc
    unroll = max(1, min(8, Tc))

    rec_kernel = _make_recurrence_kernel(T_valid, unroll)
    h1_tm, h_n, c_n = pl.pallas_call(
        rec_kernel,
        out_shape=(
            jax.ShapeDtypeStruct((Tp, Bp, H), jnp.float32),
            jax.ShapeDtypeStruct((L, Bp, H), jnp.float32),
            jax.ShapeDtypeStruct((L, Bp, H), jnp.float32),
        ),
        grid_spec=pltpu.PrefetchScalarGridSpec(
            num_scalar_prefetch=0,
            grid=(n_chunks,),
            in_specs=[
                pl.BlockSpec((Tc, Bp, 2 * H), lambda i: (i, 0, 0)),   # x chunk
                pl.BlockSpec((L, Bp, H), lambda i: (0, 0, 0)),        # h0
                pl.BlockSpec((L, Bp, H), lambda i: (0, 0, 0)),        # c0
                pl.BlockSpec((2 * H, 4 * H), lambda i: (0, 0)),       # w_ih0
                pl.BlockSpec((H, 4 * H), lambda i: (0, 0)),           # w_hh0
                pl.BlockSpec((1, 4 * H), lambda i: (0, 0)),           # b0
                pl.BlockSpec((H, 4 * H), lambda i: (0, 0)),           # w_ih1
                pl.BlockSpec((H, 4 * H), lambda i: (0, 0)),           # w_hh1
                pl.BlockSpec((1, 4 * H), lambda i: (0, 0)),           # b1
            ],
            out_specs=(
                pl.BlockSpec((Tc, Bp, H), lambda i: (i, 0, 0)),       # h1 chunk
                pl.BlockSpec((L, Bp, H), lambda i: (0, 0, 0)),        # h_n
                pl.BlockSpec((L, Bp, H), lambda i: (0, 0, 0)),        # c_n
            ),
            scratch_shapes=[
                pltpu.VMEM((Tc, Bp, 4 * H), jnp.float32),   # per-chunk x @ W_ih0 + b0
                pltpu.VMEM((4, Bp, H), jnp.float32),        # carried (h0,c0,h1,c1)
            ],
        ),
        compiler_params=pltpu.CompilerParams(
            dimension_semantics=("arbitrary",)),
    )(rnn_in, h0p, c0p, w_ih0, w_hh0, b0, w_ih1, w_hh1, b1)

    # Small glue re-layout of h1 (T*B*H, ~V/H-times smaller than the logits) so
    # the lm_head writes its output directly in (B, T, V) order — no HBM
    # transpose of the largest tensor.
    h1_bm = jnp.transpose(h1_tm, (1, 0, 2))                          # (Bp, Tp, H)

    w_lm = jnp.pad(params["w_lm"], ((0, 0), (0, Vp - V)))            # (H, Vp)
    b_lm = jnp.pad(params["b_lm"], ((0, 0), (0, Vp - V)))            # (1, Vp)

    logits = pl.pallas_call(
        _lm_head_kernel,
        out_shape=jax.ShapeDtypeStruct((Bp, Tp, Vp), jnp.float32),
        grid_spec=pltpu.PrefetchScalarGridSpec(
            num_scalar_prefetch=0,
            grid=(Tp // Tc, Vp // Vt),
            in_specs=[
                pl.BlockSpec((Bp, Tc, H), lambda i, j: (0, i, 0)),    # h1 slab (reused over j)
                pl.BlockSpec((H, Vt), lambda i, j: (0, j)),           # w_lm tile (streamed)
                pl.BlockSpec((1, Vt), lambda i, j: (0, j)),           # b_lm tile
            ],
            out_specs=pl.BlockSpec((Bp, Tc, Vt), lambda i, j: (0, i, j)),
        ),
        compiler_params=pltpu.CompilerParams(
            dimension_semantics=("parallel", "parallel")),
    )(h1_bm, w_lm, b_lm)

    return logits[:B, :T, :V], (h_n[:, :B, :], c_n[:, :B, :])


# --------------------------------------------------------------------------
# Pure-JAX reference (mirrors the PyTorch forward exactly)
# --------------------------------------------------------------------------
def decoder_reference(params, input_seq, hidden_state, encoder_outputs):
    h, c = hidden_state
    L, B, H = h.shape
    emb = params["embedding"][input_seq]
    rnn_in = jnp.concatenate([encoder_outputs, emb], axis=-1)
    outs = []
    for t in range(input_seq.shape[1]):
        inp = rnn_in[:, t, :]
        new_h, new_c = [], []
        for l in range(L):
            wih = params["w_ih0"] if l == 0 else params["w_ih1"]
            whh = params["w_hh0"] if l == 0 else params["w_hh1"]
            b = params["b0"] if l == 0 else params["b1"]
            gates = inp @ wih + h[l] @ whh + b
            i = jax.nn.sigmoid(gates[:, :H])
            f = jax.nn.sigmoid(gates[:, H:2 * H])
            g = jnp.tanh(gates[:, 2 * H:3 * H])
            o = jax.nn.sigmoid(gates[:, 3 * H:])
            cl = f * c[l] + i * g
            hl = o * jnp.tanh(cl)
            new_h.append(hl)
            new_c.append(cl)
            inp = hl
        h = jnp.stack(new_h)
        c = jnp.stack(new_c)
        outs.append(inp @ params["w_lm"] + params["b_lm"][0])
    return jnp.stack(outs, axis=1), (h, c)


# --------------------------------------------------------------------------
# Deterministic parameter init (shapes per Decoder.__init__, pre-transposed
# into the kernels' matmul layout)
# --------------------------------------------------------------------------
def init_params(key, n_vocab, hidden_dim):
    H = hidden_dim
    ks = jax.random.split(key, 12)
    u = lambda k, s: jax.random.uniform(k, s, jnp.float32, -0.1, 0.1)
    embedding = u(ks[0], (n_vocab, H))
    embedding = embedding.at[0].set(0.0)            # padding_idx=0
    params = {
        "embedding": embedding,
        # LSTM layer 0: W_ih (4H, 2H), W_hh (4H, H)  -> stored transposed
        "w_ih0": u(ks[1], (4 * H, 2 * H)).T,
        "w_hh0": u(ks[2], (4 * H, H)).T,
        "b0": (u(ks[3], (4 * H,)) + u(ks[4], (4 * H,)))[None, :],   # b_ih + b_hh
        # LSTM layer 1: W_ih (4H, H), W_hh (4H, H)   -> stored transposed
        "w_ih1": u(ks[5], (4 * H, H)).T,
        "w_hh1": u(ks[6], (4 * H, H)).T,
        "b1": (u(ks[7], (4 * H,)) + u(ks[8], (4 * H,)))[None, :],
        # lm_head: (V, H) -> stored transposed (H, V)
        "w_lm": u(ks[9], (n_vocab, H)).T,
        "b_lm": u(ks[10], (n_vocab,))[None, :],
    }
    return params


if __name__ == "__main__":
    n_vocab, H, L = 28, 32, 2
    B, T = 2, 8

    key = jax.random.PRNGKey(0)
    k_params, k_seq, k_enc, k_h, k_c = jax.random.split(key, 5)

    params = init_params(k_params, n_vocab, H)
    input_seq = jax.random.randint(k_seq, (B, T), 0, n_vocab, dtype=jnp.int32)
    encoder_outputs = jax.random.normal(k_enc, (B, T, H), jnp.float32)
    h0 = jax.random.normal(k_h, (L, B, H), jnp.float32)
    c0 = jax.random.normal(k_c, (L, B, H), jnp.float32)

    logits, (h_n, c_n) = decoder_forward(params, input_seq, (h0, c0),
                                         encoder_outputs)
    jax.block_until_ready((logits, h_n, c_n))

    ref_logits, (ref_h, ref_c) = decoder_reference(params, input_seq, (h0, c0),
                                                   encoder_outputs)
    assert logits.shape == (B, T, n_vocab)
    assert h_n.shape == (L, B, H) and c_n.shape == (L, B, H)
    assert jnp.allclose(logits, ref_logits, atol=1e-4, rtol=1e-4)
    assert jnp.allclose(h_n, ref_h, atol=1e-4, rtol=1e-4)
    assert jnp.allclose(c_n, ref_c, atol=1e-4, rtol=1e-4)

    print("KERNEL_OK")
</pallas_src>

<mosaic_0001>
module attributes {stable_mosaic.version = 11 : i64} {
  func.func @kernel(%arg0: i32, %arg1: memref<8x8x64xf32, #tpu.memory_space<vmem>>, %arg2: memref<2x8x32xf32, #tpu.memory_space<vmem>>, %arg3: memref<2x8x32xf32, #tpu.memory_space<vmem>>, %arg4: memref<64x128xf32, #tpu.memory_space<vmem>>, %arg5: memref<32x128xf32, #tpu.memory_space<vmem>>, %arg6: memref<1x128xf32, #tpu.memory_space<vmem>>, %arg7: memref<32x128xf32, #tpu.memory_space<vmem>>, %arg8: memref<32x128xf32, #tpu.memory_space<vmem>>, %arg9: memref<1x128xf32, #tpu.memory_space<vmem>>, %arg10: memref<8x8x32xf32, #tpu.memory_space<vmem>>, %arg11: memref<2x8x32xf32, #tpu.memory_space<vmem>>, %arg12: memref<2x8x32xf32, #tpu.memory_space<vmem>>, %arg13: memref<8x8x128xf32, #tpu.memory_space<vmem>>, %arg14: memref<4x8x32xf32, #tpu.memory_space<vmem>>) attributes {dimension_semantics = [#tpu.dimension_semantics<arbitrary>], iteration_bounds = array<i64: 1>, scalar_prefetch = 0 : i64, scratch_operands = 2 : i64, tpu.core_type = #tpu.core_type<tc>, window_params = [{transform_indices = @transform_0, window_bounds = array<i64: 8, 8, 64>}, {pipeline_mode = #tpu.pipeline_mode<synchronous>, transform_indices = @transform_1, window_bounds = array<i64: 2, 8, 32>}, {pipeline_mode = #tpu.pipeline_mode<synchronous>, transform_indices = @transform_2, window_bounds = array<i64: 2, 8, 32>}, {pipeline_mode = #tpu.pipeline_mode<synchronous>, transform_indices = @transform_3, window_bounds = array<i64: 64, 128>}, {pipeline_mode = #tpu.pipeline_mode<synchronous>, transform_indices = @transform_4, window_bounds = array<i64: 32, 128>}, {pipeline_mode = #tpu.pipeline_mode<synchronous>, transform_indices = @transform_5, window_bounds = array<i64: 1, 128>}, {pipeline_mode = #tpu.pipeline_mode<synchronous>, transform_indices = @transform_6, window_bounds = array<i64: 32, 128>}, {pipeline_mode = #tpu.pipeline_mode<synchronous>, transform_indices = @transform_7, window_bounds = array<i64: 32, 128>}, {pipeline_mode = #tpu.pipeline_mode<synchronous>, transform_indices = @transform_8, window_bounds = array<i64: 1, 128>}, {transform_indices = @transform_9, window_bounds = array<i64: 8, 8, 32>}, {pipeline_mode = #tpu.pipeline_mode<synchronous>, transform_indices = @transform_10, window_bounds = array<i64: 2, 8, 32>}, {pipeline_mode = #tpu.pipeline_mode<synchronous>, transform_indices = @transform_11, window_bounds = array<i64: 2, 8, 32>}]} {
    %c0_i32 = arith.constant 0 : i32
    %0 = arith.cmpi eq, %arg0, %c0_i32 : i32
    %1 = arith.extui %0 : i1 to i32
    %c0_i32_0 = arith.constant 0 : i32
    %2 = arith.cmpi ne, %1, %c0_i32_0 : i32
    scf.if %2 {
      %c0_194 = arith.constant 0 : index
      %c0_195 = arith.constant 0 : index
      %c0_196 = arith.constant 0 : index
      %503 = vector.load %arg2[%c0_194, %c0_195, %c0_196] : memref<2x8x32xf32, #tpu.memory_space<vmem>>, vector<1x8x32xf32>
      %504 = vector.shape_cast %503 : vector<1x8x32xf32> to vector<8x32xf32>
      %c0_197 = arith.constant 0 : index
      %c0_198 = arith.constant 0 : index
      %c0_199 = arith.constant 0 : index
      %505 = vector.load %arg14[%c0_197, %c0_198, %c0_199] : memref<4x8x32xf32, #tpu.memory_space<vmem>>, vector<1x8x32xf32>
      %506 = vector.shape_cast %505 : vector<1x8x32xf32> to vector<8x32xf32>
      %507 = vector.shape_cast %504 : vector<8x32xf32> to vector<1x8x32xf32>
      tpu.vector_store %arg14[%c0_197, %c0_198, %c0_199], %507 {strides = array<i32>} : memref<4x8x32xf32, #tpu.memory_space<vmem>>, vector<1x8x32xf32>,
      %c0_200 = arith.constant 0 : index
      %c0_201 = arith.constant 0 : index
      %c0_202 = arith.constant 0 : index
      %508 = vector.load %arg3[%c0_200, %c0_201, %c0_202] : memref<2x8x32xf32, #tpu.memory_space<vmem>>, vector<1x8x32xf32>
      %509 = vector.shape_cast %508 : vector<1x8x32xf32> to vector<8x32xf32>
      %c1_203 = arith.constant 1 : index
      %c0_204 = arith.constant 0 : index
      %c0_205 = arith.constant 0 : index
      %510 = vector.load %arg14[%c1_203, %c0_204, %c0_205] : memref<4x8x32xf32, #tpu.memory_space<vmem>>, vector<1x8x32xf32>
      %511 = vector.shape_cast %510 : vector<1x8x32xf32> to vector<8x32xf32>
      %512 = vector.shape_cast %509 : vector<8x32xf32> to vector<1x8x32xf32>
      tpu.vector_store %arg14[%c1_203, %c0_204, %c0_205], %512 {strides = array<i32>} : memref<4x8x32xf32, #tpu.memory_space<vmem>>, vector<1x8x32xf32>,
      %c1_206 = arith.constant 1 : index
      %c0_207 = arith.constant 0 : index
      %c0_208 = arith.constant 0 : index
      %513 = vector.load %arg2[%c1_206, %c0_207, %c0_208] : memref<2x8x32xf32, #tpu.memory_space<vmem>>, vector<1x8x32xf32>
      %514 = vector.shape_cast %513 : vector<1x8x32xf32> to vector<8x32xf32>
      %c2_209 = arith.constant 2 : index
      %c0_210 = arith.constant 0 : index
      %c0_211 = arith.constant 0 : index
      %515 = vector.load %arg14[%c2_209, %c0_210, %c0_211] : memref<4x8x32xf32, #tpu.memory_space<vmem>>, vector<1x8x32xf32>
      %516 = vector.shape_cast %515 : vector<1x8x32xf32> to vector<8x32xf32>
      %517 = vector.shape_cast %514 : vector<8x32xf32> to vector<1x8x32xf32>
      tpu.vector_store %arg14[%c2_209, %c0_210, %c0_211], %517 {strides = array<i32>} : memref<4x8x32xf32, #tpu.memory_space<vmem>>, vector<1x8x32xf32>,
      %c1_212 = arith.constant 1 : index
      %c0_213 = arith.constant 0 : index
      %c0_214 = arith.constant 0 : index
      %518 = vector.load %arg3[%c1_212, %c0_213, %c0_214] : memref<2x8x32xf32, #tpu.memory_space<vmem>>, vector<1x8x32xf32>
      %519 = vector.shape_cast %518 : vector<1x8x32xf32> to vector<8x32xf32>
      %c3_215 = arith.constant 3 : index
      %c0_216 = arith.constant 0 : index
      %c0_217 = arith.constant 0 : index
      %520 = vector.load %arg14[%c3_215, %c0_216, %c0_217] : memref<4x8x32xf32, #tpu.memory_space<vmem>>, vector<1x8x32xf32>
      %521 = vector.shape_cast %520 : vector<1x8x32xf32> to vector<8x32xf32>
      %522 = vector.shape_cast %519 : vector<8x32xf32> to vector<1x8x32xf32>
      tpu.vector_store %arg14[%c3_215, %c0_216, %c0_217], %522 {strides = array<i32>} : memref<4x8x32xf32, #tpu.memory_space<vmem>>, vector<1x8x32xf32>,
    } else {
    }
    %c0 = arith.constant 0 : index
    %c0_1 = arith.constant 0 : index
    %3 = vector.load %arg5[%c0, %c0_1] : memref<32x128xf32, #tpu.memory_space<vmem>>, vector<32x128xf32>
    %c0_2 = arith.constant 0 : index
    %c0_3 = arith.constant 0 : index
    %4 = vector.load %arg7[%c0_2, %c0_3] : memref<32x128xf32, #tpu.memory_space<vmem>>, vector<32x128xf32>
    %c0_4 = arith.constant 0 : index
    %c0_5 = arith.constant 0 : index
    %5 = vector.load %arg8[%c0_4, %c0_5] : memref<32x128xf32, #tpu.memory_space<vmem>>, vector<32x128xf32>
    %c0_6 = arith.constant 0 : index
    %c0_7 = arith.constant 0 : index
    %6 = vector.load %arg9[%c0_6, %c0_7] : memref<1x128xf32, #tpu.memory_space<vmem>>, vector<1x128xf32>
    %c0_8 = arith.constant 0 : index
    %c0_9 = arith.constant 0 : index
    %c0_10 = arith.constant 0 : index
    %7 = vector.load %arg1[%c0_8, %c0_9, %c0_10] : memref<8x8x64xf32, #tpu.memory_space<vmem>>, vector<8x8x64xf32>
    %8 = vector.shape_cast %7 : vector<8x8x64xf32> to vector<64x64xf32>
    %c0_11 = arith.constant 0 : index
    %c0_12 = arith.constant 0 : index
    %9 = vector.load %arg4[%c0_11, %c0_12] : memref<64x128xf32, #tpu.memory_space<vmem>>, vector<64x128xf32>
    %cst = arith.constant dense<0.000000e+00> : vector<64x128xf32>
    %10 = tpu.matmul %8, %9, %cst {dimension_numbers = #tpu.dot_dimension_numbers<[1], [0], [0], [1], [0, 0, 1, 1], [], []>} : vector<64x64xf32>, vector<64x128xf32>, vector<64x128xf32> -> vector<64x128xf32>
    %c0_13 = arith.constant 0 : index
    %c0_14 = arith.constant 0 : index
    %11 = vector.load %arg6[%c0_13, %c0_14] : memref<1x128xf32, #tpu.memory_space<vmem>>, vector<1x128xf32>
    %12 = vector.broadcast %11 : vector<1x128xf32> to vector<64x128xf32>
    %13 = arith.addf %10, %12 : vector<64x128xf32>
    %14 = vector.shape_cast %13 : vector<64x128xf32> to vector<8x8x128xf32>
    %c0_15 = arith.constant 0 : index
    %c0_16 = arith.constant 0 : index
    %c0_17 = arith.constant 0 : index
    %15 = vector.load %arg13[%c0_15, %c0_16, %c0_17] : memref<8x8x128xf32, #tpu.memory_space<vmem>>, vector<8x8x128xf32>
    tpu.vector_store %arg13[%c0_15, %c0_16, %c0_17], %14 {strides = array<i32>} : memref<8x8x128xf32, #tpu.memory_space<vmem>>, vector<8x8x128xf32>,
    %c0_18 = arith.constant 0 : index
    %c0_19 = arith.constant 0 : index
    %c0_20 = arith.constant 0 : index
    %16 = vector.load %arg14[%c0_18, %c0_19, %c0_20] : memref<4x8x32xf32, #tpu.memory_space<vmem>>, vector<1x8x32xf32>
    %17 = vector.shape_cast %16 : vector<1x8x32xf32> to vector<8x32xf32>
    %c1 = arith.constant 1 : index
    %c0_21 = arith.constant 0 : index
    %c0_22 = arith.constant 0 : index
    %18 = vector.load %arg14[%c1, %c0_21, %c0_22] : memref<4x8x32xf32, #tpu.memory_space<vmem>>, vector<1x8x32xf32>
    %19 = vector.shape_cast %18 : vector<1x8x32xf32> to vector<8x32xf32>
    %c2 = arith.constant 2 : index
    %c0_23 = arith.constant 0 : index
    %c0_24 = arith.constant 0 : index
    %20 = vector.load %arg14[%c2, %c0_23, %c0_24] : memref<4x8x32xf32, #tpu.memory_space<vmem>>, vector<1x8x32xf32>
    %21 = vector.shape_cast %20 : vector<1x8x32xf32> to vector<8x32xf32>
    %c3 = arith.constant 3 : index
    %c0_25 = arith.constant 0 : index
    %c0_26 = arith.constant 0 : index
    %22 = vector.load %arg14[%c3, %c0_25, %c0_26] : memref<4x8x32xf32, #tpu.memory_space<vmem>>, vector<1x8x32xf32>
    %23 = vector.shape_cast %22 : vector<1x8x32xf32> to vector<8x32xf32>
    %c0_i32_27 = arith.constant 0 : i32
    %24 = arith.index_cast %c0_i32_27 : i32 to index
    %c0_28 = arith.constant 0 : index
    %c0_29 = arith.constant 0 : index
    %25 = vector.load %arg13[%24, %c0_28, %c0_29] : memref<8x8x128xf32, #tpu.memory_space<vmem>>, vector<1x8x128xf32>
    %26 = vector.shape_cast %25 : vector<1x8x128xf32> to vector<8x128xf32>
    %cst_30 = arith.constant dense<0.000000e+00> : vector<8x128xf32>
    %27 = tpu.matmul %17, %3, %cst_30 {dimension_numbers = #tpu.dot_dimension_numbers<[1], [0], [0], [1], [0, 0, 1, 1], [], []>} : vector<8x32xf32>, vector<32x128xf32>, vector<8x128xf32> -> vector<8x128xf32>
    %28 = arith.addf %26, %27 : vector<8x128xf32>
    %29 = math.tanh %28 : vector<8x128xf32>
    %30 = vector.extract_strided_slice %29 {offsets = [0, 0], sizes = [8, 32], strides = [1, 1]} : vector<8x128xf32> to vector<8x32xf32>
    %cst_31 = arith.constant 5.000000e-01 : f32
    %31 = vector.broadcast %cst_31 : f32 to vector<8x32xf32>
    %32 = arith.mulf %31, %30 : vector<8x32xf32>
    %cst_32 = arith.constant 5.000000e-01 : f32
    %33 = vector.broadcast %cst_32 : f32 to vector<8x32xf32>
    %34 = arith.addf %32, %33 : vector<8x32xf32>
    %35 = vector.extract_strided_slice %29 {offsets = [0, 32], sizes = [8, 32], strides = [1, 1]} : vector<8x128xf32> to vector<8x32xf32>
    %cst_33 = arith.constant 5.000000e-01 : f32
    %36 = vector.broadcast %cst_33 : f32 to vector<8x32xf32>
    %37 = arith.mulf %36, %35 : vector<8x32xf32>
    %cst_34 = arith.constant 5.000000e-01 : f32
    %38 = vector.broadcast %cst_34 : f32 to vector<8x32xf32>
    %39 = arith.addf %37, %38 : vector<8x32xf32>
    %40 = vector.extract_strided_slice %29 {offsets = [0, 64], sizes = [8, 32], strides = [1, 1]} : vector<8x128xf32> to vector<8x32xf32>
    %41 = vector.extract_strided_slice %29 {offsets = [0, 96], sizes = [8, 32], strides = [1, 1]} : vector<8x128xf32> to vector<8x32xf32>
    %cst_35 = arith.constant 5.000000e-01 : f32
    %42 = vector.broadcast %cst_35 : f32 to vector<8x32xf32>
    %43 = arith.mulf %42, %41 : vector<8x32xf32>
    %cst_36 = arith.constant 5.000000e-01 : f32
    %44 = vector.broadcast %cst_36 : f32 to vector<8x32xf32>
    %45 = arith.addf %43, %44 : vector<8x32xf32>
    %46 = arith.mulf %39, %19 : vector<8x32xf32>
    %47 = arith.mulf %34, %40 : vector<8x32xf32>
    %48 = arith.addf %46, %47 : vector<8x32xf32>
    %49 = math.tanh %48 : vector<8x32xf32>
    %50 = arith.mulf %45, %49 : vector<8x32xf32>
    %cst_37 = arith.constant dense<0.000000e+00> : vector<8x128xf32>
    %51 = tpu.matmul %50, %4, %cst_37 {dimension_numbers = #tpu.dot_dimension_numbers<[1], [0], [0], [1], [0, 0, 1, 1], [], []>} : vector<8x32xf32>, vector<32x128xf32>, vector<8x128xf32> -> vector<8x128xf32>
    %cst_38 = arith.constant dense<0.000000e+00> : vector<8x128xf32>
    %52 = tpu.matmul %21, %5, %cst_38 {dimension_numbers = #tpu.dot_dimension_numbers<[1], [0], [0], [1], [0, 0, 1, 1], [], []>} : vector<8x32xf32>, vector<32x128xf32>, vector<8x128xf32> -> vector<8x128xf32>
    %53 = arith.addf %51, %52 : vector<8x128xf32>
    %54 = vector.broadcast %6 : vector<1x128xf32> to vector<8x128xf32>
    %55 = arith.addf %53, %54 : vector<8x128xf32>
    %56 = math.tanh %55 : vector<8x128xf32>
    %57 = vector.extract_strided_slice %56 {offsets = [0, 0], sizes = [8, 32], strides = [1, 1]} : vector<8x128xf32> to vector<8x32xf32>
    %cst_39 = arith.constant 5.000000e-01 : f32
    %58 = vector.broadcast %cst_39 : f32 to vector<8x32xf32>
    %59 = arith.mulf %58, %57 : vector<8x32xf32>
    %cst_40 = arith.constant 5.000000e-01 : f32
    %60 = vector.broadcast %cst_40 : f32 to vector<8x32xf32>
    %61 = arith.addf %59, %60 : vector<8x32xf32>
    %62 = vector.extract_strided_slice %56 {offsets = [0, 32], sizes = [8, 32], strides = [1, 1]} : vector<8x128xf32> to vector<8x32xf32>
    %cst_41 = arith.constant 5.000000e-01 : f32
    %63 = vector.broadcast %cst_41 : f32 to vector<8x32xf32>
    %64 = arith.mulf %63, %62 : vector<8x32xf32>
    %cst_42 = arith.constant 5.000000e-01 : f32
    %65 = vector.broadcast %cst_42 : f32 to vector<8x32xf32>
    %66 = arith.addf %64, %65 : vector<8x32xf32>
    %67 = vector.extract_strided_slice %56 {offsets = [0, 64], sizes = [8, 32], strides = [1, 1]} : vector<8x128xf32> to vector<8x32xf32>
    %68 = vector.extract_strided_slice %56 {offsets = [0, 96], sizes = [8, 32], strides = [1, 1]} : vector<8x128xf32> to vector<8x32xf32>
    %cst_43 = arith.constant 5.000000e-01 : f32
    %69 = vector.broadcast %cst_43 : f32 to vector<8x32xf32>
    %70 = arith.mulf %69, %68 : vector<8x32xf32>
    %cst_44 = arith.constant 5.000000e-01 : f32
    %71 = vector.broadcast %cst_44 : f32 to vector<8x32xf32>
    %72 = arith.addf %70, %71 : vector<8x32xf32>
    %73 = arith.mulf %66, %23 : vector<8x32xf32>
    %74 = arith.mulf %61, %67 : vector<8x32xf32>
    %75 = arith.addf %73, %74 : vector<8x32xf32>
    %76 = math.tanh %75 : vector<8x32xf32>
    %77 = arith.mulf %72, %76 : vector<8x32xf32>
    %78 = arith.index_cast %c0_i32_27 : i32 to index
    %c0_45 = arith.constant 0 : index
    %c0_46 = arith.constant 0 : index
    %79 = vector.load %arg10[%78, %c0_45, %c0_46] : memref<8x8x32xf32, #tpu.memory_space<vmem>>, vector<1x8x32xf32>
    %80 = vector.shape_cast %79 : vector<1x8x32xf32> to vector<8x32xf32>
    %81 = vector.shape_cast %77 : vector<8x32xf32> to vector<1x8x32xf32>
    tpu.vector_store %arg10[%78, %c0_45, %c0_46], %81 {strides = array<i32>} : memref<8x8x32xf32, #tpu.memory_space<vmem>>, vector<1x8x32xf32>,
    %c1_i32 = arith.constant 1 : i32
    %82 = arith.index_cast %c1_i32 : i32 to index
    %c0_47 = arith.constant 0 : index
    %c0_48 = arith.constant 0 : index
    %83 = vector.load %arg13[%82, %c0_47, %c0_48] : memref<8x8x128xf32, #tpu.memory_space<vmem>>, vector<1x8x128xf32>
    %84 = vector.shape_cast %83 : vector<1x8x128xf32> to vector<8x128xf32>
    %cst_49 = arith.constant dense<0.000000e+00> : vector<8x128xf32>
    %85 = tpu.matmul %50, %3, %cst_49 {dimension_numbers = #tpu.dot_dimension_numbers<[1], [0], [0], [1], [0, 0, 1, 1], [], []>} : vector<8x32xf32>, vector<32x128xf32>, vector<8x128xf32> -> vector<8x128xf32>
    %86 = arith.addf %84, %85 : vector<8x128xf32>
    %87 = math.tanh %86 : vector<8x128xf32>
    %88 = vector.extract_strided_slice %87 {offsets = [0, 0], sizes = [8, 32], strides = [1, 1]} : vector<8x128xf32> to vector<8x32xf32>
    %cst_50 = arith.constant 5.000000e-01 : f32
    %89 = vector.broadcast %cst_50 : f32 to vector<8x32xf32>
    %90 = arith.mulf %89, %88 : vector<8x32xf32>
    %cst_51 = arith.constant 5.000000e-01 : f32
    %91 = vector.broadcast %cst_51 : f32 to vector<8x32xf32>
    %92 = arith.addf %90, %91 : vector<8x32xf32>
    %93 = vector.extract_strided_slice %87 {offsets = [0, 32], sizes = [8, 32], strides = [1, 1]} : vector<8x128xf32> to vector<8x32xf32>
    %cst_52 = arith.constant 5.000000e-01 : f32
    %94 = vector.broadcast %cst_52 : f32 to vector<8x32xf32>
    %95 = arith.mulf %94, %93 : vector<8x32xf32>
    %cst_53 = arith.constant 5.000000e-01 : f32
    %96 = vector.broadcast %cst_53 : f32 to vector<8x32xf32>
    %97 = arith.addf %95, %96 : vector<8x32xf32>
    %98 = vector.extract_strided_slice %87 {offsets = [0, 64], sizes = [8, 32], strides = [1, 1]} : vector<8x128xf32> to vector<8x32xf32>
    %99 = vector.extract_strided_slice %87 {offsets = [0, 96], sizes = [8, 32], strides = [1, 1]} : vector<8x128xf32> to vector<8x32xf32>
    %cst_54 = arith.constant 5.000000e-01 : f32
    %100 = vector.broadcast %cst_54 : f32 to vector<8x32xf32>
    %101 = arith.mulf %100, %99 : vector<8x32xf32>
    %cst_55 = arith.constant 5.000000e-01 : f32
    %102 = vector.broadcast %cst_55 : f32 to vector<8x32xf32>
    %103 = arith.addf %101, %102 : vector<8x32xf32>
    %104 = arith.mulf %97, %48 : vector<8x32xf32>
    %105 = arith.mulf %92, %98 : vector<8x32xf32>
    %106 = arith.addf %104, %105 : vector<8x32xf32>
    %107 = math.tanh %106 : vector<8x32xf32>
    %108 = arith.mulf %103, %107 : vector<8x32xf32>
    %cst_56 = arith.constant dense<0.000000e+00> : vector<8x128xf32>
    %109 = tpu.matmul %108, %4, %cst_56 {dimension_numbers = #tpu.dot_dimension_numbers<[1], [0], [0], [1], [0, 0, 1, 1], [], []>} : vector<8x32xf32>, vector<32x128xf32>, vector<8x128xf32> -> vector<8x128xf32>
    %cst_57 = arith.constant dense<0.000000e+00> : vector<8x128xf32>
    %110 = tpu.matmul %77, %5, %cst_57 {dimension_numbers = #tpu.dot_dimension_numbers<[1], [0], [0], [1], [0, 0, 1, 1], [], []>} : vector<8x32xf32>, vector<32x128xf32>, vector<8x128xf32> -> vector<8x128xf32>
    %111 = arith.addf %109, %110 : vector<8x128xf32>
    %112 = vector.broadcast %6 : vector<1x128xf32> to vector<8x128xf32>
    %113 = arith.addf %111, %112 : vector<8x128xf32>
    %114 = math.tanh %113 : vector<8x128xf32>
    %115 = vector.extract_strided_slice %114 {offsets = [0, 0], sizes = [8, 32], strides = [1, 1]} : vector<8x128xf32> to vector<8x32xf32>
    %cst_58 = arith.constant 5.000000e-01 : f32
    %116 = vector.broadcast %cst_58 : f32 to vector<8x32xf32>
    %117 = arith.mulf %116, %115 : vector<8x32xf32>
    %cst_59 = arith.constant 5.000000e-01 : f32
    %118 = vector.broadcast %cst_59 : f32 to vector<8x32xf32>
    %119 = arith.addf %117, %118 : vector<8x32xf32>
    %120 = vector.extract_strided_slice %114 {offsets = [0, 32], sizes = [8, 32], strides = [1, 1]} : vector<8x128xf32> to vector<8x32xf32>
    %cst_60 = arith.constant 5.000000e-01 : f32
    %121 = vector.broadcast %cst_60 : f32 to vector<8x32xf32>
    %122 = arith.mulf %121, %120 : vector<8x32xf32>
    %cst_61 = arith.constant 5.000000e-01 : f32
    %123 = vector.broadcast %cst_61 : f32 to vector<8x32xf32>
    %124 = arith.addf %122, %123 : vector<8x32xf32>
    %125 = vector.extract_strided_slice %114 {offsets = [0, 64], sizes = [8, 32], strides = [1, 1]} : vector<8x128xf32> to vector<8x32xf32>
    %126 = vector.extract_strided_slice %114 {offsets = [0, 96], sizes = [8, 32], strides = [1, 1]} : vector<8x128xf32> to vector<8x32xf32>
    %cst_62 = arith.constant 5.000000e-01 : f32
    %127 = vector.broadcast %cst_62 : f32 to vector<8x32xf32>
    %128 = arith.mulf %127, %126 : vector<8x32xf32>
    %cst_63 = arith.constant 5.000000e-01 : f32
    %129 = vector.broadcast %cst_63 : f32 to vector<8x32xf32>
    %130 = arith.addf %128, %129 : vector<8x32xf32>
    %131 = arith.mulf %124, %75 : vector<8x32xf32>
    %132 = arith.mulf %119, %125 : vector<8x32xf32>
    %133 = arith.addf %131, %132 : vector<8x32xf32>
    %134 = math.tanh %133 : vector<8x32xf32>
    %135 = arith.mulf %130, %134 : vector<8x32xf32>
    %136 = arith.index_cast %c1_i32 : i32 to index
    %c0_64 = arith.constant 0 : index
    %c0_65 = arith.constant 0 : index
    %137 = vector.load %arg10[%136, %c0_64, %c0_65] : memref<8x8x32xf32, #tpu.memory_space<vmem>>, vector<1x8x32xf32>
    %138 = vector.shape_cast %137 : vector<1x8x32xf32> to vector<8x32xf32>
    %139 = vector.shape_cast %135 : vector<8x32xf32> to vector<1x8x32xf32>
    tpu.vector_store %arg10[%136, %c0_64, %c0_65], %139 {strides = array<i32>} : memref<8x8x32xf32, #tpu.memory_space<vmem>>, vector<1x8x32xf32>,
    %c2_i32 = arith.constant 2 : i32
    %140 = arith.index_cast %c2_i32 : i32 to index
    %c0_66 = arith.constant 0 : index
    %c0_67 = arith.constant 0 : index
    %141 = vector.load %arg13[%140, %c0_66, %c0_67] : memref<8x8x128xf32, #tpu.memory_space<vmem>>, vector<1x8x128xf32>
    %142 = vector.shape_cast %141 : vector<1x8x128xf32> to vector<8x128xf32>
    %cst_68 = arith.constant dense<0.000000e+00> : vector<8x128xf32>
    %143 = tpu.matmul %108, %3, %cst_68 {dimension_numbers = #tpu.dot_dimension_numbers<[1], [0], [0], [1], [0, 0, 1, 1], [], []>} : vector<8x32xf32>, vector<32x128xf32>, vector<8x128xf32> -> vector<8x128xf32>
    %144 = arith.addf %142, %143 : vector<8x128xf32>
    %145 = math.tanh %144 : vector<8x128xf32>
    %146 = vector.extract_strided_slice %145 {offsets = [0, 0], sizes = [8, 32], strides = [1, 1]} : vector<8x128xf32> to vector<8x32xf32>
    %cst_69 = arith.constant 5.000000e-01 : f32
    %147 = vector.broadcast %cst_69 : f32 to vector<8x32xf32>
    %148 = arith.mulf %147, %146 : vector<8x32xf32>
    %cst_70 = arith.constant 5.000000e-01 : f32
    %149 = vector.broadcast %cst_70 : f32 to vector<8x32xf32>
    %150 = arith.addf %148, %149 : vector<8x32xf32>
    %151 = vector.extract_strided_slice %145 {offsets = [0, 32], sizes = [8, 32], strides = [1, 1]} : vector<8x128xf32> to vector<8x32xf32>
    %cst_71 = arith.constant 5.000000e-01 : f32
    %152 = vector.broadcast %cst_71 : f32 to vector<8x32xf32>
    %153 = arith.mulf %152, %151 : vector<8x32xf32>
    %cst_72 = arith.constant 5.000000e-01 : f32
    %154 = vector.broadcast %cst_72 : f32 to vector<8x32xf32>
    %155 = arith.addf %153, %154 : vector<8x32xf32>
    %156 = vector.extract_strided_slice %145 {offsets = [0, 64], sizes = [8, 32], strides = [1, 1]} : vector<8x128xf32> to vector<8x32xf32>
    %157 = vector.extract_strided_slice %145 {offsets = [0, 96], sizes = [8, 32], strides = [1, 1]} : vector<8x128xf32> to vector<8x32xf32>
    %cst_73 = arith.constant 5.000000e-01 : f32
    %158 = vector.broadcast %cst_73 : f32 to vector<8x32xf32>
    %159 = arith.mulf %158, %157 : vector<8x32xf32>
    %cst_74 = arith.constant 5.000000e-01 : f32
    %160 = vector.broadcast %cst_74 : f32 to vector<8x32xf32>
    %161 = arith.addf %159, %160 : vector<8x32xf32>
    %162 = arith.mulf %155, %106 : vector<8x32xf32>
    %163 = arith.mulf %150, %156 : vector<8x32xf32>
    %164 = arith.addf %162, %163 : vector<8x32xf32>
    %165 = math.tanh %164 : vector<8x32xf32>
    %166 = arith.mulf %161, %165 : vector<8x32xf32>
    %cst_75 = arith.constant dense<0.000000e+00> : vector<8x128xf32>
    %167 = tpu.matmul %166, %4, %cst_75 {dimension_numbers = #tpu.dot_dimension_numbers<[1], [0], [0], [1], [0, 0, 1, 1], [], []>} : vector<8x32xf32>, vector<32x128xf32>, vector<8x128xf32> -> vector<8x128xf32>
    %cst_76 = arith.constant dense<0.000000e+00> : vector<8x128xf32>
    %168 = tpu.matmul %135, %5, %cst_76 {dimension_numbers = #tpu.dot_dimension_numbers<[1], [0], [0], [1], [0, 0, 1, 1], [], []>} : vector<8x32xf32>, vector<32x128xf32>, vector<8x128xf32> -> vector<8x128xf32>
    %169 = arith.addf %167, %168 : vector<8x128xf32>
    %170 = vector.broadcast %6 : vector<1x128xf32> to vector<8x128xf32>
    %171 = arith.addf %169, %170 : vector<8x128xf32>
    %172 = math.tanh %171 : vector<8x128xf32>
    %173 = vector.extract_strided_slice %172 {offsets = [0, 0], sizes = [8, 32], strides = [1, 1]} : vector<8x128xf32> to vector<8x32xf32>
    %cst_77 = arith.constant 5.000000e-01 : f32
    %174 = vector.broadcast %cst_77 : f32 to vector<8x32xf32>
    %175 = arith.mulf %174, %173 : vector<8x32xf32>
    %cst_78 = arith.constant 5.000000e-01 : f32
    %176 = vector.broadcast %cst_78 : f32 to vector<8x32xf32>
    %177 = arith.addf %175, %176 : vector<8x32xf32>
    %178 = vector.extract_strided_slice %172 {offsets = [0, 32], sizes = [8, 32], strides = [1, 1]} : vector<8x128xf32> to vector<8x32xf32>
    %cst_79 = arith.constant 5.000000e-01 : f32
    %179 = vector.broadcast %cst_79 : f32 to vector<8x32xf32>
    %180 = arith.mulf %179, %178 : vector<8x32xf32>
    %cst_80 = arith.constant 5.000000e-01 : f32
    %181 = vector.broadcast %cst_80 : f32 to vector<8x32xf32>
    %182 = arith.addf %180, %181 : vector<8x32xf32>
    %183 = vector.extract_strided_slice %172 {offsets = [0, 64], sizes = [8, 32], strides = [1, 1]} : vector<8x128xf32> to vector<8x32xf32>
    %184 = vector.extract_strided_slice %172 {offsets = [0, 96], sizes = [8, 32], strides = [1, 1]} : vector<8x128xf32> to vector<8x32xf32>
    %cst_81 = arith.constant 5.000000e-01 : f32
    %185 = vector.broadcast %cst_81 : f32 to vector<8x32xf32>
    %186 = arith.mulf %185, %184 : vector<8x32xf32>
    %cst_82 = arith.constant 5.000000e-01 : f32
    %187 = vector.broadcast %cst_82 : f32 to vector<8x32xf32>
    %188 = arith.addf %186, %187 : vector<8x32xf32>
    %189 = arith.mulf %182, %133 : vector<8x32xf32>
    %190 = arith.mulf %177, %183 : vector<8x32xf32>
    %191 = arith.addf %189, %190 : vector<8x32xf32>
    %192 = math.tanh %191 : vector<8x32xf32>
    %193 = arith.mulf %188, %192 : vector<8x32xf32>
    %194 = arith.index_cast %c2_i32 : i32 to index
    %c0_83 = arith.constant 0 : index
    %c0_84 = arith.constant 0 : index
    %195 = vector.load %arg10[%194, %c0_83, %c0_84] : memref<8x8x32xf32, #tpu.memory_space<vmem>>, vector<1x8x32xf32>
    %196 = vector.shape_cast %195 : vector<1x8x32xf32> to vector<8x32xf32>
    %197 = vector.shape_cast %193 : vector<8x32xf32> to vector<1x8x32xf32>
    tpu.vector_store %arg10[%194, %c0_83, %c0_84], %197 {strides = array<i32>} : memref<8x8x32xf32, #tpu.memory_space<vmem>>, vector<1x8x32xf32>,
    %c3_i32 = arith.constant 3 : i32
    %198 = arith.index_cast %c3_i32 : i32 to index
    %c0_85 = arith.constant 0 : index
    %c0_86 = arith.constant 0 : index
    %199 = vector.load %arg13[%198, %c0_85, %c0_86] : memref<8x8x128xf32, #tpu.memory_space<vmem>>, vector<1x8x128xf32>
    %200 = vector.shape_cast %199 : vector<1x8x128xf32> to vector<8x128xf32>
    %cst_87 = arith.constant dense<0.000000e+00> : vector<8x128xf32>
    %201 = tpu.matmul %166, %3, %cst_87 {dimension_numbers = #tpu.dot_dimension_numbers<[1], [0], [0], [1], [0, 0, 1, 1], [], []>} : vector<8x32xf32>, vector<32x128xf32>, vector<8x128xf32> -> vector<8x128xf32>
    %202 = arith.addf %200, %201 : vector<8x128xf32>
    %203 = math.tanh %202 : vector<8x128xf32>
    %204 = vector.extract_strided_slice %203 {offsets = [0, 0], sizes = [8, 32], strides = [1, 1]} : vector<8x128xf32> to vector<8x32xf32>
    %cst_88 = arith.constant 5.000000e-01 : f32
    %205 = vector.broadcast %cst_88 : f32 to vector<8x32xf32>
    %206 = arith.mulf %205, %204 : vector<8x32xf32>
    %cst_89 = arith.constant 5.000000e-01 : f32
    %207 = vector.broadcast %cst_89 : f32 to vector<8x32xf32>
    %208 = arith.addf %206, %207 : vector<8x32xf32>
    %209 = vector.extract_strided_slice %203 {offsets = [0, 32], sizes = [8, 32], strides = [1, 1]} : vector<8x128xf32> to vector<8x32xf32>
    %cst_90 = arith.constant 5.000000e-01 : f32
    %210 = vector.broadcast %cst_90 : f32 to vector<8x32xf32>
    %211 = arith.mulf %210, %209 : vector<8x32xf32>
    %cst_91 = arith.constant 5.000000e-01 : f32
    %212 = vector.broadcast %cst_91 : f32 to vector<8x32xf32>
    %213 = arith.addf %211, %212 : vector<8x32xf32>
    %214 = vector.extract_strided_slice %203 {offsets = [0, 64], sizes = [8, 32], strides = [1, 1]} : vector<8x128xf32> to vector<8x32xf32>
    %215 = vector.extract_strided_slice %203 {offsets = [0, 96], sizes = [8, 32], strides = [1, 1]} : vector<8x128xf32> to vector<8x32xf32>
    %cst_92 = arith.constant 5.000000e-01 : f32
    %216 = vector.broadcast %cst_92 : f32 to vector<8x32xf32>
    %217 = arith.mulf %216, %215 : vector<8x32xf32>
    %cst_93 = arith.constant 5.000000e-01 : f32
    %218 = vector.broadcast %cst_93 : f32 to vector<8x32xf32>
    %219 = arith.addf %217, %218 : vector<8x32xf32>
    %220 = arith.mulf %213, %164 : vector<8x32xf32>
    %221 = arith.mulf %208, %214 : vector<8x32xf32>
    %222 = arith.addf %220, %221 : vector<8x32xf32>
    %223 = math.tanh %222 : vector<8x32xf32>
    %224 = arith.mulf %219, %223 : vector<8x32xf32>
    %cst_94 = arith.constant dense<0.000000e+00> : vector<8x128xf32>
    %225 = tpu.matmul %224, %4, %cst_94 {dimension_numbers = #tpu.dot_dimension_numbers<[1], [0], [0], [1], [0, 0, 1, 1], [], []>} : vector<8x32xf32>, vector<32x128xf32>, vector<8x128xf32> -> vector<8x128xf32>
    %cst_95 = arith.constant dense<0.000000e+00> : vector<8x128xf32>
    %226 = tpu.matmul %193, %5, %cst_95 {dimension_numbers = #tpu.dot_dimension_numbers<[1], [0], [0], [1], [0, 0, 1, 1], [], []>} : vector<8x32xf32>, vector<32x128xf32>, vector<8x128xf32> -> vector<8x128xf32>
    %227 = arith.addf %225, %226 : vector<8x128xf32>
    %228 = vector.broadcast %6 : vector<1x128xf32> to vector<8x128xf32>
    %229 = arith.addf %227, %228 : vector<8x128xf32>
    %230 = math.tanh %229 : vector<8x128xf32>
    %231 = vector.extract_strided_slice %230 {offsets = [0, 0], sizes = [8, 32], strides = [1, 1]} : vector<8x128xf32> to vector<8x32xf32>
    %cst_96 = arith.constant 5.000000e-01 : f32
    %232 = vector.broadcast %cst_96 : f32 to vector<8x32xf32>
    %233 = arith.mulf %232, %231 : vector<8x32xf32>
    %cst_97 = arith.constant 5.000000e-01 : f32
    %234 = vector.broadcast %cst_97 : f32 to vector<8x32xf32>
    %235 = arith.addf %233, %234 : vector<8x32xf32>
    %236 = vector.extract_strided_slice %230 {offsets = [0, 32], sizes = [8, 32], strides = [1, 1]} : vector<8x128xf32> to vector<8x32xf32>
    %cst_98 = arith.constant 5.000000e-01 : f32
    %237 = vector.broadcast %cst_98 : f32 to vector<8x32xf32>
    %238 = arith.mulf %237, %236 : vector<8x32xf32>
    %cst_99 = arith.constant 5.000000e-01 : f32
    %239 = vector.broadcast %cst_99 : f32 to vector<8x32xf32>
    %240 = arith.addf %238, %239 : vector<8x32xf32>
    %241 = vector.extract_strided_slice %230 {offsets = [0, 64], sizes = [8, 32], strides = [1, 1]} : vector<8x128xf32> to vector<8x32xf32>
    %242 = vector.extract_strided_slice %230 {offsets = [0, 96], sizes = [8, 32], strides = [1, 1]} : vector<8x128xf32> to vector<8x32xf32>
    %cst_100 = arith.constant 5.000000e-01 : f32
    %243 = vector.broadcast %cst_100 : f32 to vector<8x32xf32>
    %244 = arith.mulf %243, %242 : vector<8x32xf32>
    %cst_101 = arith.constant 5.000000e-01 : f32
    %245 = vector.broadcast %cst_101 : f32 to vector<8x32xf32>
    %246 = arith.addf %244, %245 : vector<8x32xf32>
    %247 = arith.mulf %240, %191 : vector<8x32xf32>
    %248 = arith.mulf %235, %241 : vector<8x32xf32>
    %249 = arith.addf %247, %248 : vector<8x32xf32>
    %250 = math.tanh %249 : vector<8x32xf32>
    %251 = arith.mulf %246, %250 : vector<8x32xf32>
    %252 = arith.index_cast %c3_i32 : i32 to index
    %c0_102 = arith.constant 0 : index
    %c0_103 = arith.constant 0 : index
    %253 = vector.load %arg10[%252, %c0_102, %c0_103] : memref<8x8x32xf32, #tpu.memory_space<vmem>>, vector<1x8x32xf32>
    %254 = vector.shape_cast %253 : vector<1x8x32xf32> to vector<8x32xf32>
    %255 = vector.shape_cast %251 : vector<8x32xf32> to vector<1x8x32xf32>
    tpu.vector_store %arg10[%252, %c0_102, %c0_103], %255 {strides = array<i32>} : memref<8x8x32xf32, #tpu.memory_space<vmem>>, vector<1x8x32xf32>,
    %c4_i32 = arith.constant 4 : i32
    %256 = arith.index_cast %c4_i32 : i32 to index
    %c0_104 = arith.constant 0 : index
    %c0_105 = arith.constant 0 : index
    %257 = vector.load %arg13[%256, %c0_104, %c0_105] : memref<8x8x128xf32, #tpu.memory_space<vmem>>, vector<1x8x128xf32>
    %258 = vector.shape_cast %257 : vector<1x8x128xf32> to vector<8x128xf32>
    %cst_106 = arith.constant dense<0.000000e+00> : vector<8x128xf32>
    %259 = tpu.matmul %224, %3, %cst_106 {dimension_numbers = #tpu.dot_dimension_numbers<[1], [0], [0], [1], [0, 0, 1, 1], [], []>} : vector<8x32xf32>, vector<32x128xf32>, vector<8x128xf32> -> vector<8x128xf32>
    %260 = arith.addf %258, %259 : vector<8x128xf32>
    %261 = math.tanh %260 : vector<8x128xf32>
    %262 = vector.extract_strided_slice %261 {offsets = [0, 0], sizes = [8, 32], strides = [1, 1]} : vector<8x128xf32> to vector<8x32xf32>
    %cst_107 = arith.constant 5.000000e-01 : f32
    %263 = vector.broadcast %cst_107 : f32 to vector<8x32xf32>
    %264 = arith.mulf %263, %262 : vector<8x32xf32>
    %cst_108 = arith.constant 5.000000e-01 : f32
    %265 = vector.broadcast %cst_108 : f32 to vector<8x32xf32>
    %266 = arith.addf %264, %265 : vector<8x32xf32>
    %267 = vector.extract_strided_slice %261 {offsets = [0, 32], sizes = [8, 32], strides = [1, 1]} : vector<8x128xf32> to vector<8x32xf32>
    %cst_109 = arith.constant 5.000000e-01 : f32
    %268 = vector.broadcast %cst_109 : f32 to vector<8x32xf32>
    %269 = arith.mulf %268, %267 : vector<8x32xf32>
    %cst_110 = arith.constant 5.000000e-01 : f32
    %270 = vector.broadcast %cst_110 : f32 to vector<8x32xf32>
    %271 = arith.addf %269, %270 : vector<8x32xf32>
    %272 = vector.extract_strided_slice %261 {offsets = [0, 64], sizes = [8, 32], strides = [1, 1]} : vector<8x128xf32> to vector<8x32xf32>
    %273 = vector.extract_strided_slice %261 {offsets = [0, 96], sizes = [8, 32], strides = [1, 1]} : vector<8x128xf32> to vector<8x32xf32>
    %cst_111 = arith.constant 5.000000e-01 : f32
    %274 = vector.broadcast %cst_111 : f32 to vector<8x32xf32>
    %275 = arith.mulf %274, %273 : vector<8x32xf32>
    %cst_112 = arith.constant 5.000000e-01 : f32
    %276 = vector.broadcast %cst_112 : f32 to vector<8x32xf32>
    %277 = arith.addf %275, %276 : vector<8x32xf32>
    %278 = arith.mulf %271, %222 : vector<8x32xf32>
    %279 = arith.mulf %266, %272 : vector<8x32xf32>
    %280 = arith.addf %278, %279 : vector<8x32xf32>
    %281 = math.tanh %280 : vector<8x32xf32>
    %282 = arith.mulf %277, %281 : vector<8x32xf32>
    %cst_113 = arith.constant dense<0.000000e+00> : vector<8x128xf32>
    %283 = tpu.matmul %282, %4, %cst_113 {dimension_numbers = #tpu.dot_dimension_numbers<[1], [0], [0], [1], [0, 0, 1, 1], [], []>} : vector<8x32xf32>, vector<32x128xf32>, vector<8x128xf32> -> vector<8x128xf32>
    %cst_114 = arith.constant dense<0.000000e+00> : vector<8x128xf32>
    %284 = tpu.matmul %251, %5, %cst_114 {dimension_numbers = #tpu.dot_dimension_numbers<[1], [0], [0], [1], [0, 0, 1, 1], [], []>} : vector<8x32xf32>, vector<32x128xf32>, vector<8x128xf32> -> vector<8x128xf32>
    %285 = arith.addf %283, %284 : vector<8x128xf32>
    %286 = vector.broadcast %6 : vector<1x128xf32> to vector<8x128xf32>
    %287 = arith.addf %285, %286 : vector<8x128xf32>
    %288 = math.tanh %287 : vector<8x128xf32>
    %289 = vector.extract_strided_slice %288 {offsets = [0, 0], sizes = [8, 32], strides = [1, 1]} : vector<8x128xf32> to vector<8x32xf32>
    %cst_115 = arith.constant 5.000000e-01 : f32
    %290 = vector.broadcast %cst_115 : f32 to vector<8x32xf32>
    %291 = arith.mulf %290, %289 : vector<8x32xf32>
    %cst_116 = arith.constant 5.000000e-01 : f32
    %292 = vector.broadcast %cst_116 : f32 to vector<8x32xf32>
    %293 = arith.addf %291, %292 : vector<8x32xf32>
    %294 = vector.extract_strided_slice %288 {offsets = [0, 32], sizes = [8, 32], strides = [1, 1]} : vector<8x128xf32> to vector<8x32xf32>
    %cst_117 = arith.constant 5.000000e-01 : f32
    %295 = vector.broadcast %cst_117 : f32 to vector<8x32xf32>
    %296 = arith.mulf %295, %294 : vector<8x32xf32>
    %cst_118 = arith.constant 5.000000e-01 : f32
    %297 = vector.broadcast %cst_118 : f32 to vector<8x32xf32>
    %298 = arith.addf %296, %297 : vector<8x32xf32>
    %299 = vector.extract_strided_slice %288 {offsets = [0, 64], sizes = [8, 32], strides = [1, 1]} : vector<8x128xf32> to vector<8x32xf32>
    %300 = vector.extract_strided_slice %288 {offsets = [0, 96], sizes = [8, 32], strides = [1, 1]} : vector<8x128xf32> to vector<8x32xf32>
    %cst_119 = arith.constant 5.000000e-01 : f32
    %301 = vector.broadcast %cst_119 : f32 to vector<8x32xf32>
    %302 = arith.mulf %301, %300 : vector<8x32xf32>
    %cst_120 = arith.constant 5.000000e-01 : f32
    %303 = vector.broadcast %cst_120 : f32 to vector<8x32xf32>
    %304 = arith.addf %302, %303 : vector<8x32xf32>
    %305 = arith.mulf %298, %249 : vector<8x32xf32>
    %306 = arith.mulf %293, %299 : vector<8x32xf32>
    %307 = arith.addf %305, %306 : vector<8x32xf32>
    %308 = math.tanh %307 : vector<8x32xf32>
    %309 = arith.mulf %304, %308 : vector<8x32xf32>
    %310 = arith.index_cast %c4_i32 : i32 to index
    %c0_121 = arith.constant 0 : index
    %c0_122 = arith.constant 0 : index
    %311 = vector.load %arg10[%310, %c0_121, %c0_122] : memref<8x8x32xf32, #tpu.memory_space<vmem>>, vector<1x8x32xf32>
    %312 = vector.shape_cast %311 : vector<1x8x32xf32> to vector<8x32xf32>
    %313 = vector.shape_cast %309 : vector<8x32xf32> to vector<1x8x32xf32>
    tpu.vector_store %arg10[%310, %c0_121, %c0_122], %313 {strides = array<i32>} : memref<8x8x32xf32, #tpu.memory_space<vmem>>, vector<1x8x32xf32>,
    %c5_i32 = arith.constant 5 : i32
    %314 = arith.index_cast %c5_i32 : i32 to index
    %c0_123 = arith.constant 0 : index
    %c0_124 = arith.constant 0 : index
    %315 = vector.load %arg13[%314, %c0_123, %c0_124] : memref<8x8x128xf32, #tpu.memory_space<vmem>>, vector<1x8x128xf32>
    %316 = vector.shape_cast %315 : vector<1x8x128xf32> to vector<8x128xf32>
    %cst_125 = arith.constant dense<0.000000e+00> : vector<8x128xf32>
    %317 = tpu.matmul %282, %3, %cst_125 {dimension_numbers = #tpu.dot_dimension_numbers<[1], [0], [0], [1], [0, 0, 1, 1], [], []>} : vector<8x32xf32>, vector<32x128xf32>, vector<8x128xf32> -> vector<8x128xf32>
    %318 = arith.addf %316, %317 : vector<8x128xf32>
    %319 = math.tanh %318 : vector<8x128xf32>
    %320 = vector.extract_strided_slice %319 {offsets = [0, 0], sizes = [8, 32], strides = [1, 1]} : vector<8x128xf32> to vector<8x32xf32>
    %cst_126 = arith.constant 5.000000e-01 : f32
    %321 = vector.broadcast %cst_126 : f32 to vector<8x32xf32>
    %322 = arith.mulf %321, %320 : vector<8x32xf32>
    %cst_127 = arith.constant 5.000000e-01 : f32
    %323 = vector.broadcast %cst_127 : f32 to vector<8x32xf32>
    %324 = arith.addf %322, %323 : vector<8x32xf32>
    %325 = vector.extract_strided_slice %319 {offsets = [0, 32], sizes = [8, 32], strides = [1, 1]} : vector<8x128xf32> to vector<8x32xf32>
    %cst_128 = arith.constant 5.000000e-01 : f32
    %326 = vector.broadcast %cst_128 : f32 to vector<8x32xf32>
    %327 = arith.mulf %326, %325 : vector<8x32xf32>
    %cst_129 = arith.constant 5.000000e-01 : f32
    %328 = vector.broadcast %cst_129 : f32 to vector<8x32xf32>
    %329 = arith.addf %327, %328 : vector<8x32xf32>
    %330 = vector.extract_strided_slice %319 {offsets = [0, 64], sizes = [8, 32], strides = [1, 1]} : vector<8x128xf32> to vector<8x32xf32>
    %331 = vector.extract_strided_slice %319 {offsets = [0, 96], sizes = [8, 32], strides = [1, 1]} : vector<8x128xf32> to vector<8x32xf32>
    %cst_130 = arith.constant 5.000000e-01 : f32
    %332 = vector.broadcast %cst_130 : f32 to vector<8x32xf32>
    %333 = arith.mulf %332, %331 : vector<8x32xf32>
    %cst_131 = arith.constant 5.000000e-01 : f32
    %334 = vector.broadcast %cst_131 : f32 to vector<8x32xf32>
    %335 = arith.addf %333, %334 : vector<8x32xf32>
    %336 = arith.mulf %329, %280 : vector<8x32xf32>
    %337 = arith.mulf %324, %330 : vector<8x32xf32>
    %338 = arith.addf %336, %337 : vector<8x32xf32>
    %339 = math.tanh %338 : vector<8x32xf32>
    %340 = arith.mulf %335, %339 : vector<8x32xf32>
    %cst_132 = arith.constant dense<0.000000e+00> : vector<8x128xf32>
    %341 = tpu.matmul %340, %4, %cst_132 {dimension_numbers = #tpu.dot_dimension_numbers<[1], [0], [0], [1], [0, 0, 1, 1], [], []>} : vector<8x32xf32>, vector<32x128xf32>, vector<8x128xf32> -> vector<8x128xf32>
    %cst_133 = arith.constant dense<0.000000e+00> : vector<8x128xf32>
    %342 = tpu.matmul %309, %5, %cst_133 {dimension_numbers = #tpu.dot_dimension_numbers<[1], [0], [0], [1], [0, 0, 1, 1], [], []>} : vector<8x32xf32>, vector<32x128xf32>, vector<8x128xf32> -> vector<8x128xf32>
    %343 = arith.addf %341, %342 : vector<8x128xf32>
    %344 = vector.broadcast %6 : vector<1x128xf32> to vector<8x128xf32>
    %345 = arith.addf %343, %344 : vector<8x128xf32>
    %346 = math.tanh %345 : vector<8x128xf32>
    %347 = vector.extract_strided_slice %346 {offsets = [0, 0], sizes = [8, 32], strides = [1, 1]} : vector<8x128xf32> to vector<8x32xf32>
    %cst_134 = arith.constant 5.000000e-01 : f32
    %348 = vector.broadcast %cst_134 : f32 to vector<8x32xf32>
    %349 = arith.mulf %348, %347 : vector<8x32xf32>
    %cst_135 = arith.constant 5.000000e-01 : f32
    %350 = vector.broadcast %cst_135 : f32 to vector<8x32xf32>
    %351 = arith.addf %349, %350 : vector<8x32xf32>
    %352 = vector.extract_strided_slice %346 {offsets = [0, 32], sizes = [8, 32], strides = [1, 1]} : vector<8x128xf32> to vector<8x32xf32>
    %cst_136 = arith.constant 5.000000e-01 : f32
    %353 = vector.broadcast %cst_136 : f32 to vector<8x32xf32>
    %354 = arith.mulf %353, %352 : vector<8x32xf32>
    %cst_137 = arith.constant 5.000000e-01 : f32
    %355 = vector.broadcast %cst_137 : f32 to vector<8x32xf32>
    %356 = arith.addf %354, %355 : vector<8x32xf32>
    %357 = vector.extract_strided_slice %346 {offsets = [0, 64], sizes = [8, 32], strides = [1, 1]} : vector<8x128xf32> to vector<8x32xf32>
    %358 = vector.extract_strided_slice %346 {offsets = [0, 96], sizes = [8, 32], strides = [1, 1]} : vector<8x128xf32> to vector<8x32xf32>
    %cst_138 = arith.constant 5.000000e-01 : f32
    %359 = vector.broadcast %cst_138 : f32 to vector<8x32xf32>
    %360 = arith.mulf %359, %358 : vector<8x32xf32>
    %cst_139 = arith.constant 5.000000e-01 : f32
    %361 = vector.broadcast %cst_139 : f32 to vector<8x32xf32>
    %362 = arith.addf %360, %361 : vector<8x32xf32>
    %363 = arith.mulf %356, %307 : vector<8x32xf32>
    %364 = arith.mulf %351, %357 : vector<8x32xf32>
    %365 = arith.addf %363, %364 : vector<8x32xf32>
    %366 = math.tanh %365 : vector<8x32xf32>
    %367 = arith.mulf %362, %366 : vector<8x32xf32>
    %368 = arith.index_cast %c5_i32 : i32 to index
    %c0_140 = arith.constant 0 : index
    %c0_141 = arith.constant 0 : index
    %369 = vector.load %arg10[%368, %c0_140, %c0_141] : memref<8x8x32xf32, #tpu.memory_space<vmem>>, vector<1x8x32xf32>
    %370 = vector.shape_cast %369 : vector<1x8x32xf32> to vector<8x32xf32>
    %371 = vector.shape_cast %367 : vector<8x32xf32> to vector<1x8x32xf32>
    tpu.vector_store %arg10[%368, %c0_140, %c0_141], %371 {strides = array<i32>} : memref<8x8x32xf32, #tpu.memory_space<vmem>>, vector<1x8x32xf32>,
    %c6_i32 = arith.constant 6 : i32
    %372 = arith.index_cast %c6_i32 : i32 to index
    %c0_142 = arith.constant 0 : index
    %c0_143 = arith.constant 0 : index
    %373 = vector.load %arg13[%372, %c0_142, %c0_143] : memref<8x8x128xf32, #tpu.memory_space<vmem>>, vector<1x8x128xf32>
    %374 = vector.shape_cast %373 : vector<1x8x128xf32> to vector<8x128xf32>
    %cst_144 = arith.constant dense<0.000000e+00> : vector<8x128xf32>
    %375 = tpu.matmul %340, %3, %cst_144 {dimension_numbers = #tpu.dot_dimension_numbers<[1], [0], [0], [1], [0, 0, 1, 1], [], []>} : vector<8x32xf32>, vector<32x128xf32>, vector<8x128xf32> -> vector<8x128xf32>
    %376 = arith.addf %374, %375 : vector<8x128xf32>
    %377 = math.tanh %376 : vector<8x128xf32>
    %378 = vector.extract_strided_slice %377 {offsets = [0, 0], sizes = [8, 32], strides = [1, 1]} : vector<8x128xf32> to vector<8x32xf32>
    %cst_145 = arith.constant 5.000000e-01 : f32
    %379 = vector.broadcast %cst_145 : f32 to vector<8x32xf32>
    %380 = arith.mulf %379, %378 : vector<8x32xf32>
    %cst_146 = arith.constant 5.000000e-01 : f32
    %381 = vector.broadcast %cst_146 : f32 to vector<8x32xf32>
    %382 = arith.addf %380, %381 : vector<8x32xf32>
    %383 = vector.extract_strided_slice %377 {offsets = [0, 32], sizes = [8, 32], strides = [1, 1]} : vector<8x128xf32> to vector<8x32xf32>
    %cst_147 = arith.constant 5.000000e-01 : f32
    %384 = vector.broadcast %cst_147 : f32 to vector<8x32xf32>
    %385 = arith.mulf %384, %383 : vector<8x32xf32>
    %cst_148 = arith.constant 5.000000e-01 : f32
    %386 = vector.broadcast %cst_148 : f32 to vector<8x32xf32>
    %387 = arith.addf %385, %386 : vector<8x32xf32>
    %388 = vector.extract_strided_slice %377 {offsets = [0, 64], sizes = [8, 32], strides = [1, 1]} : vector<8x128xf32> to vector<8x32xf32>
    %389 = vector.extract_strided_slice %377 {offsets = [0, 96], sizes = [8, 32], strides = [1, 1]} : vector<8x128xf32> to vector<8x32xf32>
    %cst_149 = arith.constant 5.000000e-01 : f32
    %390 = vector.broadcast %cst_149 : f32 to vector<8x32xf32>
    %391 = arith.mulf %390, %389 : vector<8x32xf32>
    %cst_150 = arith.constant 5.000000e-01 : f32
    %392 = vector.broadcast %cst_150 : f32 to vector<8x32xf32>
    %393 = arith.addf %391, %392 : vector<8x32xf32>
    %394 = arith.mulf %387, %338 : vector<8x32xf32>
    %395 = arith.mulf %382, %388 : vector<8x32xf32>
    %396 = arith.addf %394, %395 : vector<8x32xf32>
    %397 = math.tanh %396 : vector<8x32xf32>
    %398 = arith.mulf %393, %397 : vector<8x32xf32>
    %cst_151 = arith.constant dense<0.000000e+00> : vector<8x128xf32>
    %399 = tpu.matmul %398, %4, %cst_151 {dimension_numbers = #tpu.dot_dimension_numbers<[1], [0], [0], [1], [0, 0, 1, 1], [], []>} : vector<8x32xf32>, vector<32x128xf32>, vector<8x128xf32> -> vector<8x128xf32>
    %cst_152 = arith.constant dense<0.000000e+00> : vector<8x128xf32>
    %400 = tpu.matmul %367, %5, %cst_152 {dimension_numbers = #tpu.dot_dimension_numbers<[1], [0], [0], [1], [0, 0, 1, 1], [], []>} : vector<8x32xf32>, vector<32x128xf32>, vector<8x128xf32> -> vector<8x128xf32>
    %401 = arith.addf %399, %400 : vector<8x128xf32>
    %402 = vector.broadcast %6 : vector<1x128xf32> to vector<8x128xf32>
    %403 = arith.addf %401, %402 : vector<8x128xf32>
    %404 = math.tanh %403 : vector<8x128xf32>
    %405 = vector.extract_strided_slice %404 {offsets = [0, 0], sizes = [8, 32], strides = [1, 1]} : vector<8x128xf32> to vector<8x32xf32>
    %cst_153 = arith.constant 5.000000e-01 : f32
    %406 = vector.broadcast %cst_153 : f32 to vector<8x32xf32>
    %407 = arith.mulf %406, %405 : vector<8x32xf32>
    %cst_154 = arith.constant 5.000000e-01 : f32
    %408 = vector.broadcast %cst_154 : f32 to vector<8x32xf32>
    %409 = arith.addf %407, %408 : vector<8x32xf32>
    %410 = vector.extract_strided_slice %404 {offsets = [0, 32], sizes = [8, 32], strides = [1, 1]} : vector<8x128xf32> to vector<8x32xf32>
    %cst_155 = arith.constant 5.000000e-01 : f32
    %411 = vector.broadcast %cst_155 : f32 to vector<8x32xf32>
    %412 = arith.mulf %411, %410 : vector<8x32xf32>
    %cst_156 = arith.constant 5.000000e-01 : f32
    %413 = vector.broadcast %cst_156 : f32 to vector<8x32xf32>
    %414 = arith.addf %412, %413 : vector<8x32xf32>
    %415 = vector.extract_strided_slice %404 {offsets = [0, 64], sizes = [8, 32], strides = [1, 1]} : vector<8x128xf32> to vector<8x32xf32>
    %416 = vector.extract_strided_slice %404 {offsets = [0, 96], sizes = [8, 32], strides = [1, 1]} : vector<8x128xf32> to vector<8x32xf32>
    %cst_157 = arith.constant 5.000000e-01 : f32
    %417 = vector.broadcast %cst_157 : f32 to vector<8x32xf32>
    %418 = arith.mulf %417, %416 : vector<8x32xf32>
    %cst_158 = arith.constant 5.000000e-01 : f32
    %419 = vector.broadcast %cst_158 : f32 to vector<8x32xf32>
    %420 = arith.addf %418, %419 : vector<8x32xf32>
    %421 = arith.mulf %414, %365 : vector<8x32xf32>
    %422 = arith.mulf %409, %415 : vector<8x32xf32>
    %423 = arith.addf %421, %422 : vector<8x32xf32>
    %424 = math.tanh %423 : vector<8x32xf32>
    %425 = arith.mulf %420, %424 : vector<8x32xf32>
    %426 = arith.index_cast %c6_i32 : i32 to index
    %c0_159 = arith.constant 0 : index
    %c0_160 = arith.constant 0 : index
    %427 = vector.load %arg10[%426, %c0_159, %c0_160] : memref<8x8x32xf32, #tpu.memory_space<vmem>>, vector<1x8x32xf32>
    %428 = vector.shape_cast %427 : vector<1x8x32xf32> to vector<8x32xf32>
    %429 = vector.shape_cast %425 : vector<8x32xf32> to vector<1x8x32xf32>
    tpu.vector_store %arg10[%426, %c0_159, %c0_160], %429 {strides = array<i32>} : memref<8x8x32xf32, #tpu.memory_space<vmem>>, vector<1x8x32xf32>,
    %c7_i32 = arith.constant 7 : i32
    %430 = arith.index_cast %c7_i32 : i32 to index
    %c0_161 = arith.constant 0 : index
    %c0_162 = arith.constant 0 : index
    %431 = vector.load %arg13[%430, %c0_161, %c0_162] : memref<8x8x128xf32, #tpu.memory_space<vmem>>, vector<1x8x128xf32>
    %432 = vector.shape_cast %431 : vector<1x8x128xf32> to vector<8x128xf32>
    %cst_163 = arith.constant dense<0.000000e+00> : vector<8x128xf32>
    %433 = tpu.matmul %398, %3, %cst_163 {dimension_numbers = #tpu.dot_dimension_numbers<[1], [0], [0], [1], [0, 0, 1, 1], [], []>} : vector<8x32xf32>, vector<32x128xf32>, vector<8x128xf32> -> vector<8x128xf32>
    %434 = arith.addf %432, %433 : vector<8x128xf32>
    %435 = math.tanh %434 : vector<8x128xf32>
    %436 = vector.extract_strided_slice %435 {offsets = [0, 0], sizes = [8, 32], strides = [1, 1]} : vector<8x128xf32> to vector<8x32xf32>
    %cst_164 = arith.constant 5.000000e-01 : f32
    %437 = vector.broadcast %cst_164 : f32 to vector<8x32xf32>
    %438 = arith.mulf %437, %436 : vector<8x32xf32>
    %cst_165 = arith.constant 5.000000e-01 : f32
    %439 = vector.broadcast %cst_165 : f32 to vector<8x32xf32>
    %440 = arith.addf %438, %439 : vector<8x32xf32>
    %441 = vector.extract_strided_slice %435 {offsets = [0, 32], sizes = [8, 32], strides = [1, 1]} : vector<8x128xf32> to vector<8x32xf32>
    %cst_166 = arith.constant 5.000000e-01 : f32
    %442 = vector.broadcast %cst_166 : f32 to vector<8x32xf32>
    %443 = arith.mulf %442, %441 : vector<8x32xf32>
    %cst_167 = arith.constant 5.000000e-01 : f32
    %444 = vector.broadcast %cst_167 : f32 to vector<8x32xf32>
    %445 = arith.addf %443, %444 : vector<8x32xf32>
    %446 = vector.extract_strided_slice %435 {offsets = [0, 64], sizes = [8, 32], strides = [1, 1]} : vector<8x128xf32> to vector<8x32xf32>
    %447 = vector.extract_strided_slice %435 {offsets = [0, 96], sizes = [8, 32], strides = [1, 1]} : vector<8x128xf32> to vector<8x32xf32>
    %cst_168 = arith.constant 5.000000e-01 : f32
    %448 = vector.broadcast %cst_168 : f32 to vector<8x32xf32>
    %449 = arith.mulf %448, %447 : vector<8x32xf32>
    %cst_169 = arith.constant 5.000000e-01 : f32
    %450 = vector.broadcast %cst_169 : f32 to vector<8x32xf32>
    %451 = arith.addf %449, %450 : vector<8x32xf32>
    %452 = arith.mulf %445, %396 : vector<8x32xf32>
    %453 = arith.mulf %440, %446 : vector<8x32xf32>
    %454 = arith.addf %452, %453 : vector<8x32xf32>
    %455 = math.tanh %454 : vector<8x32xf32>
    %456 = arith.mulf %451, %455 : vector<8x32xf32>
    %cst_170 = arith.constant dense<0.000000e+00> : vector<8x128xf32>
    %457 = tpu.matmul %456, %4, %cst_170 {dimension_numbers = #tpu.dot_dimension_numbers<[1], [0], [0], [1], [0, 0, 1, 1], [], []>} : vector<8x32xf32>, vector<32x128xf32>, vector<8x128xf32> -> vector<8x128xf32>
    %cst_171 = arith.constant dense<0.000000e+00> : vector<8x128xf32>
    %458 = tpu.matmul %425, %5, %cst_171 {dimension_numbers = #tpu.dot_dimension_numbers<[1], [0], [0], [1], [0, 0, 1, 1], [], []>} : vector<8x32xf32>, vector<32x128xf32>, vector<8x128xf32> -> vector<8x128xf32>
    %459 = arith.addf %457, %458 : vector<8x128xf32>
    %460 = vector.broadcast %6 : vector<1x128xf32> to vector<8x128xf32>
    %461 = arith.addf %459, %460 : vector<8x128xf32>
    %462 = math.tanh %461 : vector<8x128xf32>
    %463 = vector.extract_strided_slice %462 {offsets = [0, 0], sizes = [8, 32], strides = [1, 1]} : vector<8x128xf32> to vector<8x32xf32>
    %cst_172 = arith.constant 5.000000e-01 : f32
    %464 = vector.broadcast %cst_172 : f32 to vector<8x32xf32>
    %465 = arith.mulf %464, %463 : vector<8x32xf32>
    %cst_173 = arith.constant 5.000000e-01 : f32
    %466 = vector.broadcast %cst_173 : f32 to vector<8x32xf32>
    %467 = arith.addf %465, %466 : vector<8x32xf32>
    %468 = vector.extract_strided_slice %462 {offsets = [0, 32], sizes = [8, 32], strides = [1, 1]} : vector<8x128xf32> to vector<8x32xf32>
    %cst_174 = arith.constant 5.000000e-01 : f32
    %469 = vector.broadcast %cst_174 : f32 to vector<8x32xf32>
    %470 = arith.mulf %469, %468 : vector<8x32xf32>
    %cst_175 = arith.constant 5.000000e-01 : f32
    %471 = vector.broadcast %cst_175 : f32 to vector<8x32xf32>
    %472 = arith.addf %470, %471 : vector<8x32xf32>
    %473 = vector.extract_strided_slice %462 {offsets = [0, 64], sizes = [8, 32], strides = [1, 1]} : vector<8x128xf32> to vector<8x32xf32>
    %474 = vector.extract_strided_slice %462 {offsets = [0, 96], sizes = [8, 32], strides = [1, 1]} : vector<8x128xf32> to vector<8x32xf32>
    %cst_176 = arith.constant 5.000000e-01 : f32
    %475 = vector.broadcast %cst_176 : f32 to vector<8x32xf32>
    %476 = arith.mulf %475, %474 : vector<8x32xf32>
    %cst_177 = arith.constant 5.000000e-01 : f32
    %477 = vector.broadcast %cst_177 : f32 to vector<8x32xf32>
    %478 = arith.addf %476, %477 : vector<8x32xf32>
    %479 = arith.mulf %472, %423 : vector<8x32xf32>
    %480 = arith.mulf %467, %473 : vector<8x32xf32>
    %481 = arith.addf %479, %480 : vector<8x32xf32>
    %482 = math.tanh %481 : vector<8x32xf32>
    %483 = arith.mulf %478, %482 : vector<8x32xf32>
    %484 = arith.index_cast %c7_i32 : i32 to index
    %c0_178 = arith.constant 0 : index
    %c0_179 = arith.constant 0 : index
    %485 = vector.load %arg10[%484, %c0_178, %c0_179] : memref<8x8x32xf32, #tpu.memory_space<vmem>>, vector<1x8x32xf32>
    %486 = vector.shape_cast %485 : vector<1x8x32xf32> to vector<8x32xf32>
    %487 = vector.shape_cast %483 : vector<8x32xf32> to vector<1x8x32xf32>
    tpu.vector_store %arg10[%484, %c0_178, %c0_179], %487 {strides = array<i32>} : memref<8x8x32xf32, #tpu.memory_space<vmem>>, vector<1x8x32xf32>,
    %c8_i32 = arith.constant 8 : i32
    %c0_180 = arith.constant 0 : index
    %c0_181 = arith.constant 0 : index
    %c0_182 = arith.constant 0 : index
    %488 = vector.load %arg14[%c0_180, %c0_181, %c0_182] : memref<4x8x32xf32, #tpu.memory_space<vmem>>, vector<1x8x32xf32>
    %489 = vector.shape_cast %488 : vector<1x8x32xf32> to vector<8x32xf32>
    %490 = vector.shape_cast %456 : vector<8x32xf32> to vector<1x8x32xf32>
    tpu.vector_store %arg14[%c0_180, %c0_181, %c0_182], %490 {strides = array<i32>} : memref<4x8x32xf32, #tpu.memory_space<vmem>>, vector<1x8x32xf32>,
    %c1_183 = arith.constant 1 : index
    %c0_184 = arith.constant 0 : index
    %c0_185 = arith.constant 0 : index
    %491 = vector.load %arg14[%c1_183, %c0_184, %c0_185] : memref<4x8x32xf32, #tpu.memory_space<vmem>>, vector<1x8x32xf32>
    %492 = vector.shape_cast %491 : vector<1x8x32xf32> to vector<8x32xf32>
    %493 = vector.shape_cast %454 : vector<8x32xf32> to vector<1x8x32xf32>
    tpu.vector_store %arg14[%c1_183, %c0_184, %c0_185], %493 {strides = array<i32>} : memref<4x8x32xf32, #tpu.memory_space<vmem>>, vector<1x8x32xf32>,
    %c2_186 = arith.constant 2 : index
    %c0_187 = arith.constant 0 : index
    %c0_188 = arith.constant 0 : index
    %494 = vector.load %arg14[%c2_186, %c0_187, %c0_188] : memref<4x8x32xf32, #tpu.memory_space<vmem>>, vector<1x8x32xf32>
    %495 = vector.shape_cast %494 : vector<1x8x32xf32> to vector<8x32xf32>
    %496 = vector.shape_cast %483 : vector<8x32xf32> to vector<1x8x32xf32>
    tpu.vector_store %arg14[%c2_186, %c0_187, %c0_188], %496 {strides = array<i32>} : memref<4x8x32xf32, #tpu.memory_space<vmem>>, vector<1x8x32xf32>,
    %c3_189 = arith.constant 3 : index
    %c0_190 = arith.constant 0 : index
    %c0_191 = arith.constant 0 : index
    %497 = vector.load %arg14[%c3_189, %c0_190, %c0_191] : memref<4x8x32xf32, #tpu.memory_space<vmem>>, vector<1x8x32xf32>
    %498 = vector.shape_cast %497 : vector<1x8x32xf32> to vector<8x32xf32>
    %499 = vector.shape_cast %481 : vector<8x32xf32> to vector<1x8x32xf32>
    tpu.vector_store %arg14[%c3_189, %c0_190, %c0_191], %499 {strides = array<i32>} : memref<4x8x32xf32, #tpu.memory_space<vmem>>, vector<1x8x32xf32>,
    %c0_i32_192 = arith.constant 0 : i32
    %500 = arith.cmpi eq, %arg0, %c0_i32_192 : i32
    %501 = arith.extui %500 : i1 to i32
    %c0_i32_193 = arith.constant 0 : i32
    %502 = arith.cmpi ne, %501, %c0_i32_193 : i32
    scf.if %502 {
      %c0_194 = arith.constant 0 : index
      %c0_195 = arith.constant 0 : index
      %c0_196 = arith.constant 0 : index
      %503 = vector.load %arg14[%c0_194, %c0_195, %c0_196] : memref<4x8x32xf32, #tpu.memory_space<vmem>>, vector<1x8x32xf32>
      %504 = vector.shape_cast %503 : vector<1x8x32xf32> to vector<8x32xf32>
      %c0_197 = arith.constant 0 : index
      %c0_198 = arith.constant 0 : index
      %c0_199 = arith.constant 0 : index
      %505 = vector.load %arg11[%c0_197, %c0_198, %c0_199] : memref<2x8x32xf32, #tpu.memory_space<vmem>>, vector<1x8x32xf32>
      %506 = vector.shape_cast %505 : vector<1x8x32xf32> to vector<8x32xf32>
      %507 = vector.shape_cast %504 : vector<8x32xf32> to vector<1x8x32xf32>
      tpu.vector_store %arg11[%c0_197, %c0_198, %c0_199], %507 {strides = array<i32>} : memref<2x8x32xf32, #tpu.memory_space<vmem>>, vector<1x8x32xf32>,
      %c2_200 = arith.constant 2 : index
      %c0_201 = arith.constant 0 : index
      %c0_202 = arith.constant 0 : index
      %508 = vector.load %arg14[%c2_200, %c0_201, %c0_202] : memref<4x8x32xf32, #tpu.memory_space<vmem>>, vector<1x8x32xf32>
      %509 = vector.shape_cast %508 : vector<1x8x32xf32> to vector<8x32xf32>
      %c1_203 = arith.constant 1 : index
      %c0_204 = arith.constant 0 : index
      %c0_205 = arith.constant 0 : index
      %510 = vector.load %arg11[%c1_203, %c0_204, %c0_205] : memref<2x8x32xf32, #tpu.memory_space<vmem>>, vector<1x8x32xf32>
      %511 = vector.shape_cast %510 : vector<1x8x32xf32> to vector<8x32xf32>
      %512 = vector.shape_cast %509 : vector<8x32xf32> to vector<1x8x32xf32>
      tpu.vector_store %arg11[%c1_203, %c0_204, %c0_205], %512 {strides = array<i32>} : memref<2x8x32xf32, #tpu.memory_space<vmem>>, vector<1x8x32xf32>,
      %c1_206 = arith.constant 1 : index
      %c0_207 = arith.constant 0 : index
      %c0_208 = arith.constant 0 : index
      %513 = vector.load %arg14[%c1_206, %c0_207, %c0_208] : memref<4x8x32xf32, #tpu.memory_space<vmem>>, vector<1x8x32xf32>
      %514 = vector.shape_cast %513 : vector<1x8x32xf32> to vector<8x32xf32>
      %c0_209 = arith.constant 0 : index
      %c0_210 = arith.constant 0 : index
      %c0_211 = arith.constant 0 : index
      %515 = vector.load %arg12[%c0_209, %c0_210, %c0_211] : memref<2x8x32xf32, #tpu.memory_space<vmem>>, vector<1x8x32xf32>
      %516 = vector.shape_cast %515 : vector<1x8x32xf32> to vector<8x32xf32>
      %517 = vector.shape_cast %514 : vector<8x32xf32> to vector<1x8x32xf32>
      tpu.vector_store %arg12[%c0_209, %c0_210, %c0_211], %517 {strides = array<i32>} : memref<2x8x32xf32, #tpu.memory_space<vmem>>, vector<1x8x32xf32>,
      %c3_212 = arith.constant 3 : index
      %c0_213 = arith.constant 0 : index
      %c0_214 = arith.constant 0 : index
      %518 = vector.load %arg14[%c3_212, %c0_213, %c0_214] : memref<4x8x32xf32, #tpu.memory_space<vmem>>, vector<1x8x32xf32>
      %519 = vector.shape_cast %518 : vector<1x8x32xf32> to vector<8x32xf32>
      %c1_215 = arith.constant 1 : index
      %c0_216 = arith.constant 0 : index
      %c0_217 = arith.constant 0 : index
      %520 = vector.load %arg12[%c1_215, %c0_216, %c0_217] : memref<2x8x32xf32, #tpu.memory_space<vmem>>, vector<1x8x32xf32>
      %521 = vector.shape_cast %520 : vector<1x8x32xf32> to vector<8x32xf32>
      %522 = vector.shape_cast %519 : vector<8x32xf32> to vector<1x8x32xf32>
      tpu.vector_store %arg12[%c1_215, %c0_216, %c0_217], %522 {strides = array<i32>} : memref<2x8x32xf32, #tpu.memory_space<vmem>>, vector<1x8x32xf32>,
    } else {
    }
    return
  }
  func.func @transform_0(%arg0: i32) -> (i32, i32, i32) {
    %c0_i32 = arith.constant 0 : i32
    %c0_i32_0 = arith.constant 0 : i32
    %c0_i32_1 = arith.constant 0 : i32
    return %arg0, %c0_i32, %c0_i32_0 : i32, i32, i32
  }
  func.func @transform_1(%arg0: i32) -> (i32, i32, i32) {
    %c0_i32 = arith.constant 0 : i32
    %c0_i32_0 = arith.constant 0 : i32
    %c0_i32_1 = arith.constant 0 : i32
    %c0_i32_2 = arith.constant 0 : i32
    return %c0_i32, %c0_i32_0, %c0_i32_1 : i32, i32, i32
  }
  func.func @transform_2(%arg0: i32) -> (i32, i32, i32) {
    %c0_i32 = arith.constant 0 : i32
    %c0_i32_0 = arith.constant 0 : i32
    %c0_i32_1 = arith.constant 0 : i32
    %c0_i32_2 = arith.constant 0 : i32
    return %c0_i32, %c0_i32_0, %c0_i32_1 : i32, i32, i32
  }
  func.func @transform_3(%arg0: i32) -> (i32, i32) {
    %c0_i32 = arith.constant 0 : i32
    %c0_i32_0 = arith.constant 0 : i32
    %c0_i32_1 = arith.constant 0 : i32
    return %c0_i32, %c0_i32_0 : i32, i32
  }
  func.func @transform_4(%arg0: i32) -> (i32, i32) {
    %c0_i32 = arith.constant 0 : i32
    %c0_i32_0 = arith.constant 0 : i32
    %c0_i32_1 = arith.constant 0 : i32
    return %c0_i32, %c0_i32_0 : i32, i32
  }
  func.func @transform_5(%arg0: i32) -> (i32, i32) {
    %c0_i32 = arith.constant 0 : i32
    %c0_i32_0 = arith.constant 0 : i32
    %c0_i32_1 = arith.constant 0 : i32
    return %c0_i32, %c0_i32_0 : i32, i32
  }
  func.func @transform_6(%arg0: i32) -> (i32, i32) {
    %c0_i32 = arith.constant 0 : i32
    %c0_i32_0 = arith.constant 0 : i32
    %c0_i32_1 = arith.constant 0 : i32
    return %c0_i32, %c0_i32_0 : i32, i32
  }
  func.func @transform_7(%arg0: i32) -> (i32, i32) {
    %c0_i32 = arith.constant 0 : i32
    %c0_i32_0 = arith.constant 0 : i32
    %c0_i32_1 = arith.constant 0 : i32
    return %c0_i32, %c0_i32_0 : i32, i32
  }
  func.func @transform_8(%arg0: i32) -> (i32, i32) {
    %c0_i32 = arith.constant 0 : i32
    %c0_i32_0 = arith.constant 0 : i32
    %c0_i32_1 = arith.constant 0 : i32
    return %c0_i32, %c0_i32_0 : i32, i32
  }
  func.func @transform_9(%arg0: i32) -> (i32, i32, i32) {
    %c0_i32 = arith.constant 0 : i32
    %c0_i32_0 = arith.constant 0 : i32
    %c0_i32_1 = arith.constant 0 : i32
    return %arg0, %c0_i32, %c0_i32_0 : i32, i32, i32
  }
  func.func @transform_10(%arg0: i32) -> (i32, i32, i32) {
    %c0_i32 = arith.constant 0 : i32
    %c0_i32_0 = arith.constant 0 : i32
    %c0_i32_1 = arith.constant 0 : i32
    %c0_i32_2 = arith.constant 0 : i32
    return %c0_i32, %c0_i32_0, %c0_i32_1 : i32, i32, i32
  }
  func.func @transform_11(%arg0: i32) -> (i32, i32, i32) {
    %c0_i32 = arith.constant 0 : i32
    %c0_i32_0 = arith.constant 0 : i32
    %c0_i32_1 = arith.constant 0 : i32
    %c0_i32_2 = arith.constant 0 : i32
    return %c0_i32, %c0_i32_0, %c0_i32_1 : i32, i32, i32
  }
}

</mosaic_0001>

<llo_original>
// kernel: tpu_custom_call.1
$region0: #{tpu_custom_call.1}
  #allocation0 [shape = 'u32[]', space=smem, size = 0x4, offset = 0x4, fixed_abs, tag = 'smem constant byte address 0x4 - core index']
  #allocation1 [shape = 'u32[144,128]{1,0:T(1,128)}', space=vmem, size = 0x12000, scoped, tag = 'internal scratch']
  #allocation2 [shape = 'f32[8,8,128]{2,1,0:T(8,128)}', space=vmem, size = 0x8000, scoped, tag = 'scratch operand']
  #allocation3 [shape = 'f32[4,8,32]{2,1,0:T(8,128)}', space=vmem, size = 0x4000, scoped, tag = 'scratch operand']
  %s0 = inlined_call_operand.hbm [shape: f32[8,8,64], index: 0, kind: input, shape index: {}]
  %s1 = inlined_call_operand.hbm [shape: f32[2,8,32], index: 1, kind: input, shape index: {}]
  %s2 = inlined_call_operand.hbm [shape: f32[2,8,32], index: 2, kind: input, shape index: {}]
  %s3 = inlined_call_operand.hbm [shape: f32[64,128], index: 3, kind: input, shape index: {}]
  %s4 = inlined_call_operand.hbm [shape: f32[32,128], index: 4, kind: input, shape index: {}]
  %s5 = inlined_call_operand.vmem [shape: f32[1,128], index: 5, kind: input, shape index: {}]
  %s6 = inlined_call_operand.hbm [shape: f32[32,128], index: 6, kind: input, shape index: {}]
  %s7 = inlined_call_operand.hbm [shape: f32[32,128], index: 7, kind: input, shape index: {}]
  %s8 = inlined_call_operand.vmem [shape: f32[1,128], index: 8, kind: input, shape index: {}]
  %s9 = inlined_call_operand.hbm [shape: f32[8,8,32], index: 9, kind: output, shape index: {0}]
  %s10 = inlined_call_operand.hbm [shape: f32[2,8,32], index: 10, kind: output, shape index: {1}]
  %s11 = inlined_call_operand.hbm [shape: f32[2,8,32], index: 11, kind: output, shape index: {2}]
  %12 = xla_tuple %s9, %s10, %s11
  %s13 = sld [smem:[#allocation0]]
  $region98: #{tpu_custom_call.1} parent=0
    _
  %s15 = ssub.s32 1, %s13
  %s16 = scalar_select 0, %s15, %s13
  $region1: #{tpu_custom_call.1} parent=0
    #allocation4 [shape = 'u8[32768]{0}', space=vmem, size = 0x8000, scoped, tag = 'input window, operand 0, single buffered']
    #allocation5 [shape = 's32[1]{0}', space=sflag, size = 0x4, scoped, tag = 'scoped memory for tpu_custom_call.1']
    #allocation6 [shape = 's32[1]{0}', space=sflag, size = 0x4, scoped, tag = 'scoped memory for tpu_custom_call.1']
    #allocation7 [shape = 'u8[8192]{0}', space=vmem, size = 0x2000, scoped, tag = 'input window, operand 1, single buffered']
    #allocation8 [shape = 's32[1]{0}', space=sflag, size = 0x4, scoped, tag = 'scoped memory for tpu_custom_call.1']
    #allocation9 [shape = 'u8[8192]{0}', space=vmem, size = 0x2000, scoped, tag = 'input window, operand 2, single buffered']
    #allocation10 [shape = 'u8[32768]{0}', space=vmem, size = 0x8000, scoped, tag = 'input window, operand 3, single buffered']
    #allocation11 [shape = 's32[1]{0}', space=sflag, size = 0x4, scoped, tag = 'scoped memory for tpu_custom_call.1']
    #allocation12 [shape = 'u8[16384]{0}', space=vmem, size = 0x4000, scoped, tag = 'input window, operand 4, single buffered']
    #allocation13 [shape = 'u8[16384]{0}', space=vmem, size = 0x4000, scoped, tag = 'input window, operand 6, single buffered']
    #allocation14 [shape = 's32[1]{0}', space=sflag, size = 0x4, scoped, tag = 'scoped memory for tpu_custom_call.1']
    #allocation15 [shape = 'u8[16384]{0}', space=vmem, size = 0x4000, scoped, tag = 'input window, operand 7, single buffered']
    #allocation16 [shape = 'u8[32768]{0}', space=vmem, size = 0x8000, scoped, tag = 'output window, operand 0, single buffered']
    #allocation17 [shape = 'u8[8192]{0}', space=vmem, size = 0x2000, scoped, tag = 'output window, operand 1, single buffered']
    #allocation18 [shape = 's32[1]{0}', space=sflag, size = 0x4, scoped, tag = 'scoped memory for tpu_custom_call.1']
    #allocation19 [shape = 'u8[8192]{0}', space=vmem, size = 0x2000, scoped, tag = 'output window, operand 2, single buffered']
    %17 = vsyncpa [#allocation5], 0
    %18 = vsyncpa [#allocation8], 0
    %19 = vsyncpa [#allocation11], 0
    %20 = vsyncpa [#allocation14], 0
    %21 = vsyncpa [#allocation6], 0
    %22 = vsyncpa [#allocation18], 0
    // Predicated region
    $region2: #{tpu_custom_call.1} parent=1 // pred_check
      _
    $region3: #{tpu_custom_call.1} parent=1 // pred_check_branch
      %24 = sbr.rel (0) target = $region5
    $region4: #{tpu_custom_call.1} parent=1 // pred_region
      %s26 = ssub.s32 1024, 1024
      %27 = vsyncadd [#allocation5], %s26
      %s28 = sshll.u32 [#allocation4], 4
      %s29 = int_to_ptr.vmem [resolvable:$true] %s28
      %34 = dma.hbm_to_vmem [thread:$0]  %s0, 1024, %s29, [#allocation5], 128, 128, 8
    $region5: #{tpu_custom_call.1} parent=1 // pred_fallthru
      _
    // Predicated region
    $region6: #{tpu_custom_call.1} parent=1 // pred_check
      _
    $region7: #{tpu_custom_call.1} parent=1 // pred_check_branch
      %36 = sbr.rel (0) target = $region9
    $region8: #{tpu_custom_call.1} parent=1 // pred_region
      %s38 = ssub.s32 256, 256
      %39 = vsyncadd [#allocation8], %s38
      %s40 = sshll.u32 [#allocation7], 4
      %s41 = int_to_ptr.vmem [resolvable:$true] %s40
      %46 = dma.hbm_to_vmem [thread:$0]  %s1, 256, %s41, [#allocation8], 128, 128, 8
    $region9: #{tpu_custom_call.1} parent=1 // pred_fallthru
      _
    // Predicated region
    $region10: #{tpu_custom_call.1} parent=1 // pred_check
      _
    $region11: #{tpu_custom_call.1} parent=1 // pred_check_branch
      %48 = sbr.rel (0) target = $region13
    $region12: #{tpu_custom_call.1} parent=1 // pred_region
      %s50 = ssub.s32 256, 256
      %51 = vsyncadd [#allocation8], %s50
      %s52 = sshll.u32 [#allocation9], 4
      %s53 = int_to_ptr.vmem [resolvable:$true] %s52
      %58 = dma.hbm_to_vmem [thread:$0]  %s2, 256, %s53, [#allocation8], 128, 128, 8
    $region13: #{tpu_custom_call.1} parent=1 // pred_fallthru
      _
    // Predicated region
    $region14: #{tpu_custom_call.1} parent=1 // pred_check
      _
    $region15: #{tpu_custom_call.1} parent=1 // pred_check_branch
      %60 = sbr.rel (0) target = $region17
    $region16: #{tpu_custom_call.1} parent=1 // pred_region
      %s62 = ssub.s32 1024, 1024
      %63 = vsyncadd [#allocation11], %s62
      %s64 = sshll.u32 [#allocation10], 4
      %s65 = int_to_ptr.vmem [resolvable:$true] %s64
      %70 = dma.hbm_to_vmem [thread:$0]  %s3, 1024, %s65, [#allocation11], 128, 128, 8
    $region17: #{tpu_custom_call.1} parent=1 // pred_fallthru
      _
    // Predicated region
    $region18: #{tpu_custom_call.1} parent=1 // pred_check
      _
    $region19: #{tpu_custom_call.1} parent=1 // pred_check_branch
      %72 = sbr.rel (0) target = $region21
    $region20: #{tpu_custom_call.1} parent=1 // pred_region
      %s74 = ssub.s32 512, 512
      %75 = vsyncadd [#allocation11], %s74
      %s76 = sshll.u32 [#allocation12], 4
      %s77 = int_to_ptr.vmem [resolvable:$true] %s76
      %82 = dma.hbm_to_vmem [thread:$0]  %s4, 512, %s77, [#allocation11], 128, 128, 8
    $region21: #{tpu_custom_call.1} parent=1 // pred_fallthru
      _
    // Predicated region
    $region22: #{tpu_custom_call.1} parent=1 // pred_check
      _
    $region23: #{tpu_custom_call.1} parent=1 // pred_check_branch
      %84 = sbr.rel (0) target = $region25
    $region24: #{tpu_custom_call.1} parent=1 // pred_region
      _
    $region25: #{tpu_custom_call.1} parent=1 // pred_fallthru
      _
    // Predicated region
    $region26: #{tpu_custom_call.1} parent=1 // pred_check
      _
    $region27: #{tpu_custom_call.1} parent=1 // pred_check_branch
      %86 = sbr.rel (0) target = $region29
    $region28: #{tpu_custom_call.1} parent=1 // pred_region
      %s88 = ssub.s32 512, 512
      %89 = vsyncadd [#allocation14], %s88
      %s90 = sshll.u32 [#allocation13], 4
      %s91 = int_to_ptr.vmem [resolvable:$true] %s90
      %96 = dma.hbm_to_vmem [thread:$0]  %s6, 512, %s91, [#allocation14], 128, 128, 8
    $region29: #{tpu_custom_call.1} parent=1 // pred_fallthru
      _
    // Predicated region
    $region30: #{tpu_custom_call.1} parent=1 // pred_check
      _
    $region31: #{tpu_custom_call.1} parent=1 // pred_check_branch
      %98 = sbr.rel (0) target = $region33
    $region32: #{tpu_custom_call.1} parent=1 // pred_region
      %s100 = ssub.s32 512, 512
      %101 = vsyncadd [#allocation14], %s100
      %s102 = sshll.u32 [#allocation15], 4
      %s103 = int_to_ptr.vmem [resolvable:$true] %s102
      %108 = dma.hbm_to_vmem [thread:$0]  %s7, 512, %s103, [#allocation14], 128, 128, 8
    $region33: #{tpu_custom_call.1} parent=1 // pred_fallthru
      _
    // Predicated region
    $region34: #{tpu_custom_call.1} parent=1 // pred_check
      _
    $region35: #{tpu_custom_call.1} parent=1 // pred_check_branch
      %110 = sbr.rel (0) target = $region37
    $region36: #{tpu_custom_call.1} parent=1 // pred_region
      _
    $region37: #{tpu_custom_call.1} parent=1 // pred_fallthru
      _
    // Predicated region
    $region38: #{tpu_custom_call.1} parent=1 // pred_check
      _
    $region39: #{tpu_custom_call.1} parent=1 // pred_check_branch
      %112 = sbr.rel (0) target = $region41
    $region40: #{tpu_custom_call.1} parent=1 // pred_region
      %113 = dma.done [#allocation5], 1024
    $region41: #{tpu_custom_call.1} parent=1 // pred_fallthru
      _
    // Predicated region
    $region42: #{tpu_custom_call.1} parent=1 // pred_check
      _
    $region43: #{tpu_custom_call.1} parent=1 // pred_check_branch
      %115 = sbr.rel (0) target = $region45
    $region44: #{tpu_custom_call.1} parent=1 // pred_region
      %116 = dma.done [#allocation8], 256
    $region45: #{tpu_custom_call.1} parent=1 // pred_fallthru
      _
    // Predicated region
    $region46: #{tpu_custom_call.1} parent=1 // pred_check
      _
    $region47: #{tpu_custom_call.1} parent=1 // pred_check_branch
      %118 = sbr.rel (0) target = $region49
    $region48: #{tpu_custom_call.1} parent=1 // pred_region
      %119 = dma.done [#allocation8], 256
    $region49: #{tpu_custom_call.1} parent=1 // pred_fallthru
      _
    // Predicated region
    $region50: #{tpu_custom_call.1} parent=1 // pred_check
      _
    $region51: #{tpu_custom_call.1} parent=1 // pred_check_branch
      %121 = sbr.rel (0) target = $region53
    $region52: #{tpu_custom_call.1} parent=1 // pred_region
      %122 = dma.done [#allocation11], 1024
    $region53: #{tpu_custom_call.1} parent=1 // pred_fallthru
      _
    // Predicated region
    $region54: #{tpu_custom_call.1} parent=1 // pred_check
      _
    $region55: #{tpu_custom_call.1} parent=1 // pred_check_branch
      %124 = sbr.rel (0) target = $region57
    $region56: #{tpu_custom_call.1} parent=1 // pred_region
      %125 = dma.done [#allocation11], 512
    $region57: #{tpu_custom_call.1} parent=1 // pred_fallthru
      _
    // Predicated region
    $region58: #{tpu_custom_call.1} parent=1 // pred_check
      _
    $region59: #{tpu_custom_call.1} parent=1 // pred_check_branch
      %127 = sbr.rel (0) target = $region61
    $region60: #{tpu_custom_call.1} parent=1 // pred_region
      %128 = dma.done [#allocation14], 512
    $region61: #{tpu_custom_call.1} parent=1 // pred_fallthru
      _
    // Predicated region
    $region62: #{tpu_custom_call.1} parent=1 // pred_check
      _
    $region63: #{tpu_custom_call.1} parent=1 // pred_check_branch
      %130 = sbr.rel (0) target = $region65
    $region64: #{tpu_custom_call.1} parent=1 // pred_region
      %131 = dma.done [#allocation14], 512
    $region65: #{tpu_custom_call.1} parent=1 // pred_fallthru
      _
    %p132 = scmp.eq.s32.totalorder 0, 0
    // Predicated region
    $region66: #{tpu_custom_call.1} parent=1 // pred_check
      %p133 = pneg %p132
    $region67: #{tpu_custom_call.1} parent=1 // pred_check_branch
      %135 = sbr.rel (%p133) target = $region69
    $region68: #{tpu_custom_call.1} parent=1 // pred_region
      %v136 = vld [vmem:[#allocation7] sm:$0xff]
      %vm137 = vcmask 261120
      %138 = vst.msk [vmem:[#allocation3] sm:$0xff] %vm137, %v136
      %v139 = vld [vmem:[#allocation9] sm:$0xff]
      %s140 = scalar_lea.vmem [#allocation3], 8
      %141 = vst.msk [vmem:[%s140] sm:$0xff] %vm137, %v139
      %s142 = scalar_lea.vmem [#allocation7], 8
      %v143 = vld [vmem:[%s142] sm:$0xff]
      %s144 = scalar_lea.vmem [#allocation3], 16
      %145 = vst.msk [vmem:[%s144] sm:$0xff] %vm137, %v143
      %s146 = scalar_lea.vmem [#allocation9], 8
      %v147 = vld [vmem:[%s146] sm:$0xff]
      %s148 = scalar_lea.vmem [#allocation3], 24
      %149 = vst.msk [vmem:[%s148] sm:$0xff] %vm137, %v147
    $region69: #{tpu_custom_call.1} parent=1 // pred_fallthru
      _
    %v150 = vld [vmem:[#allocation12] sm:$0xff]
    %v151 = vld [vmem:[#allocation12 + $0x8] sm:$0xff]
    %v152 = vld [vmem:[#allocation12 + $0x10] sm:$0xff]
    %v153 = vld [vmem:[#allocation12 + $0x18] sm:$0xff]
    %v154 = vld [vmem:[#allocation13] sm:$0xff]
    %v155 = vld [vmem:[#allocation13 + $0x8] sm:$0xff]
    %v156 = vld [vmem:[#allocation13 + $0x10] sm:$0xff]
    %v157 = vld [vmem:[#allocation13 + $0x18] sm:$0xff]
    %v158 = vld [vmem:[#allocation15] sm:$0xff]
    %v159 = vld [vmem:[#allocation15 + $0x8] sm:$0xff]
    %v160 = vld [vmem:[#allocation15 + $0x10] sm:$0xff]
    %v161 = vld [vmem:[#allocation15 + $0x18] sm:$0xff]
    %v162 = vld [vmem:[%s8] sm:$0x1]
    %v163 = vld [vmem:[#allocation4] sm:$0xff]
    %v164 = vld [vmem:[#allocation4 + $0x8] sm:$0xff]
    %v165 = vld [vmem:[#allocation4 + $0x10] sm:$0xff]
    %v166 = vld [vmem:[#allocation4 + $0x18] sm:$0xff]
    %v167 = vld [vmem:[#allocation4 + $0x20] sm:$0xff]
    %v168 = vld [vmem:[#allocation4 + $0x28] sm:$0xff]
    %v169 = vld [vmem:[#allocation4 + $0x30] sm:$0xff]
    %v170 = vld [vmem:[#allocation4 + $0x38] sm:$0xff]
    %v171 = vld [vmem:[#allocation10] sm:$0xff]
    %v172 = vld [vmem:[#allocation10 + $0x8] sm:$0xff]
    %v173 = vld [vmem:[#allocation10 + $0x10] sm:$0xff]
    %v174 = vld [vmem:[#allocation10 + $0x18] sm:$0xff]
    %v175 = vld [vmem:[#allocation10 + $0x20] sm:$0xff]
    %v176 = vld [vmem:[#allocation10 + $0x28] sm:$0xff]
    %v177 = vld [vmem:[#allocation10 + $0x30] sm:$0xff]
    %v178 = vld [vmem:[#allocation10 + $0x38] sm:$0xff]
    %v179 = vld [vmem:[%s5] sm:$0x1]
    %v181 = vlaneseq
    %v182 = vshrl.u32 %v181, 7
    %v183 = vsub.s32 0, %v182
    %v184 = vrot.slane %v179, %v183
    %vm186 = vcmask 523264
    %v188 = vsel %vm186, %v163, 0
    %v191 = vsel %vm186, %v164, 0
    %v194 = vsel %vm186, %v165, 0
    %v197 = vsel %vm186, %v166, 0
    %v200 = vsel %vm186, %v167, 0
    %v203 = vsel %vm186, %v168, 0
    %v206 = vsel %vm186, %v169, 0
    %v209 = vsel %vm186, %v170, 0
    %211 = vmatprep.subr.mxu0 0.0
    %212 = vmatpush1.msra.mxu0 %v171
    %213 = vmatprep.subr.mxu0 0.0
    %214 = vmatpush1.msra.mxu0 %v172
    %215 = vmatprep.subr.mxu0 0.0
    %216 = vmatpush1.msra.mxu0 %v173
    %217 = vmatprep.subr.mxu0 0.0
    %218 = vmatpush1.msra.mxu0 %v174
    %219 = vmatprep.subr.mxu0 0.0
    %220 = vmatpush1.msra.mxu0 %v175
    %221 = vmatprep.subr.mxu0 0.0
    %222 = vmatpush1.msra.mxu0 %v176
    %223 = vmatprep.subr.mxu0 0.0
    %224 = vmatpush1.msra.mxu0 %v177
    %225 = vmatprep.subr.mxu0 0.0
    %226 = vmatpush1.msra.mxu0 %v178
    %227 = vmatprep.subr.mxu0 0.0
    %228 = vmatpush1.msra.mxu0 0.0
    %229 = vmatprep.subr.mxu0 0.0
    %230 = vmatpush1.msra.mxu0 0.0
    %231 = vmatprep.subr.mxu0 0.0
    %232 = vmatpush1.msra.mxu0 0.0
    %233 = vmatprep.subr.mxu0 0.0
    %234 = vmatpush1.msra.mxu0 0.0
    %235 = vmatprep.subr.mxu0 0.0
    %236 = vmatpush1.msra.mxu0 0.0
    %237 = vmatprep.subr.mxu0 0.0
    %238 = vmatpush1.msra.mxu0 0.0
    %239 = vmatprep.subr.mxu0 0.0
    %240 = vmatpush1.msra.mxu0 0.0
    %241 = vmatprep.subr.mxu0 0.0
    %242 = vmatpush1.msra.mxu0 0.0
    %243 = vmatprep.subr.mxu0 0.0
    %244 = vmatpush1.msra.mxu0 0.0
    %245 = vmatprep.subr.mxu0 0.0
    %246 = vmatpush1.msra.mxu0 0.0
    %247 = vmatprep.subr.mxu0 0.0
    %248 = vmatpush1.msra.mxu0 0.0
    %249 = vmatprep.subr.mxu0 0.0
    %250 = vmatpush1.msra.mxu0 0.0
    %251 = vmatprep.subr.mxu0 0.0
    %252 = vmatpush1.msra.mxu0 0.0
    %253 = vmatprep.subr.mxu0 0.0
    %254 = vmatpush1.msra.mxu0 0.0
    %255 = vmatprep.subr.mxu0 0.0
    %256 = vmatpush1.msra.mxu0 0.0
    %257 = vmatprep.subr.mxu0 0.0
    %258 = vmatpush1.msra.mxu0 0.0
    %259 = vmatprep.subr.mxu0 0.0
    %260 = vmatpush1.msra.mxu0 0.0
    %261 = vmatprep.subr.mxu0 0.0
    %262 = vmatpush1.msra.mxu0 0.0
    %263 = vmatprep.subr.mxu0 0.0
    %264 = vmatpush1.msra.mxu0 0.0
    %265 = vmatprep.subr.mxu0 0.0
    %266 = vmatpush1.msra.mxu0 0.0
    %267 = vmatprep.subr.mxu0 0.0
    %268 = vmatpush1.msra.mxu0 0.0
    %269 = vmatprep.subr.mxu0 0.0
    %270 = vmatpush1.msra.mxu0 0.0
    %271 = vmatprep.subr.mxu0 0.0
    %272 = vmatpush1.msra.mxu0 0.0
    %273 = vmatprep.subr.mxu0 0.0
    %274 = vmatpush1.msra.mxu0 0.0
    %275 = vmatprep.mubr.f32.mxu0 0.0
    %276 = vmatmul.mubr.f32.gmra.mrb[0].mxu0 %v188
    %v277 = vpop.f32.mrb[0].mxu0
    %v278 = vadd.f32 %v184, %v277
    %v279 = vpop.f32.mrb[0].mxu0
    %280 = vmatprep.mubr.f32.mxu0 0.0
    %281 = vmatmul.mubr.f32.gmra.mrb[0].mxu0 %v191
    %v282 = vpop.f32.mrb[0].mxu0
    %v283 = vadd.f32 %v184, %v282
    %v284 = vpop.f32.mrb[0].mxu0
    %285 = vmatprep.mubr.f32.mxu0 0.0
    %286 = vmatmul.mubr.f32.gmra.mrb[0].mxu0 %v194
    %v287 = vpop.f32.mrb[0].mxu0
    %v288 = vadd.f32 %v184, %v287
    %v289 = vpop.f32.mrb[0].mxu0
    %290 = vmatprep.mubr.f32.mxu0 0.0
    %291 = vmatmul.mubr.f32.gmra.mrb[0].mxu0 %v197
    %v292 = vpop.f32.mrb[0].mxu0
    %v293 = vadd.f32 %v184, %v292
    %v294 = vpop.f32.mrb[0].mxu0
    %295 = vmatprep.mubr.f32.mxu0 0.0
    %296 = vmatmul.mubr.f32.gmra.mrb[0].mxu0 %v200
    %v297 = vpop.f32.mrb[0].mxu0
    %v298 = vadd.f32 %v184, %v297
    %v299 = vpop.f32.mrb[0].mxu0
    %300 = vmatprep.mubr.f32.mxu0 0.0
    %301 = vmatmul.mubr.f32.gmra.mrb[0].mxu0 %v203
    %v302 = vpop.f32.mrb[0].mxu0
    %v303 = vadd.f32 %v184, %v302
    %v304 = vpop.f32.mrb[0].mxu0
    %305 = vmatprep.mubr.f32.mxu0 0.0
    %306 = vmatmul.mubr.f32.gmra.mrb[0].mxu0 %v206
    %v307 = vpop.f32.mrb[0].mxu0
    %v308 = vadd.f32 %v184, %v307
    %v309 = vpop.f32.mrb[0].mxu0
    %310 = vmatprep.mubr.f32.mxu0 0.0
    %311 = vmatmul.mubr.f32.gmra.mrb[0].mxu0 %v209
    %v312 = vpop.f32.mrb[0].mxu0
    %v313 = vadd.f32 %v184, %v312
    %v314 = vpop.f32.mrb[0].mxu0
    %315 = vdwg.mxu0
    %316 = vst [vmem:[#allocation2] sm:$0xff] %v278
    %317 = vst [vmem:[#allocation2 + $0x8] sm:$0xff] %v283
    %318 = vst [vmem:[#allocation2 + $0x10] sm:$0xff] %v288
    %319 = vst [vmem:[#allocation2 + $0x18] sm:$0xff] %v293
    %320 = vst [vmem:[#allocation2 + $0x20] sm:$0xff] %v298
    %321 = vst [vmem:[#allocation2 + $0x28] sm:$0xff] %v303
    %322 = vst [vmem:[#allocation2 + $0x30] sm:$0xff] %v308
    %323 = vst [vmem:[#allocation2 + $0x38] sm:$0xff] %v313
    %v324 = vld [vmem:[#allocation3] sm:$0xff]
    %s325 = scalar_lea.vmem [#allocation3], 8
    %v326 = vld [vmem:[%s325] sm:$0xff]
    %s327 = scalar_lea.vmem [#allocation3], 16
    %v328 = vld [vmem:[%s327] sm:$0xff]
    %s329 = scalar_lea.vmem [#allocation3], 24
    %v330 = vld [vmem:[%s329] sm:$0xff]
    %v331 = vld [vmem:[#allocation2] sm:$0xff]
    %vm332 = vcmask 261120
    %v334 = vsel %vm332, %v324, 0
    %336 = vmatprep.subr.mxu0 0.0
    %337 = vmatpush1.msra.mxu0 %v150
    %338 = vmatprep.subr.mxu0 0.0
    %339 = vmatpush1.msra.mxu0 %v151
    %340 = vmatprep.subr.mxu0 0.0
    %341 = vmatpush1.msra.mxu0 %v152
    %342 = vmatprep.subr.mxu0 0.0
    %343 = vmatpush1.msra.mxu0 %v153
    %344 = vmatprep.subr.mxu0 0.0
    %345 = vmatpush1.msra.mxu0 0.0
    %346 = vmatprep.subr.mxu0 0.0
    %347 = vmatpush1.msra.mxu0 0.0
    %348 = vmatprep.subr.mxu0 0.0
    %349 = vmatpush1.msra.mxu0 0.0
    %350 = vmatprep.subr.mxu0 0.0
    %351 = vmatpush1.msra.mxu0 0.0
    %352 = vmatprep.subr.mxu0 0.0
    %353 = vmatpush1.msra.mxu0 0.0
    %354 = vmatprep.subr.mxu0 0.0
    %355 = vmatpush1.msra.mxu0 0.0
    %356 = vmatprep.subr.mxu0 0.0
    %357 = vmatpush1.msra.mxu0 0.0
    %358 = vmatprep.subr.mxu0 0.0
    %359 = vmatpush1.msra.mxu0 0.0
    %360 = vmatprep.subr.mxu0 0.0
    %361 = vmatpush1.msra.mxu0 0.0
    %362 = vmatprep.subr.mxu0 0.0
    %363 = vmatpush1.msra.mxu0 0.0
    %364 = vmatprep.subr.mxu0 0.0
    %365 = vmatpush1.msra.mxu0 0.0
    %366 = vmatprep.subr.mxu0 0.0
    %367 = vmatpush1.msra.mxu0 0.0
    %368 = vmatprep.subr.mxu0 0.0
    %369 = vmatpush1.msra.mxu0 0.0
    %370 = vmatprep.subr.mxu0 0.0
    %371 = vmatpush1.msra.mxu0 0.0
    %372 = vmatprep.subr.mxu0 0.0
    %373 = vmatpush1.msra.mxu0 0.0
    %374 = vmatprep.subr.mxu0 0.0
    %375 = vmatpush1.msra.mxu0 0.0
    %376 = vmatprep.subr.mxu0 0.0
    %377 = vmatpush1.msra.mxu0 0.0
    %378 = vmatprep.subr.mxu0 0.0
    %379 = vmatpush1.msra.mxu0 0.0
    %380 = vmatprep.subr.mxu0 0.0
    %381 = vmatpush1.msra.mxu0 0.0
    %382 = vmatprep.subr.mxu0 0.0
    %383 = vmatpush1.msra.mxu0 0.0
    %384 = vmatprep.subr.mxu0 0.0
    %385 = vmatpush1.msra.mxu0 0.0
    %386 = vmatprep.subr.mxu0 0.0
    %387 = vmatpush1.msra.mxu0 0.0
    %388 = vmatprep.subr.mxu0 0.0
    %389 = vmatpush1.msra.mxu0 0.0
    %390 = vmatprep.subr.mxu0 0.0
    %391 = vmatpush1.msra.mxu0 0.0
    %392 = vmatprep.subr.mxu0 0.0
    %393 = vmatpush1.msra.mxu0 0.0
    %394 = vmatprep.subr.mxu0 0.0
    %395 = vmatpush1.msra.mxu0 0.0
    %396 = vmatprep.subr.mxu0 0.0
    %397 = vmatpush1.msra.mxu0 0.0
    %398 = vmatprep.subr.mxu0 0.0
    %399 = vmatpush1.msra.mxu0 0.0
    %400 = vmatprep.mubr.f32.mxu0 0.0
    %401 = vmatmul.mubr.f32.gmra.mrb[0].mxu0 %v334
    %v402 = vpop.f32.mrb[0].mxu0
    %v403 = vadd.f32 0.0, %v402
    %v404 = vpop.f32.mrb[0].mxu0
    %405 = vdwg.mxu0
    %v406 = vadd.f32 %v331, %v403
    %v407 = vtanh.pop %v406
    %v408 = vmul.f32 %v407, 0.5
    %v409 = vadd.f32 %v408, 0.5
    %411 = vrot.lane.b32.xlu0 %v326, 32
    %v412 = vpop.permute.xlu0 %411
    %v414 = vmul.f32 %v409, %v412
    %416 = vrot.lane.b32.xlu0 %v407, 64
    %v417 = vpop.permute.xlu0 %416
    %v419 = vmul.f32 %v409, %v417
    %421 = vrot.lane.b32.xlu0 %v419, 32
    %v422 = vpop.permute.xlu0 %421
    %v424 = vadd.f32 %v414, %v422
    %v425 = vtanh.pop %v424
    %427 = vrot.lane.b32.xlu0 %v425, 64
    %v428 = vpop.permute.xlu0 %427
    %v430 = vmul.f32 %v409, %v428
    %v432 = vsel %vm332, %v328, 0
    %434 = vmatprep.subr.mxu0 0.0
    %435 = vmatpush1.msra.mxu0 %v158
    %436 = vmatprep.subr.mxu0 0.0
    %437 = vmatpush1.msra.mxu0 %v159
    %438 = vmatprep.subr.mxu0 0.0
    %439 = vmatpush1.msra.mxu0 %v160
    %440 = vmatprep.subr.mxu0 0.0
    %441 = vmatpush1.msra.mxu0 %v161
    %442 = vmatprep.subr.mxu0 0.0
    %443 = vmatpush1.msra.mxu0 0.0
    %444 = vmatprep.subr.mxu0 0.0
    %445 = vmatpush1.msra.mxu0 0.0
    %446 = vmatprep.subr.mxu0 0.0
    %447 = vmatpush1.msra.mxu0 0.0
    %448 = vmatprep.subr.mxu0 0.0
    %449 = vmatpush1.msra.mxu0 0.0
    %450 = vmatprep.subr.mxu0 0.0
    %451 = vmatpush1.msra.mxu0 0.0
    %452 = vmatprep.subr.mxu0 0.0
    %453 = vmatpush1.msra.mxu0 0.0
    %454 = vmatprep.subr.mxu0 0.0
    %455 = vmatpush1.msra.mxu0 0.0
    %456 = vmatprep.subr.mxu0 0.0
    %457 = vmatpush1.msra.mxu0 0.0
    %458 = vmatprep.subr.mxu0 0.0
    %459 = vmatpush1.msra.mxu0 0.0
    %460 = vmatprep.subr.mxu0 0.0
    %461 = vmatpush1.msra.mxu0 0.0
    %462 = vmatprep.subr.mxu0 0.0
    %463 = vmatpush1.msra.mxu0 0.0
    %464 = vmatprep.subr.mxu0 0.0
    %465 = vmatpush1.msra.mxu0 0.0
    %466 = vmatprep.subr.mxu0 0.0
    %467 = vmatpush1.msra.mxu0 0.0
    %468 = vmatprep.subr.mxu0 0.0
    %469 = vmatpush1.msra.mxu0 0.0
    %470 = vmatprep.subr.mxu0 0.0
    %471 = vmatpush1.msra.mxu0 0.0
    %472 = vmatprep.subr.mxu0 0.0
    %473 = vmatpush1.msra.mxu0 0.0
    %474 = vmatprep.subr.mxu0 0.0
    %475 = vmatpush1.msra.mxu0 0.0
    %476 = vmatprep.subr.mxu0 0.0
    %477 = vmatpush1.msra.mxu0 0.0
    %478 = vmatprep.subr.mxu0 0.0
    %479 = vmatpush1.msra.mxu0 0.0
    %480 = vmatprep.subr.mxu0 0.0
    %481 = vmatpush1.msra.mxu0 0.0
    %482 = vmatprep.subr.mxu0 0.0
    %483 = vmatpush1.msra.mxu0 0.0
    %484 = vmatprep.subr.mxu0 0.0
    %485 = vmatpush1.msra.mxu0 0.0
    %486 = vmatprep.subr.mxu0 0.0
    %487 = vmatpush1.msra.mxu0 0.0
    %488 = vmatprep.subr.mxu0 0.0
    %489 = vmatpush1.msra.mxu0 0.0
    %490 = vmatprep.subr.mxu0 0.0
    %491 = vmatpush1.msra.mxu0 0.0
    %492 = vmatprep.subr.mxu0 0.0
    %493 = vmatpush1.msra.mxu0 0.0
    %494 = vmatprep.subr.mxu0 0.0
    %495 = vmatpush1.msra.mxu0 0.0
    %496 = vmatprep.subr.mxu0 0.0
    %497 = vmatpush1.msra.mxu0 0.0
    %498 = vmatprep.mubr.f32.mxu0 0.0
    %499 = vmatmul.mubr.f32.gmra.mrb[0].mxu0 %v432
    %v500 = vpop.f32.mrb[0].mxu0
    %v501 = vadd.f32 0.0, %v500
    %v502 = vpop.f32.mrb[0].mxu0
    %503 = vdwg.mxu0
    %505 = vrot.lane.b32.xlu0 %v430, 32
    %v506 = vpop.permute.xlu0 %505
    %v507 = vsel %vm332, %v506, 0
    %509 = vmatprep.subr.mxu0 0.0
    %510 = vmatpush1.msra.mxu0 %v154
    %511 = vmatprep.subr.mxu0 0.0
    %512 = vmatpush1.msra.mxu0 %v155
    %513 = vmatprep.subr.mxu0 0.0
    %514 = vmatpush1.msra.mxu0 %v156
    %515 = vmatprep.subr.mxu0 0.0
    %516 = vmatpush1.msra.mxu0 %v157
    %517 = vmatprep.subr.mxu0 0.0
    %518 = vmatpush1.msra.mxu0 0.0
    %519 = vmatprep.subr.mxu0 0.0
    %520 = vmatpush1.msra.mxu0 0.0
    %521 = vmatprep.subr.mxu0 0.0
    %522 = vmatpush1.msra.mxu0 0.0
    %523 = vmatprep.subr.mxu0 0.0
    %524 = vmatpush1.msra.mxu0 0.0
    %525 = vmatprep.subr.mxu0 0.0
    %526 = vmatpush1.msra.mxu0 0.0
    %527 = vmatprep.subr.mxu0 0.0
    %528 = vmatpush1.msra.mxu0 0.0
    %529 = vmatprep.subr.mxu0 0.0
    %530 = vmatpush1.msra.mxu0 0.0
    %531 = vmatprep.subr.mxu0 0.0
    %532 = vmatpush1.msra.mxu0 0.0
    %533 = vmatprep.subr.mxu0 0.0
    %534 = vmatpush1.msra.mxu0 0.0
    %535 = vmatprep.subr.mxu0 0.0
    %536 = vmatpush1.msra.mxu0 0.0
    %537 = vmatprep.subr.mxu0 0.0
    %538 = vmatpush1.msra.mxu0 0.0
    %539 = vmatprep.subr.mxu0 0.0
    %540 = vmatpush1.msra.mxu0 0.0
    %541 = vmatprep.subr.mxu0 0.0
    %542 = vmatpush1.msra.mxu0 0.0
    %543 = vmatprep.subr.mxu0 0.0
    %544 = vmatpush1.msra.mxu0 0.0
    %545 = vmatprep.subr.mxu0 0.0
    %546 = vmatpush1.msra.mxu0 0.0
    %547 = vmatprep.subr.mxu0 0.0
    %548 = vmatpush1.msra.mxu0 0.0
    %549 = vmatprep.subr.mxu0 0.0
    %550 = vmatpush1.msra.mxu0 0.0
    %551 = vmatprep.subr.mxu0 0.0
    %552 = vmatpush1.msra.mxu0 0.0
    %553 = vmatprep.subr.mxu0 0.0
    %554 = vmatpush1.msra.mxu0 0.0
    %555 = vmatprep.subr.mxu0 0.0
    %556 = vmatpush1.msra.mxu0 0.0
    %557 = vmatprep.subr.mxu0 0.0
    %558 = vmatpush1.msra.mxu0 0.0
    %559 = vmatprep.subr.mxu0 0.0
    %560 = vmatpush1.msra.mxu0 0.0
    %561 = vmatprep.subr.mxu0 0.0
    %562 = vmatpush1.msra.mxu0 0.0
    %563 = vmatprep.subr.mxu0 0.0
    %564 = vmatpush1.msra.mxu0 0.0
    %565 = vmatprep.subr.mxu0 0.0
    %566 = vmatpush1.msra.mxu0 0.0
    %567 = vmatprep.subr.mxu0 0.0
    %568 = vmatpush1.msra.mxu0 0.0
    %569 = vmatprep.subr.mxu0 0.0
    %570 = vmatpush1.msra.mxu0 0.0
    %571 = vmatprep.subr.mxu0 0.0
    %572 = vmatpush1.msra.mxu0 0.0
    %573 = vmatprep.mubr.f32.mxu0 0.0
    %574 = vmatmul.mubr.f32.gmra.mrb[0].mxu0 %v507
    %v575 = vpop.f32.mrb[0].mxu0
    %v576 = vadd.f32 %v501, %v575
    %v577 = vpop.f32.mrb[0].mxu0
    %578 = vdwg.mxu0
    %v580 = vlaneseq
    %v581 = vshrl.u32 %v580, 7
    %v582 = vsub.s32 0, %v581
    %v583 = vrot.slane %v162, %v582
    %v585 = vadd.f32 %v576, %v583
    %v586 = vtanh.pop %v585
    %v587 = vmul.f32 %v586, 0.5
    %v588 = vadd.f32 %v587, 0.5
    %590 = vrot.lane.b32.xlu0 %v330, 32
    %v591 = vpop.permute.xlu0 %590
    %v593 = vmul.f32 %v588, %v591
    %595 = vrot.lane.b32.xlu0 %v586, 64
    %v596 = vpop.permute.xlu0 %595
    %v598 = vmul.f32 %v588, %v596
    %600 = vrot.lane.b32.xlu0 %v598, 32
    %v601 = vpop.permute.xlu0 %600
    %v603 = vadd.f32 %v593, %v601
    %v604 = vtanh.pop %v603
    %606 = vrot.lane.b32.xlu0 %v604, 64
    %v607 = vpop.permute.xlu0 %606
    %v609 = vmul.f32 %v588, %v607
    %611 = vrot.lane.b32.xlu0 %v609, 32
    %v612 = vpop.permute.xlu0 %611
    %614 = vst.msk [vmem:[#allocation16] sm:$0xff] %vm332, %v612
    %s615 = scalar_lea.vmem [#allocation2], 8
    %v616 = vld [vmem:[%s615] sm:$0xff]
    %617 = vmatprep.subr.mxu0 0.0
    %618 = vmatpush1.msra.mxu0 %v150
    %619 = vmatprep.subr.mxu0 0.0
    %620 = vmatpush1.msra.mxu0 %v151
    %621 = vmatprep.subr.mxu0 0.0
    %622 = vmatpush1.msra.mxu0 %v152
    %623 = vmatprep.subr.mxu0 0.0
    %624 = vmatpush1.msra.mxu0 %v153
    %625 = vmatprep.subr.mxu0 0.0
    %626 = vmatpush1.msra.mxu0 0.0
    %627 = vmatprep.subr.mxu0 0.0
    %628 = vmatpush1.msra.mxu0 0.0
    %629 = vmatprep.subr.mxu0 0.0
    %630 = vmatpush1.msra.mxu0 0.0
    %631 = vmatprep.subr.mxu0 0.0
    %632 = vmatpush1.msra.mxu0 0.0
    %633 = vmatprep.subr.mxu0 0.0
    %634 = vmatpush1.msra.mxu0 0.0
    %635 = vmatprep.subr.mxu0 0.0
    %636 = vmatpush1.msra.mxu0 0.0
    %637 = vmatprep.subr.mxu0 0.0
    %638 = vmatpush1.msra.mxu0 0.0
    %639 = vmatprep.subr.mxu0 0.0
    %640 = vmatpush1.msra.mxu0 0.0
    %641 = vmatprep.subr.mxu0 0.0
    %642 = vmatpush1.msra.mxu0 0.0
    %643 = vmatprep.subr.mxu0 0.0
    %644 = vmatpush1.msra.mxu0 0.0
    %645 = vmatprep.subr.mxu0 0.0
    %646 = vmatpush1.msra.mxu0 0.0
    %647 = vmatprep.subr.mxu0 0.0
    %648 = vmatpush1.msra.mxu0 0.0
    %649 = vmatprep.subr.mxu0 0.0
    %650 = vmatpush1.msra.mxu0 0.0
    %651 = vmatprep.subr.mxu0 0.0
    %652 = vmatpush1.msra.mxu0 0.0
    %653 = vmatprep.subr.mxu0 0.0
    %654 = vmatpush1.msra.mxu0 0.0
    %655 = vmatprep.subr.mxu0 0.0
    %656 = vmatpush1.msra.mxu0 0.0
    %657 = vmatprep.subr.mxu0 0.0
    %658 = vmatpush1.msra.mxu0 0.0
    %659 = vmatprep.subr.mxu0 0.0
    %660 = vmatpush1.msra.mxu0 0.0
    %661 = vmatprep.subr.mxu0 0.0
    %662 = vmatpush1.msra.mxu0 0.0
    %663 = vmatprep.subr.mxu0 0.0
    %664 = vmatpush1.msra.mxu0 0.0
    %665 = vmatprep.subr.mxu0 0.0
    %666 = vmatpush1.msra.mxu0 0.0
    %667 = vmatprep.subr.mxu0 0.0
    %668 = vmatpush1.msra.mxu0 0.0
    %669 = vmatprep.subr.mxu0 0.0
    %670 = vmatpush1.msra.mxu0 0.0
    %671 = vmatprep.subr.mxu0 0.0
    %672 = vmatpush1.msra.mxu0 0.0
    %673 = vmatprep.subr.mxu0 0.0
    %674 = vmatpush1.msra.mxu0 0.0
    %675 = vmatprep.subr.mxu0 0.0
    %676 = vmatpush1.msra.mxu0 0.0
    %677 = vmatprep.subr.mxu0 0.0
    %678 = vmatpush1.msra.mxu0 0.0
    %679 = vmatprep.subr.mxu0 0.0
    %680 = vmatpush1.msra.mxu0 0.0
    %681 = vmatprep.mubr.f32.mxu0 0.0
    %682 = vmatmul.mubr.f32.gmra.mrb[0].mxu0 %v507
    %v683 = vpop.f32.mrb[0].mxu0
    %v684 = vadd.f32 0.0, %v683
    %v685 = vpop.f32.mrb[0].mxu0
    %686 = vdwg.mxu0
    %v687 = vadd.f32 %v616, %v684
    %v688 = vtanh.pop %v687
    %v689 = vmul.f32 %v688, 0.5
    %v690 = vadd.f32 %v689, 0.5
    %v691 = vmul.f32 %v690, %v424
    %693 = vrot.lane.b32.xlu0 %v688, 64
    %v694 = vpop.permute.xlu0 %693
    %v696 = vmul.f32 %v690, %v694
    %698 = vrot.lane.b32.xlu0 %v696, 32
    %v699 = vpop.permute.xlu0 %698
    %v701 = vadd.f32 %v691, %v699
    %v702 = vtanh.pop %v701
    %704 = vrot.lane.b32.xlu0 %v702, 64
    %v705 = vpop.permute.xlu0 %704
    %v707 = vmul.f32 %v690, %v705
    %v708 = vsel %vm332, %v612, 0
    %710 = vmatprep.subr.mxu0 0.0
    %711 = vmatpush1.msra.mxu0 %v158
    %712 = vmatprep.subr.mxu0 0.0
    %713 = vmatpush1.msra.mxu0 %v159
    %714 = vmatprep.subr.mxu0 0.0
    %715 = vmatpush1.msra.mxu0 %v160
    %716 = vmatprep.subr.mxu0 0.0
    %717 = vmatpush1.msra.mxu0 %v161
    %718 = vmatprep.subr.mxu0 0.0
    %719 = vmatpush1.msra.mxu0 0.0
    %720 = vmatprep.subr.mxu0 0.0
    %721 = vmatpush1.msra.mxu0 0.0
    %722 = vmatprep.subr.mxu0 0.0
    %723 = vmatpush1.msra.mxu0 0.0
    %724 = vmatprep.subr.mxu0 0.0
    %725 = vmatpush1.msra.mxu0 0.0
    %726 = vmatprep.subr.mxu0 0.0
    %727 = vmatpush1.msra.mxu0 0.0
    %728 = vmatprep.subr.mxu0 0.0
    %729 = vmatpush1.msra.mxu0 0.0
    %730 = vmatprep.subr.mxu0 0.0
    %731 = vmatpush1.msra.mxu0 0.0
    %732 = vmatprep.subr.mxu0 0.0
    %733 = vmatpush1.msra.mxu0 0.0
    %734 = vmatprep.subr.mxu0 0.0
    %735 = vmatpush1.msra.mxu0 0.0
    %736 = vmatprep.subr.mxu0 0.0
    %737 = vmatpush1.msra.mxu0 0.0
    %738 = vmatprep.subr.mxu0 0.0
    %739 = vmatpush1.msra.mxu0 0.0
    %740 = vmatprep.subr.mxu0 0.0
    %741 = vmatpush1.msra.mxu0 0.0
    %742 = vmatprep.subr.mxu0 0.0
    %743 = vmatpush1.msra.mxu0 0.0
    %744 = vmatprep.subr.mxu0 0.0
    %745 = vmatpush1.msra.mxu0 0.0
    %746 = vmatprep.subr.mxu0 0.0
    %747 = vmatpush1.msra.mxu0 0.0
    %748 = vmatprep.subr.mxu0 0.0
    %749 = vmatpush1.msra.mxu0 0.0
    %750 = vmatprep.subr.mxu0 0.0
    %751 = vmatpush1.msra.mxu0 0.0
    %752 = vmatprep.subr.mxu0 0.0
    %753 = vmatpush1.msra.mxu0 0.0
    %754 = vmatprep.subr.mxu0 0.0
    %755 = vmatpush1.msra.mxu0 0.0
    %756 = vmatprep.subr.mxu0 0.0
    %757 = vmatpush1.msra.mxu0 0.0
    %758 = vmatprep.subr.mxu0 0.0
    %759 = vmatpush1.msra.mxu0 0.0
    %760 = vmatprep.subr.mxu0 0.0
    %761 = vmatpush1.msra.mxu0 0.0
    %762 = vmatprep.subr.mxu0 0.0
    %763 = vmatpush1.msra.mxu0 0.0
    %764 = vmatprep.subr.mxu0 0.0
    %765 = vmatpush1.msra.mxu0 0.0
    %766 = vmatprep.subr.mxu0 0.0
    %767 = vmatpush1.msra.mxu0 0.0
    %768 = vmatprep.subr.mxu0 0.0
    %769 = vmatpush1.msra.mxu0 0.0
    %770 = vmatprep.subr.mxu0 0.0
    %771 = vmatpush1.msra.mxu0 0.0
    %772 = vmatprep.subr.mxu0 0.0
    %773 = vmatpush1.msra.mxu0 0.0
    %774 = vmatprep.mubr.f32.mxu0 0.0
    %775 = vmatmul.mubr.f32.gmra.mrb[0].mxu0 %v708
    %v776 = vpop.f32.mrb[0].mxu0
    %v777 = vadd.f32 0.0, %v776
    %v778 = vpop.f32.mrb[0].mxu0
    %779 = vdwg.mxu0
    %781 = vrot.lane.b32.xlu0 %v707, 32
    %v782 = vpop.permute.xlu0 %781
    %v783 = vsel %vm332, %v782, 0
    %785 = vmatprep.subr.mxu0 0.0
    %786 = vmatpush1.msra.mxu0 %v154
    %787 = vmatprep.subr.mxu0 0.0
    %788 = vmatpush1.msra.mxu0 %v155
    %789 = vmatprep.subr.mxu0 0.0
    %790 = vmatpush1.msra.mxu0 %v156
    %791 = vmatprep.subr.mxu0 0.0
    %792 = vmatpush1.msra.mxu0 %v157
    %793 = vmatprep.subr.mxu0 0.0
    %794 = vmatpush1.msra.mxu0 0.0
    %795 = vmatprep.subr.mxu0 0.0
    %796 = vmatpush1.msra.mxu0 0.0
    %797 = vmatprep.subr.mxu0 0.0
    %798 = vmatpush1.msra.mxu0 0.0
    %799 = vmatprep.subr.mxu0 0.0
    %800 = vmatpush1.msra.mxu0 0.0
    %801 = vmatprep.subr.mxu0 0.0
    %802 = vmatpush1.msra.mxu0 0.0
    %803 = vmatprep.subr.mxu0 0.0
    %804 = vmatpush1.msra.mxu0 0.0
    %805 = vmatprep.subr.mxu0 0.0
    %806 = vmatpush1.msra.mxu0 0.0
    %807 = vmatprep.subr.mxu0 0.0
    %808 = vmatpush1.msra.mxu0 0.0
    %809 = vmatprep.subr.mxu0 0.0
    %810 = vmatpush1.msra.mxu0 0.0
    %811 = vmatprep.subr.mxu0 0.0
    %812 = vmatpush1.msra.mxu0 0.0
    %813 = vmatprep.subr.mxu0 0.0
    %814 = vmatpush1.msra.mxu0 0.0
    %815 = vmatprep.subr.mxu0 0.0
    %816 = vmatpush1.msra.mxu0 0.0
    %817 = vmatprep.subr.mxu0 0.0
    %818 = vmatpush1.msra.mxu0 0.0
    %819 = vmatprep.subr.mxu0 0.0
    %820 = vmatpush1.msra.mxu0 0.0
    %821 = vmatprep.subr.mxu0 0.0
    %822 = vmatpush1.msra.mxu0 0.0
    %823 = vmatprep.subr.mxu0 0.0
    %824 = vmatpush1.msra.mxu0 0.0
    %825 = vmatprep.subr.mxu0 0.0
    %826 = vmatpush1.msra.mxu0 0.0
    %827 = vmatprep.subr.mxu0 0.0
    %828 = vmatpush1.msra.mxu0 0.0
    %829 = vmatprep.subr.mxu0 0.0
    %830 = vmatpush1.msra.mxu0 0.0
    %831 = vmatprep.subr.mxu0 0.0
    %832 = vmatpush1.msra.mxu0 0.0
    %833 = vmatprep.subr.mxu0 0.0
    %834 = vmatpush1.msra.mxu0 0.0
    %835 = vmatprep.subr.mxu0 0.0
    %836 = vmatpush1.msra.mxu0 0.0
    %837 = vmatprep.subr.mxu0 0.0
    %838 = vmatpush1.msra.mxu0 0.0
    %839 = vmatprep.subr.mxu0 0.0
    %840 = vmatpush1.msra.mxu0 0.0
    %841 = vmatprep.subr.mxu0 0.0
    %842 = vmatpush1.msra.mxu0 0.0
    %843 = vmatprep.subr.mxu0 0.0
    %844 = vmatpush1.msra.mxu0 0.0
    %845 = vmatprep.subr.mxu0 0.0
    %846 = vmatpush1.msra.mxu0 0.0
    %847 = vmatprep.subr.mxu0 0.0
    %848 = vmatpush1.msra.mxu0 0.0
    %849 = vmatprep.mubr.f32.mxu0 0.0
    %850 = vmatmul.mubr.f32.gmra.mrb[0].mxu0 %v783
    %v851 = vpop.f32.mrb[0].mxu0
    %v852 = vadd.f32 %v777, %v851
    %v853 = vpop.f32.mrb[0].mxu0
    %854 = vdwg.mxu0
    %v855 = vadd.f32 %v852, %v583
    %v856 = vtanh.pop %v855
    %v857 = vmul.f32 %v856, 0.5
    %v858 = vadd.f32 %v857, 0.5
    %v859 = vmul.f32 %v858, %v603
    %861 = vrot.lane.b32.xlu0 %v856, 64
    %v862 = vpop.permute.xlu0 %861
    %v864 = vmul.f32 %v858, %v862
    %866 = vrot.lane.b32.xlu0 %v864, 32
    %v867 = vpop.permute.xlu0 %866
    %v869 = vadd.f32 %v859, %v867
    %v870 = vtanh.pop %v869
    %872 = vrot.lane.b32.xlu0 %v870, 64
    %v873 = vpop.permute.xlu0 %872
    %v875 = vmul.f32 %v858, %v873
    %877 = vrot.lane.b32.xlu0 %v875, 32
    %v878 = vpop.permute.xlu0 %877
    %s880 = scalar_lea.vmem [#allocation16], 8
    %881 = vst.msk [vmem:[%s880] sm:$0xff] %vm332, %v878
    %s882 = scalar_lea.vmem [#allocation2], 16
    %v883 = vld [vmem:[%s882] sm:$0xff]
    %884 = vmatprep.subr.mxu0 0.0
    %885 = vmatpush1.msra.mxu0 %v150
    %886 = vmatprep.subr.mxu0 0.0
    %887 = vmatpush1.msra.mxu0 %v151
    %888 = vmatprep.subr.mxu0 0.0
    %889 = vmatpush1.msra.mxu0 %v152
    %890 = vmatprep.subr.mxu0 0.0
    %891 = vmatpush1.msra.mxu0 %v153
    %892 = vmatprep.subr.mxu0 0.0
    %893 = vmatpush1.msra.mxu0 0.0
    %894 = vmatprep.subr.mxu0 0.0
    %895 = vmatpush1.msra.mxu0 0.0
    %896 = vmatprep.subr.mxu0 0.0
    %897 = vmatpush1.msra.mxu0 0.0
    %898 = vmatprep.subr.mxu0 0.0
    %899 = vmatpush1.msra.mxu0 0.0
    %900 = vmatprep.subr.mxu0 0.0
    %901 = vmatpush1.msra.mxu0 0.0
    %902 = vmatprep.subr.mxu0 0.0
    %903 = vmatpush1.msra.mxu0 0.0
    %904 = vmatprep.subr.mxu0 0.0
    %905 = vmatpush1.msra.mxu0 0.0
    %906 = vmatprep.subr.mxu0 0.0
    %907 = vmatpush1.msra.mxu0 0.0
    %908 = vmatprep.subr.mxu0 0.0
    %909 = vmatpush1.msra.mxu0 0.0
    %910 = vmatprep.subr.mxu0 0.0
    %911 = vmatpush1.msra.mxu0 0.0
    %912 = vmatprep.subr.mxu0 0.0
    %913 = vmatpush1.msra.mxu0 0.0
    %914 = vmatprep.subr.mxu0 0.0
    %915 = vmatpush1.msra.mxu0 0.0
    %916 = vmatprep.subr.mxu0 0.0
    %917 = vmatpush1.msra.mxu0 0.0
    %918 = vmatprep.subr.mxu0 0.0
    %919 = vmatpush1.msra.mxu0 0.0
    %920 = vmatprep.subr.mxu0 0.0
    %921 = vmatpush1.msra.mxu0 0.0
    %922 = vmatprep.subr.mxu0 0.0
    %923 = vmatpush1.msra.mxu0 0.0
    %924 = vmatprep.subr.mxu0 0.0
    %925 = vmatpush1.msra.mxu0 0.0
    %926 = vmatprep.subr.mxu0 0.0
    %927 = vmatpush1.msra.mxu0 0.0
    %928 = vmatprep.subr.mxu0 0.0
    %929 = vmatpush1.msra.mxu0 0.0
    %930 = vmatprep.subr.mxu0 0.0
    %931 = vmatpush1.msra.mxu0 0.0
    %932 = vmatprep.subr.mxu0 0.0
    %933 = vmatpush1.msra.mxu0 0.0
    %934 = vmatprep.subr.mxu0 0.0
    %935 = vmatpush1.msra.mxu0 0.0
    %936 = vmatprep.subr.mxu0 0.0
    %937 = vmatpush1.msra.mxu0 0.0
    %938 = vmatprep.subr.mxu0 0.0
    %939 = vmatpush1.msra.mxu0 0.0
    %940 = vmatprep.subr.mxu0 0.0
    %941 = vmatpush1.msra.mxu0 0.0
    %942 = vmatprep.subr.mxu0 0.0
    %943 = vmatpush1.msra.mxu0 0.0
    %944 = vmatprep.subr.mxu0 0.0
    %945 = vmatpush1.msra.mxu0 0.0
    %946 = vmatprep.subr.mxu0 0.0
    %947 = vmatpush1.msra.mxu0 0.0
    %948 = vmatprep.mubr.f32.mxu0 0.0
    %949 = vmatmul.mubr.f32.gmra.mrb[0].mxu0 %v783
    %v950 = vpop.f32.mrb[0].mxu0
    %v951 = vadd.f32 0.0, %v950
    %v952 = vpop.f32.mrb[0].mxu0
    %953 = vdwg.mxu0
    %v954 = vadd.f32 %v883, %v951
    %v955 = vtanh.pop %v954
    %v956 = vmul.f32 %v955, 0.5
    %v957 = vadd.f32 %v956, 0.5
    %v958 = vmul.f32 %v957, %v701
    %960 = vrot.lane.b32.xlu0 %v955, 64
    %v961 = vpop.permute.xlu0 %960
    %v963 = vmul.f32 %v957, %v961
    %965 = vrot.lane.b32.xlu0 %v963, 32
    %v966 = vpop.permute.xlu0 %965
    %v968 = vadd.f32 %v958, %v966
    %v969 = vtanh.pop %v968
    %971 = vrot.lane.b32.xlu0 %v969, 64
    %v972 = vpop.permute.xlu0 %971
    %v974 = vmul.f32 %v957, %v972
    %v975 = vsel %vm332, %v878, 0
    %977 = vmatprep.subr.mxu0 0.0
    %978 = vmatpush1.msra.mxu0 %v158
    %979 = vmatprep.subr.mxu0 0.0
    %980 = vmatpush1.msra.mxu0 %v159
    %981 = vmatprep.subr.mxu0 0.0
    %982 = vmatpush1.msra.mxu0 %v160
    %983 = vmatprep.subr.mxu0 0.0
    %984 = vmatpush1.msra.mxu0 %v161
    %985 = vmatprep.subr.mxu0 0.0
    %986 = vmatpush1.msra.mxu0 0.0
    %987 = vmatprep.subr.mxu0 0.0
    %988 = vmatpush1.msra.mxu0 0.0
    %989 = vmatprep.subr.mxu0 0.0
    %990 = vmatpush1.msra.mxu0 0.0
    %991 = vmatprep.subr.mxu0 0.0
    %992 = vmatpush1.msra.mxu0 0.0
    %993 = vmatprep.subr.mxu0 0.0
    %994 = vmatpush1.msra.mxu0 0.0
    %995 = vmatprep.subr.mxu0 0.0
    %996 = vmatpush1.msra.mxu0 0.0
    %997 = vmatprep.subr.mxu0 0.0
    %998 = vmatpush1.msra.mxu0 0.0
    %999 = vmatprep.subr.mxu0 0.0
    %1000 = vmatpush1.msra.mxu0 0.0
    %1001 = vmatprep.subr.mxu0 0.0
    %1002 = vmatpush1.msra.mxu0 0.0
    %1003 = vmatprep.subr.mxu0 0.0
    %1004 = vmatpush1.msra.mxu0 0.0
    %1005 = vmatprep.subr.mxu0 0.0
    %1006 = vmatpush1.msra.mxu0 0.0
    %1007 = vmatprep.subr.mxu0 0.0
    %1008 = vmatpush1.msra.mxu0 0.0
    %1009 = vmatprep.subr.mxu0 0.0
    %1010 = vmatpush1.msra.mxu0 0.0
    %1011 = vmatprep.subr.mxu0 0.0
    %1012 = vmatpush1.msra.mxu0 0.0
    %1013 = vmatprep.subr.mxu0 0.0
    %1014 = vmatpush1.msra.mxu0 0.0
    %1015 = vmatprep.subr.mxu0 0.0
    %1016 = vmatpush1.msra.mxu0 0.0
    %1017 = vmatprep.subr.mxu0 0.0
    %1018 = vmatpush1.msra.mxu0 0.0
    %1019 = vmatprep.subr.mxu0 0.0
    %1020 = vmatpush1.msra.mxu0 0.0
    %1021 = vmatprep.subr.mxu0 0.0
    %1022 = vmatpush1.msra.mxu0 0.0
    %1023 = vmatprep.subr.mxu0 0.0
    %1024 = vmatpush1.msra.mxu0 0.0
    %1025 = vmatprep.subr.mxu0 0.0
    %1026 = vmatpush1.msra.mxu0 0.0
    %1027 = vmatprep.subr.mxu0 0.0
    %1028 = vmatpush1.msra.mxu0 0.0
    %1029 = vmatprep.subr.mxu0 0.0
    %1030 = vmatpush1.msra.mxu0 0.0
    %1031 = vmatprep.subr.mxu0 0.0
    %1032 = vmatpush1.msra.mxu0 0.0
    %1033 = vmatprep.subr.mxu0 0.0
    %1034 = vmatpush1.msra.mxu0 0.0
    %1035 = vmatprep.subr.mxu0 0.0
    %1036 = vmatpush1.msra.mxu0 0.0
    %1037 = vmatprep.subr.mxu0 0.0
    %1038 = vmatpush1.msra.mxu0 0.0
    %1039 = vmatprep.subr.mxu0 0.0
    %1040 = vmatpush1.msra.mxu0 0.0
    %1041 = vmatprep.mubr.f32.mxu0 0.0
    %1042 = vmatmul.mubr.f32.gmra.mrb[0].mxu0 %v975
    %v1043 = vpop.f32.mrb[0].mxu0
    %v1044 = vadd.f32 0.0, %v1043
    %v1045 = vpop.f32.mrb[0].mxu0
    %1046 = vdwg.mxu0
    %1048 = vrot.lane.b32.xlu0 %v974, 32
    %v1049 = vpop.permute.xlu0 %1048
    %v1050 = vsel %vm332, %v1049, 0
    %1052 = vmatprep.subr.mxu0 0.0
    %1053 = vmatpush1.msra.mxu0 %v154
    %1054 = vmatprep.subr.mxu0 0.0
    %1055 = vmatpush1.msra.mxu0 %v155
    %1056 = vmatprep.subr.mxu0 0.0
    %1057 = vmatpush1.msra.mxu0 %v156
    %1058 = vmatprep.subr.mxu0 0.0
    %1059 = vmatpush1.msra.mxu0 %v157
    %1060 = vmatprep.subr.mxu0 0.0
    %1061 = vmatpush1.msra.mxu0 0.0
    %1062 = vmatprep.subr.mxu0 0.0
    %1063 = vmatpush1.msra.mxu0 0.0
    %1064 = vmatprep.subr.mxu0 0.0
    %1065 = vmatpush1.msra.mxu0 0.0
    %1066 = vmatprep.subr.mxu0 0.0
    %1067 = vmatpush1.msra.mxu0 0.0
    %1068 = vmatprep.subr.mxu0 0.0
    %1069 = vmatpush1.msra.mxu0 0.0
    %1070 = vmatprep.subr.mxu0 0.0
    %1071 = vmatpush1.msra.mxu0 0.0
    %1072 = vmatprep.subr.mxu0 0.0
    %1073 = vmatpush1.msra.mxu0 0.0
    %1074 = vmatprep.subr.mxu0 0.0
    %1075 = vmatpush1.msra.mxu0 0.0
    %1076 = vmatprep.subr.mxu0 0.0
    %1077 = vmatpush1.msra.mxu0 0.0
    %1078 = vmatprep.subr.mxu0 0.0
    %1079 = vmatpush1.msra.mxu0 0.0
    %1080 = vmatprep.subr.mxu0 0.0
    %1081 = vmatpush1.msra.mxu0 0.0
    %1082 = vmatprep.subr.mxu0 0.0
    %1083 = vmatpush1.msra.mxu0 0.0
    %1084 = vmatprep.subr.mxu0 0.0
    %1085 = vmatpush1.msra.mxu0 0.0
    %1086 = vmatprep.subr.mxu0 0.0
    %1087 = vmatpush1.msra.mxu0 0.0
    %1088 = vmatprep.subr.mxu0 0.0
    %1089 = vmatpush1.msra.mxu0 0.0
    %1090 = vmatprep.subr.mxu0 0.0
    %1091 = vmatpush1.msra.mxu0 0.0
    %1092 = vmatprep.subr.mxu0 0.0
    %1093 = vmatpush1.msra.mxu0 0.0
    %1094 = vmatprep.subr.mxu0 0.0
    %1095 = vmatpush1.msra.mxu0 0.0
    %1096 = vmatprep.subr.mxu0 0.0
    %1097 = vmatpush1.msra.mxu0 0.0
    %1098 = vmatprep.subr.mxu0 0.0
    %1099 = vmatpush1.msra.mxu0 0.0
    %1100 = vmatprep.subr.mxu0 0.0
    %1101 = vmatpush1.msra.mxu0 0.0
    %1102 = vmatprep.subr.mxu0 0.0
    %1103 = vmatpush1.msra.mxu0 0.0
    %1104 = vmatprep.subr.mxu0 0.0
    %1105 = vmatpush1.msra.mxu0 0.0
    %1106 = vmatprep.subr.mxu0 0.0
    %1107 = vmatpush1.msra.mxu0 0.0
    %1108 = vmatprep.subr.mxu0 0.0
    %1109 = vmatpush1.msra.mxu0 0.0
    %1110 = vmatprep.subr.mxu0 0.0
    %1111 = vmatpush1.msra.mxu0 0.0
    %1112 = vmatprep.subr.mxu0 0.0
    %1113 = vmatpush1.msra.mxu0 0.0
    %1114 = vmatprep.subr.mxu0 0.0
    %1115 = vmatpush1.msra.mxu0 0.0
    %1116 = vmatprep.mubr.f32.mxu0 0.0
    %1117 = vmatmul.mubr.f32.gmra.mrb[0].mxu0 %v1050
    %v1118 = vpop.f32.mrb[0].mxu0
    %v1119 = vadd.f32 %v1044, %v1118
    %v1120 = vpop.f32.mrb[0].mxu0
    %1121 = vdwg.mxu0
    %v1122 = vadd.f32 %v1119, %v583
    %v1123 = vtanh.pop %v1122
    %v1124 = vmul.f32 %v1123, 0.5
    %v1125 = vadd.f32 %v1124, 0.5
    %v1126 = vmul.f32 %v1125, %v869
    %1128 = vrot.lane.b32.xlu0 %v1123, 64
    %v1129 = vpop.permute.xlu0 %1128
    %v1131 = vmul.f32 %v1125, %v1129
    %1133 = vrot.lane.b32.xlu0 %v1131, 32
    %v1134 = vpop.permute.xlu0 %1133
    %v1136 = vadd.f32 %v1126, %v1134
    %v1137 = vtanh.pop %v1136
    %1139 = vrot.lane.b32.xlu0 %v1137, 64
    %v1140 = vpop.permute.xlu0 %1139
    %v1142 = vmul.f32 %v1125, %v1140
    %1144 = vrot.lane.b32.xlu0 %v1142, 32
    %v1145 = vpop.permute.xlu0 %1144
    %s1147 = scalar_lea.vmem [#allocation16], 16
    %1148 = vst.msk [vmem:[%s1147] sm:$0xff] %vm332, %v1145
    %s1149 = scalar_lea.vmem [#allocation2], 24
    %v1150 = vld [vmem:[%s1149] sm:$0xff]
    %1151 = vmatprep.subr.mxu0 0.0
    %1152 = vmatpush1.msra.mxu0 %v150
    %1153 = vmatprep.subr.mxu0 0.0
    %1154 = vmatpush1.msra.mxu0 %v151
    %1155 = vmatprep.subr.mxu0 0.0
    %1156 = vmatpush1.msra.mxu0 %v152
    %1157 = vmatprep.subr.mxu0 0.0
    %1158 = vmatpush1.msra.mxu0 %v153
    %1159 = vmatprep.subr.mxu0 0.0
    %1160 = vmatpush1.msra.mxu0 0.0
    %1161 = vmatprep.subr.mxu0 0.0
    %1162 = vmatpush1.msra.mxu0 0.0
    %1163 = vmatprep.subr.mxu0 0.0
    %1164 = vmatpush1.msra.mxu0 0.0
    %1165 = vmatprep.subr.mxu0 0.0
    %1166 = vmatpush1.msra.mxu0 0.0
    %1167 = vmatprep.subr.mxu0 0.0
    %1168 = vmatpush1.msra.mxu0 0.0
    %1169 = vmatprep.subr.mxu0 0.0
    %1170 = vmatpush1.msra.mxu0 0.0
    %1171 = vmatprep.subr.mxu0 0.0
    %1172 = vmatpush1.msra.mxu0 0.0
    %1173 = vmatprep.subr.mxu0 0.0
    %1174 = vmatpush1.msra.mxu0 0.0
    %1175 = vmatprep.subr.mxu0 0.0
    %1176 = vmatpush1.msra.mxu0 0.0
    %1177 = vmatprep.subr.mxu0 0.0
    %1178 = vmatpush1.msra.mxu0 0.0
    %1179 = vmatprep.subr.mxu0 0.0
    %1180 = vmatpush1.msra.mxu0 0.0
    %1181 = vmatprep.subr.mxu0 0.0
    %1182 = vmatpush1.msra.mxu0 0.0
    %1183 = vmatprep.subr.mxu0 0.0
    %1184 = vmatpush1.msra.mxu0 0.0
    %1185 = vmatprep.subr.mxu0 0.0
    %1186 = vmatpush1.msra.mxu0 0.0
    %1187 = vmatprep.subr.mxu0 0.0
    %1188 = vmatpush1.msra.mxu0 0.0
    %1189 = vmatprep.subr.mxu0 0.0
    %1190 = vmatpush1.msra.mxu0 0.0
    %1191 = vmatprep.subr.mxu0 0.0
    %1192 = vmatpush1.msra.mxu0 0.0
    %1193 = vmatprep.subr.mxu0 0.0
    %1194 = vmatpush1.msra.mxu0 0.0
    %1195 = vmatprep.subr.mxu0 0.0
    %1196 = vmatpush1.msra.mxu0 0.0
    %1197 = vmatprep.subr.mxu0 0.0
    %1198 = vmatpush1.msra.mxu0 0.0
    %1199 = vmatprep.subr.mxu0 0.0
    %1200 = vmatpush1.msra.mxu0 0.0
    %1201 = vmatprep.subr.mxu0 0.0
    %1202 = vmatpush1.msra.mxu0 0.0
    %1203 = vmatprep.subr.mxu0 0.0
    %1204 = vmatpush1.msra.mxu0 0.0
    %1205 = vmatprep.subr.mxu0 0.0
    %1206 = vmatpush1.msra.mxu0 0.0
    %1207 = vmatprep.subr.mxu0 0.0
    %1208 = vmatpush1.msra.mxu0 0.0
    %1209 = vmatprep.subr.mxu0 0.0
    %1210 = vmatpush1.msra.mxu0 0.0
    %1211 = vmatprep.subr.mxu0 0.0
    %1212 = vmatpush1.msra.mxu0 0.0
    %1213 = vmatprep.subr.mxu0 0.0
    %1214 = vmatpush1.msra.mxu0 0.0
    %1215 = vmatprep.mubr.f32.mxu0 0.0
    %1216 = vmatmul.mubr.f32.gmra.mrb[0].mxu0 %v1050
    %v1217 = vpop.f32.mrb[0].mxu0
    %v1218 = vadd.f32 0.0, %v1217
    %v1219 = vpop.f32.mrb[0].mxu0
    %1220 = vdwg.mxu0
    %v1221 = vadd.f32 %v1150, %v1218
    %v1222 = vtanh.pop %v1221
    %v1223 = vmul.f32 %v1222, 0.5
    %v1224 = vadd.f32 %v1223, 0.5
    %v1225 = vmul.f32 %v1224, %v968
    %1227 = vrot.lane.b32.xlu0 %v1222, 64
    %v1228 = vpop.permute.xlu0 %1227
    %v1230 = vmul.f32 %v1224, %v1228
    %1232 = vrot.lane.b32.xlu0 %v1230, 32
    %v1233 = vpop.permute.xlu0 %1232
    %v1235 = vadd.f32 %v1225, %v1233
    %v1236 = vtanh.pop %v1235
    %1238 = vrot.lane.b32.xlu0 %v1236, 64
    %v1239 = vpop.permute.xlu0 %1238
    %v1241 = vmul.f32 %v1224, %v1239
    %v1242 = vsel %vm332, %v1145, 0
    %1244 = vmatprep.subr.mxu0 0.0
    %1245 = vmatpush1.msra.mxu0 %v158
    %1246 = vmatprep.subr.mxu0 0.0
    %1247 = vmatpush1.msra.mxu0 %v159
    %1248 = vmatprep.subr.mxu0 0.0
    %1249 = vmatpush1.msra.mxu0 %v160
    %1250 = vmatprep.subr.mxu0 0.0
    %1251 = vmatpush1.msra.mxu0 %v161
    %1252 = vmatprep.subr.mxu0 0.0
    %1253 = vmatpush1.msra.mxu0 0.0
    %1254 = vmatprep.subr.mxu0 0.0
    %1255 = vmatpush1.msra.mxu0 0.0
    %1256 = vmatprep.subr.mxu0 0.0
    %1257 = vmatpush1.msra.mxu0 0.0
    %1258 = vmatprep.subr.mxu0 0.0
    %1259 = vmatpush1.msra.mxu0 0.0
    %1260 = vmatprep.subr.mxu0 0.0
    %1261 = vmatpush1.msra.mxu0 0.0
    %1262 = vmatprep.subr.mxu0 0.0
    %1263 = vmatpush1.msra.mxu0 0.0
    %1264 = vmatprep.subr.mxu0 0.0
    %1265 = vmatpush1.msra.mxu0 0.0
    %1266 = vmatprep.subr.mxu0 0.0
    %1267 = vmatpush1.msra.mxu0 0.0
    %1268 = vmatprep.subr.mxu0 0.0
    %1269 = vmatpush1.msra.mxu0 0.0
    %1270 = vmatprep.subr.mxu0 0.0
    %1271 = vmatpush1.msra.mxu0 0.0
    %1272 = vmatprep.subr.mxu0 0.0
    %1273 = vmatpush1.msra.mxu0 0.0
    %1274 = vmatprep.subr.mxu0 0.0
    %1275 = vmatpush1.msra.mxu0 0.0
    %1276 = vmatprep.subr.mxu0 0.0
    %1277 = vmatpush1.msra.mxu0 0.0
    %1278 = vmatprep.subr.mxu0 0.0
    %1279 = vmatpush1.msra.mxu0 0.0
    %1280 = vmatprep.subr.mxu0 0.0
    %1281 = vmatpush1.msra.mxu0 0.0
    %1282 = vmatprep.subr.mxu0 0.0
    %1283 = vmatpush1.msra.mxu0 0.0
    %1284 = vmatprep.subr.mxu0 0.0
    %1285 = vmatpush1.msra.mxu0 0.0
    %1286 = vmatprep.subr.mxu0 0.0
    %1287 = vmatpush1.msra.mxu0 0.0
    %1288 = vmatprep.subr.mxu0 0.0
    %1289 = vmatpush1.msra.mxu0 0.0
    %1290 = vmatprep.subr.mxu0 0.0
    %1291 = vmatpush1.msra.mxu0 0.0
    %1292 = vmatprep.subr.mxu0 0.0
    %1293 = vmatpush1.msra.mxu0 0.0
    %1294 = vmatprep.subr.mxu0 0.0
    %1295 = vmatpush1.msra.mxu0 0.0
    %1296 = vmatprep.subr.mxu0 0.0
    %1297 = vmatpush1.msra.mxu0 0.0
    %1298 = vmatprep.subr.mxu0 0.0
    %1299 = vmatpush1.msra.mxu0 0.0
    %1300 = vmatprep.subr.mxu0 0.0
    %1301 = vmatpush1.msra.mxu0 0.0
    %1302 = vmatprep.subr.mxu0 0.0
    %1303 = vmatpush1.msra.mxu0 0.0
    %1304 = vmatprep.subr.mxu0 0.0
    %1305 = vmatpush1.msra.mxu0 0.0
    %1306 = vmatprep.subr.mxu0 0.0
    %1307 = vmatpush1.msra.mxu0 0.0
    %1308 = vmatprep.mubr.f32.mxu0 0.0
    %1309 = vmatmul.mubr.f32.gmra.mrb[0].mxu0 %v1242
    %v1310 = vpop.f32.mrb[0].mxu0
    %v1311 = vadd.f32 0.0, %v1310
    %v1312 = vpop.f32.mrb[0].mxu0
    %1313 = vdwg.mxu0
    %1315 = vrot.lane.b32.xlu0 %v1241, 32
    %v1316 = vpop.permute.xlu0 %1315
    %v1317 = vsel %vm332, %v1316, 0
    %1319 = vmatprep.subr.mxu0 0.0
    %1320 = vmatpush1.msra.mxu0 %v154
    %1321 = vmatprep.subr.mxu0 0.0
    %1322 = vmatpush1.msra.mxu0 %v155
    %1323 = vmatprep.subr.mxu0 0.0
    %1324 = vmatpush1.msra.mxu0 %v156
    %1325 = vmatprep.subr.mxu0 0.0
    %1326 = vmatpush1.msra.mxu0 %v157
    %1327 = vmatprep.subr.mxu0 0.0
    %1328 = vmatpush1.msra.mxu0 0.0
    %1329 = vmatprep.subr.mxu0 0.0
    %1330 = vmatpush1.msra.mxu0 0.0
    %1331 = vmatprep.subr.mxu0 0.0
    %1332 = vmatpush1.msra.mxu0 0.0
    %1333 = vmatprep.subr.mxu0 0.0
    %1334 = vmatpush1.msra.mxu0 0.0
    %1335 = vmatprep.subr.mxu0 0.0
    %1336 = vmatpush1.msra.mxu0 0.0
    %1337 = vmatprep.subr.mxu0 0.0
    %1338 = vmatpush1.msra.mxu0 0.0
    %1339 = vmatprep.subr.mxu0 0.0
    %1340 = vmatpush1.msra.mxu0 0.0
    %1341 = vmatprep.subr.mxu0 0.0
    %1342 = vmatpush1.msra.mxu0 0.0
    %1343 = vmatprep.subr.mxu0 0.0
    %1344 = vmatpush1.msra.mxu0 0.0
    %1345 = vmatprep.subr.mxu0 0.0
    %1346 = vmatpush1.msra.mxu0 0.0
    %1347 = vmatprep.subr.mxu0 0.0
    %1348 = vmatpush1.msra.mxu0 0.0
    %1349 = vmatprep.subr.mxu0 0.0
    %1350 = vmatpush1.msra.mxu0 0.0
    %1351 = vmatprep.subr.mxu0 0.0
    %1352 = vmatpush1.msra.mxu0 0.0
    %1353 = vmatprep.subr.mxu0 0.0
    %1354 = vmatpush1.msra.mxu0 0.0
    %1355 = vmatprep.subr.mxu0 0.0
    %1356 = vmatpush1.msra.mxu0 0.0
    %1357 = vmatprep.subr.mxu0 0.0
    %1358 = vmatpush1.msra.mxu0 0.0
    %1359 = vmatprep.subr.mxu0 0.0
    %1360 = vmatpush1.msra.mxu0 0.0
    %1361 = vmatprep.subr.mxu0 0.0
    %1362 = vmatpush1.msra.mxu0 0.0
    %1363 = vmatprep.subr.mxu0 0.0
    %1364 = vmatpush1.msra.mxu0 0.0
    %1365 = vmatprep.subr.mxu0 0.0
    %1366 = vmatpush1.msra.mxu0 0.0
    %1367 = vmatprep.subr.mxu0 0.0
    %1368 = vmatpush1.msra.mxu0 0.0
    %1369 = vmatprep.subr.mxu0 0.0
    %1370 = vmatpush1.msra.mxu0 0.0
    %1371 = vmatprep.subr.mxu0 0.0
    %1372 = vmatpush1.msra.mxu0 0.0
    %1373 = vmatprep.subr.mxu0 0.0
    %1374 = vmatpush1.msra.mxu0 0.0
    %1375 = vmatprep.subr.mxu0 0.0
    %1376 = vmatpush1.msra.mxu0 0.0
    %1377 = vmatprep.subr.mxu0 0.0
    %1378 = vmatpush1.msra.mxu0 0.0
    %1379 = vmatprep.subr.mxu0 0.0
    %1380 = vmatpush1.msra.mxu0 0.0
    %1381 = vmatprep.subr.mxu0 0.0
    %1382 = vmatpush1.msra.mxu0 0.0
    %1383 = vmatprep.mubr.f32.mxu0 0.0
    %1384 = vmatmul.mubr.f32.gmra.mrb[0].mxu0 %v1317
    %v1385 = vpop.f32.mrb[0].mxu0
    %v1386 = vadd.f32 %v1311, %v1385
    %v1387 = vpop.f32.mrb[0].mxu0
    %1388 = vdwg.mxu0
    %v1389 = vadd.f32 %v1386, %v583
    %v1390 = vtanh.pop %v1389
    %v1391 = vmul.f32 %v1390, 0.5
    %v1392 = vadd.f32 %v1391, 0.5
    %v1393 = vmul.f32 %v1392, %v1136
    %1395 = vrot.lane.b32.xlu0 %v1390, 64
    %v1396 = vpop.permute.xlu0 %1395
    %v1398 = vmul.f32 %v1392, %v1396
    %1400 = vrot.lane.b32.xlu0 %v1398, 32
    %v1401 = vpop.permute.xlu0 %1400
    %v1403 = vadd.f32 %v1393, %v1401
    %v1404 = vtanh.pop %v1403
    %1406 = vrot.lane.b32.xlu0 %v1404, 64
    %v1407 = vpop.permute.xlu0 %1406
    %v1409 = vmul.f32 %v1392, %v1407
    %1411 = vrot.lane.b32.xlu0 %v1409, 32
    %v1412 = vpop.permute.xlu0 %1411
    %s1414 = scalar_lea.vmem [#allocation16], 24
    %1415 = vst.msk [vmem:[%s1414] sm:$0xff] %vm332, %v1412
    %s1416 = scalar_lea.vmem [#allocation2], 32
    %v1417 = vld [vmem:[%s1416] sm:$0xff]
    %1418 = vmatprep.subr.mxu0 0.0
    %1419 = vmatpush1.msra.mxu0 %v150
    %1420 = vmatprep.subr.mxu0 0.0
    %1421 = vmatpush1.msra.mxu0 %v151
    %1422 = vmatprep.subr.mxu0 0.0
    %1423 = vmatpush1.msra.mxu0 %v152
    %1424 = vmatprep.subr.mxu0 0.0
    %1425 = vmatpush1.msra.mxu0 %v153
    %1426 = vmatprep.subr.mxu0 0.0
    %1427 = vmatpush1.msra.mxu0 0.0
    %1428 = vmatprep.subr.mxu0 0.0
    %1429 = vmatpush1.msra.mxu0 0.0
    %1430 = vmatprep.subr.mxu0 0.0
    %1431 = vmatpush1.msra.mxu0 0.0
    %1432 = vmatprep.subr.mxu0 0.0
    %1433 = vmatpush1.msra.mxu0 0.0
    %1434 = vmatprep.subr.mxu0 0.0
    %1435 = vmatpush1.msra.mxu0 0.0
    %1436 = vmatprep.subr.mxu0 0.0
    %1437 = vmatpush1.msra.mxu0 0.0
    %1438 = vmatprep.subr.mxu0 0.0
    %1439 = vmatpush1.msra.mxu0 0.0
    %1440 = vmatprep.subr.mxu0 0.0
    %1441 = vmatpush1.msra.mxu0 0.0
    %1442 = vmatprep.subr.mxu0 0.0
    %1443 = vmatpush1.msra.mxu0 0.0
    %1444 = vmatprep.subr.mxu0 0.0
    %1445 = vmatpush1.msra.mxu0 0.0
    %1446 = vmatprep.subr.mxu0 0.0
    %1447 = vmatpush1.msra.mxu0 0.0
    %1448 = vmatprep.subr.mxu0 0.0
    %1449 = vmatpush1.msra.mxu0 0.0
    %1450 = vmatprep.subr.mxu0 0.0
    %1451 = vmatpush1.msra.mxu0 0.0
    %1452 = vmatprep.subr.mxu0 0.0
    %1453 = vmatpush1.msra.mxu0 0.0
    %1454 = vmatprep.subr.mxu0 0.0
    %1455 = vmatpush1.msra.mxu0 0.0
    %1456 = vmatprep.subr.mxu0 0.0
    %1457 = vmatpush1.msra.mxu0 0.0
    %1458 = vmatprep.subr.mxu0 0.0
    %1459 = vmatpush1.msra.mxu0 0.0
    %1460 = vmatprep.subr.mxu0 0.0
    %1461 = vmatpush1.msra.mxu0 0.0
    %1462 = vmatprep.subr.mxu0 0.0
    %1463 = vmatpush1.msra.mxu0 0.0
    %1464 = vmatprep.subr.mxu0 0.0
    %1465 = vmatpush1.msra.mxu0 0.0
    %1466 = vmatprep.subr.mxu0 0.0
    %1467 = vmatpush1.msra.mxu0 0.0
    %1468 = vmatprep.subr.mxu0 0.0
    %1469 = vmatpush1.msra.mxu0 0.0
    %1470 = vmatprep.subr.mxu0 0.0
    %1471 = vmatpush1.msra.mxu0 0.0
    %1472 = vmatprep.subr.mxu0 0.0
    %1473 = vmatpush1.msra.mxu0 0.0
    %1474 = vmatprep.subr.mxu0 0.0
    %1475 = vmatpush1.msra.mxu0 0.0
    %1476 = vmatprep.subr.mxu0 0.0
    %1477 = vmatpush1.msra.mxu0 0.0
    %1478 = vmatprep.subr.mxu0 0.0
    %1479 = vmatpush1.msra.mxu0 0.0
    %1480 = vmatprep.subr.mxu0 0.0
    %1481 = vmatpush1.msra.mxu0 0.0
    %1482 = vmatprep.mubr.f32.mxu0 0.0
    %1483 = vmatmul.mubr.f32.gmra.mrb[0].mxu0 %v1317
    %v1484 = vpop.f32.mrb[0].mxu0
    %v1485 = vadd.f32 0.0, %v1484
    %v1486 = vpop.f32.mrb[0].mxu0
    %1487 = vdwg.mxu0
    %v1488 = vadd.f32 %v1417, %v1485
    %v1489 = vtanh.pop %v1488
    %v1490 = vmul.f32 %v1489, 0.5
    %v1491 = vadd.f32 %v1490, 0.5
    %v1492 = vmul.f32 %v1491, %v1235
    %1494 = vrot.lane.b32.xlu0 %v1489, 64
    %v1495 = vpop.permute.xlu0 %1494
    %v1497 = vmul.f32 %v1491, %v1495
    %1499 = vrot.lane.b32.xlu0 %v1497, 32
    %v1500 = vpop.permute.xlu0 %1499
    %v1502 = vadd.f32 %v1492, %v1500
    %v1503 = vtanh.pop %v1502
    %1505 = vrot.lane.b32.xlu0 %v1503, 64
    %v1506 = vpop.permute.xlu0 %1505
    %v1508 = vmul.f32 %v1491, %v1506
    %v1509 = vsel %vm332, %v1412, 0
    %1511 = vmatprep.subr.mxu0 0.0
    %1512 = vmatpush1.msra.mxu0 %v158
    %1513 = vmatprep.subr.mxu0 0.0
    %1514 = vmatpush1.msra.mxu0 %v159
    %1515 = vmatprep.subr.mxu0 0.0
    %1516 = vmatpush1.msra.mxu0 %v160
    %1517 = vmatprep.subr.mxu0 0.0
    %1518 = vmatpush1.msra.mxu0 %v161
    %1519 = vmatprep.subr.mxu0 0.0
    %1520 = vmatpush1.msra.mxu0 0.0
    %1521 = vmatprep.subr.mxu0 0.0
    %1522 = vmatpush1.msra.mxu0 0.0
    %1523 = vmatprep.subr.mxu0 0.0
    %1524 = vmatpush1.msra.mxu0 0.0
    %1525 = vmatprep.subr.mxu0 0.0
    %1526 = vmatpush1.msra.mxu0 0.0
    %1527 = vmatprep.subr.mxu0 0.0
    %1528 = vmatpush1.msra.mxu0 0.0
    %1529 = vmatprep.subr.mxu0 0.0
    %1530 = vmatpush1.msra.mxu0 0.0
    %1531 = vmatprep.subr.mxu0 0.0
    %1532 = vmatpush1.msra.mxu0 0.0
    %1533 = vmatprep.subr.mxu0 0.0
    %1534 = vmatpush1.msra.mxu0 0.0
    %1535 = vmatprep.subr.mxu0 0.0
    %1536 = vmatpush1.msra.mxu0 0.0
    %1537 = vmatprep.subr.mxu0 0.0
    %1538 = vmatpush1.msra.mxu0 0.0
    %1539 = vmatprep.subr.mxu0 0.0
    %1540 = vmatpush1.msra.mxu0 0.0
    %1541 = vmatprep.subr.mxu0 0.0
    %1542 = vmatpush1.msra.mxu0 0.0
    %1543 = vmatprep.subr.mxu0 0.0
    %1544 = vmatpush1.msra.mxu0 0.0
    %1545 = vmatprep.subr.mxu0 0.0
    %1546 = vmatpush1.msra.mxu0 0.0
    %1547 = vmatprep.subr.mxu0 0.0
    %1548 = vmatpush1.msra.mxu0 0.0
    %1549 = vmatprep.subr.mxu0 0.0
    %1550 = vmatpush1.msra.mxu0 0.0
    %1551 = vmatprep.subr.mxu0 0.0
    %1552 = vmatpush1.msra.mxu0 0.0
    %1553 = vmatprep.subr.mxu0 0.0
    %1554 = vmatpush1.msra.mxu0 0.0
    %1555 = vmatprep.subr.mxu0 0.0
    %1556 = vmatpush1.msra.mxu0 0.0
    %1557 = vmatprep.subr.mxu0 0.0
    %1558 = vmatpush1.msra.mxu0 0.0
    %1559 = vmatprep.subr.mxu0 0.0
    %1560 = vmatpush1.msra.mxu0 0.0
    %1561 = vmatprep.subr.mxu0 0.0
    %1562 = vmatpush1.msra.mxu0 0.0
    %1563 = vmatprep.subr.mxu0 0.0
    %1564 = vmatpush1.msra.mxu0 0.0
    %1565 = vmatprep.subr.mxu0 0.0
    %1566 = vmatpush1.msra.mxu0 0.0
    %1567 = vmatprep.subr.mxu0 0.0
    %1568 = vmatpush1.msra.mxu0 0.0
    %1569 = vmatprep.subr.mxu0 0.0
    %1570 = vmatpush1.msra.mxu0 0.0
    %1571 = vmatprep.subr.mxu0 0.0
    %1572 = vmatpush1.msra.mxu0 0.0
    %1573 = vmatprep.subr.mxu0 0.0
    %1574 = vmatpush1.msra.mxu0 0.0
    %1575 = vmatprep.mubr.f32.mxu0 0.0
    %1576 = vmatmul.mubr.f32.gmra.mrb[0].mxu0 %v1509
    %v1577 = vpop.f32.mrb[0].mxu0
    %v1578 = vadd.f32 0.0, %v1577
    %v1579 = vpop.f32.mrb[0].mxu0
    %1580 = vdwg.mxu0
    %1582 = vrot.lane.b32.xlu0 %v1508, 32
    %v1583 = vpop.permute.xlu0 %1582
    %v1584 = vsel %vm332, %v1583, 0
    %1586 = vmatprep.subr.mxu0 0.0
    %1587 = vmatpush1.msra.mxu0 %v154
    %1588 = vmatprep.subr.mxu0 0.0
    %1589 = vmatpush1.msra.mxu0 %v155
    %1590 = vmatprep.subr.mxu0 0.0
    %1591 = vmatpush1.msra.mxu0 %v156
    %1592 = vmatprep.subr.mxu0 0.0
    %1593 = vmatpush1.msra.mxu0 %v157
    %1594 = vmatprep.subr.mxu0 0.0
    %1595 = vmatpush1.msra.mxu0 0.0
    %1596 = vmatprep.subr.mxu0 0.0
    %1597 = vmatpush1.msra.mxu0 0.0
    %1598 = vmatprep.subr.mxu0 0.0
    %1599 = vmatpush1.msra.mxu0 0.0
    %1600 = vmatprep.subr.mxu0 0.0
    %1601 = vmatpush1.msra.mxu0 0.0
    %1602 = vmatprep.subr.mxu0 0.0
    %1603 = vmatpush1.msra.mxu0 0.0
    %1604 = vmatprep.subr.mxu0 0.0
    %1605 = vmatpush1.msra.mxu0 0.0
    %1606 = vmatprep.subr.mxu0 0.0
    %1607 = vmatpush1.msra.mxu0 0.0
    %1608 = vmatprep.subr.mxu0 0.0
    %1609 = vmatpush1.msra.mxu0 0.0
    %1610 = vmatprep.subr.mxu0 0.0
    %1611 = vmatpush1.msra.mxu0 0.0
    %1612 = vmatprep.subr.mxu0 0.0
    %1613 = vmatpush1.msra.mxu0 0.0
    %1614 = vmatprep.subr.mxu0 0.0
    %1615 = vmatpush1.msra.mxu0 0.0
    %1616 = vmatprep.subr.mxu0 0.0
    %1617 = vmatpush1.msra.mxu0 0.0
    %1618 = vmatprep.subr.mxu0 0.0
    %1619 = vmatpush1.msra.mxu0 0.0
    %1620 = vmatprep.subr.mxu0 0.0
    %1621 = vmatpush1.msra.mxu0 0.0
    %1622 = vmatprep.subr.mxu0 0.0
    %1623 = vmatpush1.msra.mxu0 0.0
    %1624 = vmatprep.subr.mxu0 0.0
    %1625 = vmatpush1.msra.mxu0 0.0
    %1626 = vmatprep.subr.mxu0 0.0
    %1627 = vmatpush1.msra.mxu0 0.0
    %1628 = vmatprep.subr.mxu0 0.0
    %1629 = vmatpush1.msra.mxu0 0.0
    %1630 = vmatprep.subr.mxu0 0.0
    %1631 = vmatpush1.msra.mxu0 0.0
    %1632 = vmatprep.subr.mxu0 0.0
    %1633 = vmatpush1.msra.mxu0 0.0
    %1634 = vmatprep.subr.mxu0 0.0
    %1635 = vmatpush1.msra.mxu0 0.0
    %1636 = vmatprep.subr.mxu0 0.0
    %1637 = vmatpush1.msra.mxu0 0.0
    %1638 = vmatprep.subr.mxu0 0.0
    %1639 = vmatpush1.msra.mxu0 0.0
    %1640 = vmatprep.subr.mxu0 0.0
    %1641 = vmatpush1.msra.mxu0 0.0
    %1642 = vmatprep.subr.mxu0 0.0
    %1643 = vmatpush1.msra.mxu0 0.0
    %1644 = vmatprep.subr.mxu0 0.0
    %1645 = vmatpush1.msra.mxu0 0.0
    %1646 = vmatprep.subr.mxu0 0.0
    %1647 = vmatpush1.msra.mxu0 0.0
    %1648 = vmatprep.subr.mxu0 0.0
    %1649 = vmatpush1.msra.mxu0 0.0
    %1650 = vmatprep.mubr.f32.mxu0 0.0
    %1651 = vmatmul.mubr.f32.gmra.mrb[0].mxu0 %v1584
    %v1652 = vpop.f32.mrb[0].mxu0
    %v1653 = vadd.f32 %v1578, %v1652
    %v1654 = vpop.f32.mrb[0].mxu0
    %1655 = vdwg.mxu0
    %v1656 = vadd.f32 %v1653, %v583
    %v1657 = vtanh.pop %v1656
    %v1658 = vmul.f32 %v1657, 0.5
    %v1659 = vadd.f32 %v1658, 0.5
    %v1660 = vmul.f32 %v1659, %v1403
    %1662 = vrot.lane.b32.xlu0 %v1657, 64
    %v1663 = vpop.permute.xlu0 %1662
    %v1665 = vmul.f32 %v1659, %v1663
    %1667 = vrot.lane.b32.xlu0 %v1665, 32
    %v1668 = vpop.permute.xlu0 %1667
    %v1670 = vadd.f32 %v1660, %v1668
    %v1671 = vtanh.pop %v1670
    %1673 = vrot.lane.b32.xlu0 %v1671, 64
    %v1674 = vpop.permute.xlu0 %1673
    %v1676 = vmul.f32 %v1659, %v1674
    %1678 = vrot.lane.b32.xlu0 %v1676, 32
    %v1679 = vpop.permute.xlu0 %1678
    %s1681 = scalar_lea.vmem [#allocation16], 32
    %1682 = vst.msk [vmem:[%s1681] sm:$0xff] %vm332, %v1679
    %s1683 = scalar_lea.vmem [#allocation2], 40
    %v1684 = vld [vmem:[%s1683] sm:$0xff]
    %1685 = vmatprep.subr.mxu0 0.0
    %1686 = vmatpush1.msra.mxu0 %v150
    %1687 = vmatprep.subr.mxu0 0.0
    %1688 = vmatpush1.msra.mxu0 %v151
    %1689 = vmatprep.subr.mxu0 0.0
    %1690 = vmatpush1.msra.mxu0 %v152
    %1691 = vmatprep.subr.mxu0 0.0
    %1692 = vmatpush1.msra.mxu0 %v153
    %1693 = vmatprep.subr.mxu0 0.0
    %1694 = vmatpush1.msra.mxu0 0.0
    %1695 = vmatprep.subr.mxu0 0.0
    %1696 = vmatpush1.msra.mxu0 0.0
    %1697 = vmatprep.subr.mxu0 0.0
    %1698 = vmatpush1.msra.mxu0 0.0
    %1699 = vmatprep.subr.mxu0 0.0
    %1700 = vmatpush1.msra.mxu0 0.0
    %1701 = vmatprep.subr.mxu0 0.0
    %1702 = vmatpush1.msra.mxu0 0.0
    %1703 = vmatprep.subr.mxu0 0.0
    %1704 = vmatpush1.msra.mxu0 0.0
    %1705 = vmatprep.subr.mxu0 0.0
    %1706 = vmatpush1.msra.mxu0 0.0
    %1707 = vmatprep.subr.mxu0 0.0
    %1708 = vmatpush1.msra.mxu0 0.0
    %1709 = vmatprep.subr.mxu0 0.0
    %1710 = vmatpush1.msra.mxu0 0.0
    %1711 = vmatprep.subr.mxu0 0.0
    %1712 = vmatpush1.msra.mxu0 0.0
    %1713 = vmatprep.subr.mxu0 0.0
    %1714 = vmatpush1.msra.mxu0 0.0
    %1715 = vmatprep.subr.mxu0 0.0
    %1716 = vmatpush1.msra.mxu0 0.0
    %1717 = vmatprep.subr.mxu0 0.0
    %1718 = vmatpush1.msra.mxu0 0.0
    %1719 = vmatprep.subr.mxu0 0.0
    %1720 = vmatpush1.msra.mxu0 0.0
    %1721 = vmatprep.subr.mxu0 0.0
    %1722 = vmatpush1.msra.mxu0 0.0
    %1723 = vmatprep.subr.mxu0 0.0
    %1724 = vmatpush1.msra.mxu0 0.0
    %1725 = vmatprep.subr.mxu0 0.0
    %1726 = vmatpush1.msra.mxu0 0.0
    %1727 = vmatprep.subr.mxu0 0.0
    %1728 = vmatpush1.msra.mxu0 0.0
    %1729 = vmatprep.subr.mxu0 0.0
    %1730 = vmatpush1.msra.mxu0 0.0
    %1731 = vmatprep.subr.mxu0 0.0
    %1732 = vmatpush1.msra.mxu0 0.0
    %1733 = vmatprep.subr.mxu0 0.0
    %1734 = vmatpush1.msra.mxu0 0.0
    %1735 = vmatprep.subr.mxu0 0.0
    %1736 = vmatpush1.msra.mxu0 0.0
    %1737 = vmatprep.subr.mxu0 0.0
    %1738 = vmatpush1.msra.mxu0 0.0
    %1739 = vmatprep.subr.mxu0 0.0
    %1740 = vmatpush1.msra.mxu0 0.0
    %1741 = vmatprep.subr.mxu0 0.0
    %1742 = vmatpush1.msra.mxu0 0.0
    %1743 = vmatprep.subr.mxu0 0.0
    %1744 = vmatpush1.msra.mxu0 0.0
    %1745 = vmatprep.subr.mxu0 0.0
    %1746 = vmatpush1.msra.mxu0 0.0
    %1747 = vmatprep.subr.mxu0 0.0
    %1748 = vmatpush1.msra.mxu0 0.0
    %1749 = vmatprep.mubr.f32.mxu0 0.0
    %1750 = vmatmul.mubr.f32.gmra.mrb[0].mxu0 %v1584
    %v1751 = vpop.f32.mrb[0].mxu0
    %v1752 = vadd.f32 0.0, %v1751
    %v1753 = vpop.f32.mrb[0].mxu0
    %1754 = vdwg.mxu0
    %v1755 = vadd.f32 %v1684, %v1752
    %v1756 = vtanh.pop %v1755
    %v1757 = vmul.f32 %v1756, 0.5
    %v1758 = vadd.f32 %v1757, 0.5
    %v1759 = vmul.f32 %v1758, %v1502
    %1761 = vrot.lane.b32.xlu0 %v1756, 64
    %v1762 = vpop.permute.xlu0 %1761
    %v1764 = vmul.f32 %v1758, %v1762
    %1766 = vrot.lane.b32.xlu0 %v1764, 32
    %v1767 = vpop.permute.xlu0 %1766
    %v1769 = vadd.f32 %v1759, %v1767
    %v1770 = vtanh.pop %v1769
    %1772 = vrot.lane.b32.xlu0 %v1770, 64
    %v1773 = vpop.permute.xlu0 %1772
    %v1775 = vmul.f32 %v1758, %v1773
    %v1776 = vsel %vm332, %v1679, 0
    %1778 = vmatprep.subr.mxu0 0.0
    %1779 = vmatpush1.msra.mxu0 %v158
    %1780 = vmatprep.subr.mxu0 0.0
    %1781 = vmatpush1.msra.mxu0 %v159
    %1782 = vmatprep.subr.mxu0 0.0
    %1783 = vmatpush1.msra.mxu0 %v160
    %1784 = vmatprep.subr.mxu0 0.0
    %1785 = vmatpush1.msra.mxu0 %v161
    %1786 = vmatprep.subr.mxu0 0.0
    %1787 = vmatpush1.msra.mxu0 0.0
    %1788 = vmatprep.subr.mxu0 0.0
    %1789 = vmatpush1.msra.mxu0 0.0
    %1790 = vmatprep.subr.mxu0 0.0
    %1791 = vmatpush1.msra.mxu0 0.0
    %1792 = vmatprep.subr.mxu0 0.0
    %1793 = vmatpush1.msra.mxu0 0.0
    %1794 = vmatprep.subr.mxu0 0.0
    %1795 = vmatpush1.msra.mxu0 0.0
    %1796 = vmatprep.subr.mxu0 0.0
    %1797 = vmatpush1.msra.mxu0 0.0
    %1798 = vmatprep.subr.mxu0 0.0
    %1799 = vmatpush1.msra.mxu0 0.0
    %1800 = vmatprep.subr.mxu0 0.0
    %1801 = vmatpush1.msra.mxu0 0.0
    %1802 = vmatprep.subr.mxu0 0.0
    %1803 = vmatpush1.msra.mxu0 0.0
    %1804 = vmatprep.subr.mxu0 0.0
    %1805 = vmatpush1.msra.mxu0 0.0
    %1806 = vmatprep.subr.mxu0 0.0
    %1807 = vmatpush1.msra.mxu0 0.0
    %1808 = vmatprep.subr.mxu0 0.0
    %1809 = vmatpush1.msra.mxu0 0.0
    %1810 = vmatprep.subr.mxu0 0.0
    %1811 = vmatpush1.msra.mxu0 0.0
    %1812 = vmatprep.subr.mxu0 0.0
    %1813 = vmatpush1.msra.mxu0 0.0
    %1814 = vmatprep.subr.mxu0 0.0
    %1815 = vmatpush1.msra.mxu0 0.0
    %1816 = vmatprep.subr.mxu0 0.0
    %1817 = vmatpush1.msra.mxu0 0.0
    %1818 = vmatprep.subr.mxu0 0.0
    %1819 = vmatpush1.msra.mxu0 0.0
    %1820 = vmatprep.subr.mxu0 0.0
    %1821 = vmatpush1.msra.mxu0 0.0
    %1822 = vmatprep.subr.mxu0 0.0
    %1823 = vmatpush1.msra.mxu0 0.0
    %1824 = vmatprep.subr.mxu0 0.0
    %1825 = vmatpush1.msra.mxu0 0.0
    %1826 = vmatprep.subr.mxu0 0.0
    %1827 = vmatpush1.msra.mxu0 0.0
    %1828 = vmatprep.subr.mxu0 0.0
    %1829 = vmatpush1.msra.mxu0 0.0
    %1830 = vmatprep.subr.mxu0 0.0
    %1831 = vmatpush1.msra.mxu0 0.0
    %1832 = vmatprep.subr.mxu0 0.0
    %1833 = vmatpush1.msra.mxu0 0.0
    %1834 = vmatprep.subr.mxu0 0.0
    %1835 = vmatpush1.msra.mxu0 0.0
    %1836 = vmatprep.subr.mxu0 0.0
    %1837 = vmatpush1.msra.mxu0 0.0
    %1838 = vmatprep.subr.mxu0 0.0
    %1839 = vmatpush1.msra.mxu0 0.0
    %1840 = vmatprep.subr.mxu0 0.0
    %1841 = vmatpush1.msra.mxu0 0.0
    %1842 = vmatprep.mubr.f32.mxu0 0.0
    %1843 = vmatmul.mubr.f32.gmra.mrb[0].mxu0 %v1776
    %v1844 = vpop.f32.mrb[0].mxu0
    %v1845 = vadd.f32 0.0, %v1844
    %v1846 = vpop.f32.mrb[0].mxu0
    %1847 = vdwg.mxu0
    %1849 = vrot.lane.b32.xlu0 %v1775, 32
    %v1850 = vpop.permute.xlu0 %1849
    %v1851 = vsel %vm332, %v1850, 0
    %1853 = vmatprep.subr.mxu0 0.0
    %1854 = vmatpush1.msra.mxu0 %v154
    %1855 = vmatprep.subr.mxu0 0.0
    %1856 = vmatpush1.msra.mxu0 %v155
    %1857 = vmatprep.subr.mxu0 0.0
    %1858 = vmatpush1.msra.mxu0 %v156
    %1859 = vmatprep.subr.mxu0 0.0
    %1860 = vmatpush1.msra.mxu0 %v157
    %1861 = vmatprep.subr.mxu0 0.0
    %1862 = vmatpush1.msra.mxu0 0.0
    %1863 = vmatprep.subr.mxu0 0.0
    %1864 = vmatpush1.msra.mxu0 0.0
    %1865 = vmatprep.subr.mxu0 0.0
    %1866 = vmatpush1.msra.mxu0 0.0
    %1867 = vmatprep.subr.mxu0 0.0
    %1868 = vmatpush1.msra.mxu0 0.0
    %1869 = vmatprep.subr.mxu0 0.0
    %1870 = vmatpush1.msra.mxu0 0.0
    %1871 = vmatprep.subr.mxu0 0.0
    %1872 = vmatpush1.msra.mxu0 0.0
    %1873 = vmatprep.subr.mxu0 0.0
    %1874 = vmatpush1.msra.mxu0 0.0
    %1875 = vmatprep.subr.mxu0 0.0
    %1876 = vmatpush1.msra.mxu0 0.0
    %1877 = vmatprep.subr.mxu0 0.0
    %1878 = vmatpush1.msra.mxu0 0.0
    %1879 = vmatprep.subr.mxu0 0.0
    %1880 = vmatpush1.msra.mxu0 0.0
    %1881 = vmatprep.subr.mxu0 0.0
    %1882 = vmatpush1.msra.mxu0 0.0
    %1883 = vmatprep.subr.mxu0 0.0
    %1884 = vmatpush1.msra.mxu0 0.0
    %1885 = vmatprep.subr.mxu0 0.0
    %1886 = vmatpush1.msra.mxu0 0.0
    %1887 = vmatprep.subr.mxu0 0.0
    %1888 = vmatpush1.msra.mxu0 0.0
    %1889 = vmatprep.subr.mxu0 0.0
    %1890 = vmatpush1.msra.mxu0 0.0
    %1891 = vmatprep.subr.mxu0 0.0
    %1892 = vmatpush1.msra.mxu0 0.0
    %1893 = vmatprep.subr.mxu0 0.0
    %1894 = vmatpush1.msra.mxu0 0.0
    %1895 = vmatprep.subr.mxu0 0.0
    %1896 = vmatpush1.msra.mxu0 0.0
    %1897 = vmatprep.subr.mxu0 0.0
    %1898 = vmatpush1.msra.mxu0 0.0
    %1899 = vmatprep.subr.mxu0 0.0
    %1900 = vmatpush1.msra.mxu0 0.0
    %1901 = vmatprep.subr.mxu0 0.0
    %1902 = vmatpush1.msra.mxu0 0.0
    %1903 = vmatprep.subr.mxu0 0.0
    %1904 = vmatpush1.msra.mxu0 0.0
    %1905 = vmatprep.subr.mxu0 0.0
    %1906 = vmatpush1.msra.mxu0 0.0
    %1907 = vmatprep.subr.mxu0 0.0
    %1908 = vmatpush1.msra.mxu0 0.0
    %1909 = vmatprep.subr.mxu0 0.0
    %1910 = vmatpush1.msra.mxu0 0.0
    %1911 = vmatprep.subr.mxu0 0.0
    %1912 = vmatpush1.msra.mxu0 0.0
    %1913 = vmatprep.subr.mxu0 0.0
    %1914 = vmatpush1.msra.mxu0 0.0
    %1915 = vmatprep.subr.mxu0 0.0
    %1916 = vmatpush1.msra.mxu0 0.0
    %1917 = vmatprep.mubr.f32.mxu0 0.0
    %1918 = vmatmul.mubr.f32.gmra.mrb[0].mxu0 %v1851
    %v1919 = vpop.f32.mrb[0].mxu0
    %v1920 = vadd.f32 %v1845, %v1919
    %v1921 = vpop.f32.mrb[0].mxu0
    %1922 = vdwg.mxu0
    %v1923 = vadd.f32 %v1920, %v583
    %v1924 = vtanh.pop %v1923
    %v1925 = vmul.f32 %v1924, 0.5
    %v1926 = vadd.f32 %v1925, 0.5
    %v1927 = vmul.f32 %v1926, %v1670
    %1929 = vrot.lane.b32.xlu0 %v1924, 64
    %v1930 = vpop.permute.xlu0 %1929
    %v1932 = vmul.f32 %v1926, %v1930
    %1934 = vrot.lane.b32.xlu0 %v1932, 32
    %v1935 = vpop.permute.xlu0 %1934
    %v1937 = vadd.f32 %v1927, %v1935
    %v1938 = vtanh.pop %v1937
    %1940 = vrot.lane.b32.xlu0 %v1938, 64
    %v1941 = vpop.permute.xlu0 %1940
    %v1943 = vmul.f32 %v1926, %v1941
    %1945 = vrot.lane.b32.xlu0 %v1943, 32
    %v1946 = vpop.permute.xlu0 %1945
    %s1948 = scalar_lea.vmem [#allocation16], 40
    %1949 = vst.msk [vmem:[%s1948] sm:$0xff] %vm332, %v1946
    %s1950 = scalar_lea.vmem [#allocation2], 48
    %v1951 = vld [vmem:[%s1950] sm:$0xff]
    %1952 = vmatprep.subr.mxu0 0.0
    %1953 = vmatpush1.msra.mxu0 %v150
    %1954 = vmatprep.subr.mxu0 0.0
    %1955 = vmatpush1.msra.mxu0 %v151
    %1956 = vmatprep.subr.mxu0 0.0
    %1957 = vmatpush1.msra.mxu0 %v152
    %1958 = vmatprep.subr.mxu0 0.0
    %1959 = vmatpush1.msra.mxu0 %v153
    %1960 = vmatprep.subr.mxu0 0.0
    %1961 = vmatpush1.msra.mxu0 0.0
    %1962 = vmatprep.subr.mxu0 0.0
    %1963 = vmatpush1.msra.mxu0 0.0
    %1964 = vmatprep.subr.mxu0 0.0
    %1965 = vmatpush1.msra.mxu0 0.0
    %1966 = vmatprep.subr.mxu0 0.0
    %1967 = vmatpush1.msra.mxu0 0.0
    %1968 = vmatprep.subr.mxu0 0.0
    %1969 = vmatpush1.msra.mxu0 0.0
    %1970 = vmatprep.subr.mxu0 0.0
    %1971 = vmatpush1.msra.mxu0 0.0
    %1972 = vmatprep.subr.mxu0 0.0
    %1973 = vmatpush1.msra.mxu0 0.0
    %1974 = vmatprep.subr.mxu0 0.0
    %1975 = vmatpush1.msra.mxu0 0.0
    %1976 = vmatprep.subr.mxu0 0.0
    %1977 = vmatpush1.msra.mxu0 0.0
    %1978 = vmatprep.subr.mxu0 0.0
    %1979 = vmatpush1.msra.mxu0 0.0
    %1980 = vmatprep.subr.mxu0 0.0
    %1981 = vmatpush1.msra.mxu0 0.0
    %1982 = vmatprep.subr.mxu0 0.0
    %1983 = vmatpush1.msra.mxu0 0.0
    %1984 = vmatprep.subr.mxu0 0.0
    %1985 = vmatpush1.msra.mxu0 0.0
    %1986 = vmatprep.subr.mxu0 0.0
    %1987 = vmatpush1.msra.mxu0 0.0
    %1988 = vmatprep.subr.mxu0 0.0
    %1989 = vmatpush1.msra.mxu0 0.0
    %1990 = vmatprep.subr.mxu0 0.0
    %1991 = vmatpush1.msra.mxu0 0.0
    %1992 = vmatprep.subr.mxu0 0.0
    %1993 = vmatpush1.msra.mxu0 0.0
    %1994 = vmatprep.subr.mxu0 0.0
    %1995 = vmatpush1.msra.mxu0 0.0
    %1996 = vmatprep.subr.mxu0 0.0
    %1997 = vmatpush1.msra.mxu0 0.0
    %1998 = vmatprep.subr.mxu0 0.0
    %1999 = vmatpush1.msra.mxu0 0.0
    %2000 = vmatprep.subr.mxu0 0.0
    %2001 = vmatpush1.msra.mxu0 0.0
    %2002 = vmatprep.subr.mxu0 0.0
    %2003 = vmatpush1.msra.mxu0 0.0
    %2004 = vmatprep.subr.mxu0 0.0
    %2005 = vmatpush1.msra.mxu0 0.0
    %2006 = vmatprep.subr.mxu0 0.0
    %2007 = vmatpush1.msra.mxu0 0.0
    %2008 = vmatprep.subr.mxu0 0.0
    %2009 = vmatpush1.msra.mxu0 0.0
    %2010 = vmatprep.subr.mxu0 0.0
    %2011 = vmatpush1.msra.mxu0 0.0
    %2012 = vmatprep.subr.mxu0 0.0
    %2013 = vmatpush1.msra.mxu0 0.0
    %2014 = vmatprep.subr.mxu0 0.0
    %2015 = vmatpush1.msra.mxu0 0.0
    %2016 = vmatprep.mubr.f32.mxu0 0.0
    %2017 = vmatmul.mubr.f32.gmra.mrb[0].mxu0 %v1851
    %v2018 = vpop.f32.mrb[0].mxu0
    %v2019 = vadd.f32 0.0, %v2018
    %v2020 = vpop.f32.mrb[0].mxu0
    %2021 = vdwg.mxu0
    %v2022 = vadd.f32 %v1951, %v2019
    %v2023 = vtanh.pop %v2022
    %v2024 = vmul.f32 %v2023, 0.5
    %v2025 = vadd.f32 %v2024, 0.5
    %v2026 = vmul.f32 %v2025, %v1769
    %2028 = vrot.lane.b32.xlu0 %v2023, 64
    %v2029 = vpop.permute.xlu0 %2028
    %v2031 = vmul.f32 %v2025, %v2029
    %2033 = vrot.lane.b32.xlu0 %v2031, 32
    %v2034 = vpop.permute.xlu0 %2033
    %v2036 = vadd.f32 %v2026, %v2034
    %v2037 = vtanh.pop %v2036
    %2039 = vrot.lane.b32.xlu0 %v2037, 64
    %v2040 = vpop.permute.xlu0 %2039
    %v2042 = vmul.f32 %v2025, %v2040
    %v2043 = vsel %vm332, %v1946, 0
    %2045 = vmatprep.subr.mxu0 0.0
    %2046 = vmatpush1.msra.mxu0 %v158
    %2047 = vmatprep.subr.mxu0 0.0
    %2048 = vmatpush1.msra.mxu0 %v159
    %2049 = vmatprep.subr.mxu0 0.0
    %2050 = vmatpush1.msra.mxu0 %v160
    %2051 = vmatprep.subr.mxu0 0.0
    %2052 = vmatpush1.msra.mxu0 %v161
    %2053 = vmatprep.subr.mxu0 0.0
    %2054 = vmatpush1.msra.mxu0 0.0
    %2055 = vmatprep.subr.mxu0 0.0
    %2056 = vmatpush1.msra.mxu0 0.0
    %2057 = vmatprep.subr.mxu0 0.0
    %2058 = vmatpush1.msra.mxu0 0.0
    %2059 = vmatprep.subr.mxu0 0.0
    %2060 = vmatpush1.msra.mxu0 0.0
    %2061 = vmatprep.subr.mxu0 0.0
    %2062 = vmatpush1.msra.mxu0 0.0
    %2063 = vmatprep.subr.mxu0 0.0
    %2064 = vmatpush1.msra.mxu0 0.0
    %2065 = vmatprep.subr.mxu0 0.0
    %2066 = vmatpush1.msra.mxu0 0.0
    %2067 = vmatprep.subr.mxu0 0.0
    %2068 = vmatpush1.msra.mxu0 0.0
    %2069 = vmatprep.subr.mxu0 0.0
    %2070 = vmatpush1.msra.mxu0 0.0
    %2071 = vmatprep.subr.mxu0 0.0
    %2072 = vmatpush1.msra.mxu0 0.0
    %2073 = vmatprep.subr.mxu0 0.0
    %2074 = vmatpush1.msra.mxu0 0.0
    %2075 = vmatprep.subr.mxu0 0.0
    %2076 = vmatpush1.msra.mxu0 0.0
    %2077 = vmatprep.subr.mxu0 0.0
    %2078 = vmatpush1.msra.mxu0 0.0
    %2079 = vmatprep.subr.mxu0 0.0
    %2080 = vmatpush1.msra.mxu0 0.0
    %2081 = vmatprep.subr.mxu0 0.0
    %2082 = vmatpush1.msra.mxu0 0.0
    %2083 = vmatprep.subr.mxu0 0.0
    %2084 = vmatpush1.msra.mxu0 0.0
    %2085 = vmatprep.subr.mxu0 0.0
    %2086 = vmatpush1.msra.mxu0 0.0
    %2087 = vmatprep.subr.mxu0 0.0
    %2088 = vmatpush1.msra.mxu0 0.0
    %2089 = vmatprep.subr.mxu0 0.0
    %2090 = vmatpush1.msra.mxu0 0.0
    %2091 = vmatprep.subr.mxu0 0.0
    %2092 = vmatpush1.msra.mxu0 0.0
    %2093 = vmatprep.subr.mxu0 0.0
    %2094 = vmatpush1.msra.mxu0 0.0
    %2095 = vmatprep.subr.mxu0 0.0
    %2096 = vmatpush1.msra.mxu0 0.0
    %2097 = vmatprep.subr.mxu0 0.0
    %2098 = vmatpush1.msra.mxu0 0.0
    %2099 = vmatprep.subr.mxu0 0.0
    %2100 = vmatpush1.msra.mxu0 0.0
    %2101 = vmatprep.subr.mxu0 0.0
    %2102 = vmatpush1.msra.mxu0 0.0
    %2103 = vmatprep.subr.mxu0 0.0
    %2104 = vmatpush1.msra.mxu0 0.0
    %2105 = vmatprep.subr.mxu0 0.0
    %2106 = vmatpush1.msra.mxu0 0.0
    %2107 = vmatprep.subr.mxu0 0.0
    %2108 = vmatpush1.msra.mxu0 0.0
    %2109 = vmatprep.mubr.f32.mxu0 0.0
    %2110 = vmatmul.mubr.f32.gmra.mrb[0].mxu0 %v2043
    %v2111 = vpop.f32.mrb[0].mxu0
    %v2112 = vadd.f32 0.0, %v2111
    %v2113 = vpop.f32.mrb[0].mxu0
    %2114 = vdwg.mxu0
    %2116 = vrot.lane.b32.xlu0 %v2042, 32
    %v2117 = vpop.permute.xlu0 %2116
    %v2118 = vsel %vm332, %v2117, 0
    %2120 = vmatprep.subr.mxu0 0.0
    %2121 = vmatpush1.msra.mxu0 %v154
    %2122 = vmatprep.subr.mxu0 0.0
    %2123 = vmatpush1.msra.mxu0 %v155
    %2124 = vmatprep.subr.mxu0 0.0
    %2125 = vmatpush1.msra.mxu0 %v156
    %2126 = vmatprep.subr.mxu0 0.0
    %2127 = vmatpush1.msra.mxu0 %v157
    %2128 = vmatprep.subr.mxu0 0.0
    %2129 = vmatpush1.msra.mxu0 0.0
    %2130 = vmatprep.subr.mxu0 0.0
    %2131 = vmatpush1.msra.mxu0 0.0
    %2132 = vmatprep.subr.mxu0 0.0
    %2133 = vmatpush1.msra.mxu0 0.0
    %2134 = vmatprep.subr.mxu0 0.0
    %2135 = vmatpush1.msra.mxu0 0.0
    %2136 = vmatprep.subr.mxu0 0.0
    %2137 = vmatpush1.msra.mxu0 0.0
    %2138 = vmatprep.subr.mxu0 0.0
    %2139 = vmatpush1.msra.mxu0 0.0
    %2140 = vmatprep.subr.mxu0 0.0
    %2141 = vmatpush1.msra.mxu0 0.0
    %2142 = vmatprep.subr.mxu0 0.0
    %2143 = vmatpush1.msra.mxu0 0.0
    %2144 = vmatprep.subr.mxu0 0.0
    %2145 = vmatpush1.msra.mxu0 0.0
    %2146 = vmatprep.subr.mxu0 0.0
    %2147 = vmatpush1.msra.mxu0 0.0
    %2148 = vmatprep.subr.mxu0 0.0
    %2149 = vmatpush1.msra.mxu0 0.0
    %2150 = vmatprep.subr.mxu0 0.0
    %2151 = vmatpush1.msra.mxu0 0.0
    %2152 = vmatprep.subr.mxu0 0.0
    %2153 = vmatpush1.msra.mxu0 0.0
    %2154 = vmatprep.subr.mxu0 0.0
    %2155 = vmatpush1.msra.mxu0 0.0
    %2156 = vmatprep.subr.mxu0 0.0
    %2157 = vmatpush1.msra.mxu0 0.0
    %2158 = vmatprep.subr.mxu0 0.0
    %2159 = vmatpush1.msra.mxu0 0.0
    %2160 = vmatprep.subr.mxu0 0.0
    %2161 = vmatpush1.msra.mxu0 0.0
    %2162 = vmatprep.subr.mxu0 0.0
    %2163 = vmatpush1.msra.mxu0 0.0
    %2164 = vmatprep.subr.mxu0 0.0
    %2165 = vmatpush1.msra.mxu0 0.0
    %2166 = vmatprep.subr.mxu0 0.0
    %2167 = vmatpush1.msra.mxu0 0.0
    %2168 = vmatprep.subr.mxu0 0.0
    %2169 = vmatpush1.msra.mxu0 0.0
    %2170 = vmatprep.subr.mxu0 0.0
    %2171 = vmatpush1.msra.mxu0 0.0
    %2172 = vmatprep.subr.mxu0 0.0
    %2173 = vmatpush1.msra.mxu0 0.0
    %2174 = vmatprep.subr.mxu0 0.0
    %2175 = vmatpush1.msra.mxu0 0.0
    %2176 = vmatprep.subr.mxu0 0.0
    %2177 = vmatpush1.msra.mxu0 0.0
    %2178 = vmatprep.subr.mxu0 0.0
    %2179 = vmatpush1.msra.mxu0 0.0
    %2180 = vmatprep.subr.mxu0 0.0
    %2181 = vmatpush1.msra.mxu0 0.0
    %2182 = vmatprep.subr.mxu0 0.0
    %2183 = vmatpush1.msra.mxu0 0.0
    %2184 = vmatprep.mubr.f32.mxu0 0.0
    %2185 = vmatmul.mubr.f32.gmra.mrb[0].mxu0 %v2118
    %v2186 = vpop.f32.mrb[0].mxu0
    %v2187 = vadd.f32 %v2112, %v2186
    %v2188 = vpop.f32.mrb[0].mxu0
    %2189 = vdwg.mxu0
    %v2190 = vadd.f32 %v2187, %v583
    %v2191 = vtanh.pop %v2190
    %v2192 = vmul.f32 %v2191, 0.5
    %v2193 = vadd.f32 %v2192, 0.5
    %v2194 = vmul.f32 %v2193, %v1937
    %2196 = vrot.lane.b32.xlu0 %v2191, 64
    %v2197 = vpop.permute.xlu0 %2196
    %v2199 = vmul.f32 %v2193, %v2197
    %2201 = vrot.lane.b32.xlu0 %v2199, 32
    %v2202 = vpop.permute.xlu0 %2201
    %v2204 = vadd.f32 %v2194, %v2202
    %v2205 = vtanh.pop %v2204
    %2207 = vrot.lane.b32.xlu0 %v2205, 64
    %v2208 = vpop.permute.xlu0 %2207
    %v2210 = vmul.f32 %v2193, %v2208
    %2212 = vrot.lane.b32.xlu0 %v2210, 32
    %v2213 = vpop.permute.xlu0 %2212
    %s2215 = scalar_lea.vmem [#allocation16], 48
    %2216 = vst.msk [vmem:[%s2215] sm:$0xff] %vm332, %v2213
    %s2217 = scalar_lea.vmem [#allocation2], 56
    %v2218 = vld [vmem:[%s2217] sm:$0xff]
    %2219 = vmatprep.subr.mxu0 0.0
    %2220 = vmatpush1.msra.mxu0 %v150
    %2221 = vmatprep.subr.mxu0 0.0
    %2222 = vmatpush1.msra.mxu0 %v151
    %2223 = vmatprep.subr.mxu0 0.0
    %2224 = vmatpush1.msra.mxu0 %v152
    %2225 = vmatprep.subr.mxu0 0.0
    %2226 = vmatpush1.msra.mxu0 %v153
    %2227 = vmatprep.subr.mxu0 0.0
    %2228 = vmatpush1.msra.mxu0 0.0
    %2229 = vmatprep.subr.mxu0 0.0
    %2230 = vmatpush1.msra.mxu0 0.0
    %2231 = vmatprep.subr.mxu0 0.0
    %2232 = vmatpush1.msra.mxu0 0.0
    %2233 = vmatprep.subr.mxu0 0.0
    %2234 = vmatpush1.msra.mxu0 0.0
    %2235 = vmatprep.subr.mxu0 0.0
    %2236 = vmatpush1.msra.mxu0 0.0
    %2237 = vmatprep.subr.mxu0 0.0
    %2238 = vmatpush1.msra.mxu0 0.0
    %2239 = vmatprep.subr.mxu0 0.0
    %2240 = vmatpush1.msra.mxu0 0.0
    %2241 = vmatprep.subr.mxu0 0.0
    %2242 = vmatpush1.msra.mxu0 0.0
    %2243 = vmatprep.subr.mxu0 0.0
    %2244 = vmatpush1.msra.mxu0 0.0
    %2245 = vmatprep.subr.mxu0 0.0
    %2246 = vmatpush1.msra.mxu0 0.0
    %2247 = vmatprep.subr.mxu0 0.0
    %2248 = vmatpush1.msra.mxu0 0.0
    %2249 = vmatprep.subr.mxu0 0.0
    %2250 = vmatpush1.msra.mxu0 0.0
    %2251 = vmatprep.subr.mxu0 0.0
    %2252 = vmatpush1.msra.mxu0 0.0
    %2253 = vmatprep.subr.mxu0 0.0
    %2254 = vmatpush1.msra.mxu0 0.0
    %2255 = vmatprep.subr.mxu0 0.0
    %2256 = vmatpush1.msra.mxu0 0.0
    %2257 = vmatprep.subr.mxu0 0.0
    %2258 = vmatpush1.msra.mxu0 0.0
    %2259 = vmatprep.subr.mxu0 0.0
    %2260 = vmatpush1.msra.mxu0 0.0
    %2261 = vmatprep.subr.mxu0 0.0
    %2262 = vmatpush1.msra.mxu0 0.0
    %2263 = vmatprep.subr.mxu0 0.0
    %2264 = vmatpush1.msra.mxu0 0.0
    %2265 = vmatprep.subr.mxu0 0.0
    %2266 = vmatpush1.msra.mxu0 0.0
    %2267 = vmatprep.subr.mxu0 0.0
    %2268 = vmatpush1.msra.mxu0 0.0
    %2269 = vmatprep.subr.mxu0 0.0
    %2270 = vmatpush1.msra.mxu0 0.0
    %2271 = vmatprep.subr.mxu0 0.0
    %2272 = vmatpush1.msra.mxu0 0.0
    %2273 = vmatprep.subr.mxu0 0.0
    %2274 = vmatpush1.msra.mxu0 0.0
    %2275 = vmatprep.subr.mxu0 0.0
    %2276 = vmatpush1.msra.mxu0 0.0
    %2277 = vmatprep.subr.mxu0 0.0
    %2278 = vmatpush1.msra.mxu0 0.0
    %2279 = vmatprep.subr.mxu0 0.0
    %2280 = vmatpush1.msra.mxu0 0.0
    %2281 = vmatprep.subr.mxu0 0.0
    %2282 = vmatpush1.msra.mxu0 0.0
    %2283 = vmatprep.mubr.f32.mxu0 0.0
    %2284 = vmatmul.mubr.f32.gmra.mrb[0].mxu0 %v2118
    %v2285 = vpop.f32.mrb[0].mxu0
    %v2286 = vadd.f32 0.0, %v2285
    %v2287 = vpop.f32.mrb[0].mxu0
    %2288 = vdwg.mxu0
    %v2289 = vadd.f32 %v2218, %v2286
    %v2290 = vtanh.pop %v2289
    %v2291 = vmul.f32 %v2290, 0.5
    %v2292 = vadd.f32 %v2291, 0.5
    %v2293 = vmul.f32 %v2292, %v2036
    %2295 = vrot.lane.b32.xlu0 %v2290, 64
    %v2296 = vpop.permute.xlu0 %2295
    %v2298 = vmul.f32 %v2292, %v2296
    %2300 = vrot.lane.b32.xlu0 %v2298, 32
    %v2301 = vpop.permute.xlu0 %2300
    %v2303 = vadd.f32 %v2293, %v2301
    %v2304 = vtanh.pop %v2303
    %2306 = vrot.lane.b32.xlu0 %v2304, 64
    %v2307 = vpop.permute.xlu0 %2306
    %v2309 = vmul.f32 %v2292, %v2307
    %v2310 = vsel %vm332, %v2213, 0
    %2312 = vmatprep.subr.mxu0 0.0
    %2313 = vmatpush1.msra.mxu0 %v158
    %2314 = vmatprep.subr.mxu0 0.0
    %2315 = vmatpush1.msra.mxu0 %v159
    %2316 = vmatprep.subr.mxu0 0.0
    %2317 = vmatpush1.msra.mxu0 %v160
    %2318 = vmatprep.subr.mxu0 0.0
    %2319 = vmatpush1.msra.mxu0 %v161
    %2320 = vmatprep.subr.mxu0 0.0
    %2321 = vmatpush1.msra.mxu0 0.0
    %2322 = vmatprep.subr.mxu0 0.0
    %2323 = vmatpush1.msra.mxu0 0.0
    %2324 = vmatprep.subr.mxu0 0.0
    %2325 = vmatpush1.msra.mxu0 0.0
    %2326 = vmatprep.subr.mxu0 0.0
    %2327 = vmatpush1.msra.mxu0 0.0
    %2328 = vmatprep.subr.mxu0 0.0
    %2329 = vmatpush1.msra.mxu0 0.0
    %2330 = vmatprep.subr.mxu0 0.0
    %2331 = vmatpush1.msra.mxu0 0.0
    %2332 = vmatprep.subr.mxu0 0.0
    %2333 = vmatpush1.msra.mxu0 0.0
    %2334 = vmatprep.subr.mxu0 0.0
    %2335 = vmatpush1.msra.mxu0 0.0
    %2336 = vmatprep.subr.mxu0 0.0
    %2337 = vmatpush1.msra.mxu0 0.0
    %2338 = vmatprep.subr.mxu0 0.0
    %2339 = vmatpush1.msra.mxu0 0.0
    %2340 = vmatprep.subr.mxu0 0.0
    %2341 = vmatpush1.msra.mxu0 0.0
    %2342 = vmatprep.subr.mxu0 0.0
    %2343 = vmatpush1.msra.mxu0 0.0
    %2344 = vmatprep.subr.mxu0 0.0
    %2345 = vmatpush1.msra.mxu0 0.0
    %2346 = vmatprep.subr.mxu0 0.0
    %2347 = vmatpush1.msra.mxu0 0.0
    %2348 = vmatprep.subr.mxu0 0.0
    %2349 = vmatpush1.msra.mxu0 0.0
    %2350 = vmatprep.subr.mxu0 0.0
    %2351 = vmatpush1.msra.mxu0 0.0
    %2352 = vmatprep.subr.mxu0 0.0
    %2353 = vmatpush1.msra.mxu0 0.0
    %2354 = vmatprep.subr.mxu0 0.0
    %2355 = vmatpush1.msra.mxu0 0.0
    %2356 = vmatprep.subr.mxu0 0.0
    %2357 = vmatpush1.msra.mxu0 0.0
    %2358 = vmatprep.subr.mxu0 0.0
    %2359 = vmatpush1.msra.mxu0 0.0
    %2360 = vmatprep.subr.mxu0 0.0
    %2361 = vmatpush1.msra.mxu0 0.0
    %2362 = vmatprep.subr.mxu0 0.0
    %2363 = vmatpush1.msra.mxu0 0.0
    %2364 = vmatprep.subr.mxu0 0.0
    %2365 = vmatpush1.msra.mxu0 0.0
    %2366 = vmatprep.subr.mxu0 0.0
    %2367 = vmatpush1.msra.mxu0 0.0
    %2368 = vmatprep.subr.mxu0 0.0
    %2369 = vmatpush1.msra.mxu0 0.0
    %2370 = vmatprep.subr.mxu0 0.0
    %2371 = vmatpush1.msra.mxu0 0.0
    %2372 = vmatprep.subr.mxu0 0.0
    %2373 = vmatpush1.msra.mxu0 0.0
    %2374 = vmatprep.subr.mxu0 0.0
    %2375 = vmatpush1.msra.mxu0 0.0
    %2376 = vmatprep.mubr.f32.mxu0 0.0
    %2377 = vmatmul.mubr.f32.gmra.mrb[0].mxu0 %v2310
    %v2378 = vpop.f32.mrb[0].mxu0
    %v2379 = vadd.f32 0.0, %v2378
    %v2380 = vpop.f32.mrb[0].mxu0
    %2381 = vdwg.mxu0
    %2383 = vrot.lane.b32.xlu0 %v2309, 32
    %v2384 = vpop.permute.xlu0 %2383
    %v2385 = vsel %vm332, %v2384, 0
    %2387 = vmatprep.subr.mxu0 0.0
    %2388 = vmatpush1.msra.mxu0 %v154
    %2389 = vmatprep.subr.mxu0 0.0
    %2390 = vmatpush1.msra.mxu0 %v155
    %2391 = vmatprep.subr.mxu0 0.0
    %2392 = vmatpush1.msra.mxu0 %v156
    %2393 = vmatprep.subr.mxu0 0.0
    %2394 = vmatpush1.msra.mxu0 %v157
    %2395 = vmatprep.subr.mxu0 0.0
    %2396 = vmatpush1.msra.mxu0 0.0
    %2397 = vmatprep.subr.mxu0 0.0
    %2398 = vmatpush1.msra.mxu0 0.0
    %2399 = vmatprep.subr.mxu0 0.0
    %2400 = vmatpush1.msra.mxu0 0.0
    %2401 = vmatprep.subr.mxu0 0.0
    %2402 = vmatpush1.msra.mxu0 0.0
    %2403 = vmatprep.subr.mxu0 0.0
    %2404 = vmatpush1.msra.mxu0 0.0
    %2405 = vmatprep.subr.mxu0 0.0
    %2406 = vmatpush1.msra.mxu0 0.0
    %2407 = vmatprep.subr.mxu0 0.0
    %2408 = vmatpush1.msra.mxu0 0.0
    %2409 = vmatprep.subr.mxu0 0.0
    %2410 = vmatpush1.msra.mxu0 0.0
    %2411 = vmatprep.subr.mxu0 0.0
    %2412 = vmatpush1.msra.mxu0 0.0
    %2413 = vmatprep.subr.mxu0 0.0
    %2414 = vmatpush1.msra.mxu0 0.0
    %2415 = vmatprep.subr.mxu0 0.0
    %2416 = vmatpush1.msra.mxu0 0.0
    %2417 = vmatprep.subr.mxu0 0.0
    %2418 = vmatpush1.msra.mxu0 0.0
    %2419 = vmatprep.subr.mxu0 0.0
    %2420 = vmatpush1.msra.mxu0 0.0
    %2421 = vmatprep.subr.mxu0 0.0
    %2422 = vmatpush1.msra.mxu0 0.0
    %2423 = vmatprep.subr.mxu0 0.0
    %2424 = vmatpush1.msra.mxu0 0.0
    %2425 = vmatprep.subr.mxu0 0.0
    %2426 = vmatpush1.msra.mxu0 0.0
    %2427 = vmatprep.subr.mxu0 0.0
    %2428 = vmatpush1.msra.mxu0 0.0
    %2429 = vmatprep.subr.mxu0 0.0
    %2430 = vmatpush1.msra.mxu0 0.0
    %2431 = vmatprep.subr.mxu0 0.0
    %2432 = vmatpush1.msra.mxu0 0.0
    %2433 = vmatprep.subr.mxu0 0.0
    %2434 = vmatpush1.msra.mxu0 0.0
    %2435 = vmatprep.subr.mxu0 0.0
    %2436 = vmatpush1.msra.mxu0 0.0
    %2437 = vmatprep.subr.mxu0 0.0
    %2438 = vmatpush1.msra.mxu0 0.0
    %2439 = vmatprep.subr.mxu0 0.0
    %2440 = vmatpush1.msra.mxu0 0.0
    %2441 = vmatprep.subr.mxu0 0.0
    %2442 = vmatpush1.msra.mxu0 0.0
    %2443 = vmatprep.subr.mxu0 0.0
    %2444 = vmatpush1.msra.mxu0 0.0
    %2445 = vmatprep.subr.mxu0 0.0
    %2446 = vmatpush1.msra.mxu0 0.0
    %2447 = vmatprep.subr.mxu0 0.0
    %2448 = vmatpush1.msra.mxu0 0.0
    %2449 = vmatprep.subr.mxu0 0.0
    %2450 = vmatpush1.msra.mxu0 0.0
    %2451 = vmatprep.mubr.f32.mxu0 0.0
    %2452 = vmatmul.mubr.f32.gmra.mrb[0].mxu0 %v2385
    %v2453 = vpop.f32.mrb[0].mxu0
    %v2454 = vadd.f32 %v2379, %v2453
    %v2455 = vpop.f32.mrb[0].mxu0
    %2456 = vdwg.mxu0
    %v2457 = vadd.f32 %v2454, %v583
    %v2458 = vtanh.pop %v2457
    %v2459 = vmul.f32 %v2458, 0.5
    %v2460 = vadd.f32 %v2459, 0.5
    %v2461 = vmul.f32 %v2460, %v2204
    %2463 = vrot.lane.b32.xlu0 %v2458, 64
    %v2464 = vpop.permute.xlu0 %2463
    %v2466 = vmul.f32 %v2460, %v2464
    %2468 = vrot.lane.b32.xlu0 %v2466, 32
    %v2469 = vpop.permute.xlu0 %2468
    %v2471 = vadd.f32 %v2461, %v2469
    %v2472 = vtanh.pop %v2471
    %2474 = vrot.lane.b32.xlu0 %v2472, 64
    %v2475 = vpop.permute.xlu0 %2474
    %v2477 = vmul.f32 %v2460, %v2475
    %2479 = vrot.lane.b32.xlu0 %v2477, 32
    %v2480 = vpop.permute.xlu0 %2479
    %s2482 = scalar_lea.vmem [#allocation16], 56
    %2483 = vst.msk [vmem:[%s2482] sm:$0xff] %vm332, %v2480
    %2485 = vst.msk [vmem:[#allocation3] sm:$0xff] %vm332, %v2384
    %2487 = vrot.lane.b32.xlu0 %v2303, 96
    %v2488 = vpop.permute.xlu0 %2487
    %2490 = vst.msk [vmem:[%s325] sm:$0xff] %vm332, %v2488
    %2491 = vst.msk [vmem:[%s327] sm:$0xff] %vm332, %v2480
    %2493 = vrot.lane.b32.xlu0 %v2471, 96
    %v2494 = vpop.permute.xlu0 %2493
    %2496 = vst.msk [vmem:[%s329] sm:$0xff] %vm332, %v2494
    // Predicated region
    $region70: #{tpu_custom_call.1} parent=1 // pred_check
      %p2497 = pneg %p132
    $region71: #{tpu_custom_call.1} parent=1 // pred_check_branch
      %2499 = sbr.rel (%p2497) target = $region73
    $region72: #{tpu_custom_call.1} parent=1 // pred_region
      %v2500 = vld [vmem:[#allocation3] sm:$0xff]
      %2501 = vst.msk [vmem:[#allocation17] sm:$0xff] %vm332, %v2500
      %v2502 = vld [vmem:[%s327] sm:$0xff]
      %s2503 = scalar_lea.vmem [#allocation17], 8
      %2504 = vst.msk [vmem:[%s2503] sm:$0xff] %vm332, %v2502
      %v2505 = vld [vmem:[%s325] sm:$0xff]
      %2506 = vst.msk [vmem:[#allocation19] sm:$0xff] %vm332, %v2505
      %v2507 = vld [vmem:[%s329] sm:$0xff]
      %s2508 = scalar_lea.vmem [#allocation19], 8
      %2509 = vst.msk [vmem:[%s2508] sm:$0xff] %vm332, %v2507
    $region73: #{tpu_custom_call.1} parent=1 // pred_fallthru
      _
    // Predicated region
    $region74: #{tpu_custom_call.1} parent=1 // pred_check
      _
    $region75: #{tpu_custom_call.1} parent=1 // pred_check_branch
      %2511 = sbr.rel (0) target = $region77
    $region76: #{tpu_custom_call.1} parent=1 // pred_region
      %s2513 = ssub.s32 1024, 1024
      %2514 = vsyncadd [#allocation6], %s2513
      %s2515 = sshll.u32 [#allocation16], 4
      %s2516 = int_to_ptr.vmem [resolvable:$true] %s2515
      %2521 = dma.vmem_to_hbm [thread:$0]  %s2516, 1024, %s9, [#allocation6], 128, 128, 8
    $region77: #{tpu_custom_call.1} parent=1 // pred_fallthru
      _
    // Predicated region
    $region78: #{tpu_custom_call.1} parent=1 // pred_check
      _
    $region79: #{tpu_custom_call.1} parent=1 // pred_check_branch
      %2523 = sbr.rel (0) target = $region81
    $region80: #{tpu_custom_call.1} parent=1 // pred_region
      %s2525 = ssub.s32 256, 256
      %2526 = vsyncadd [#allocation18], %s2525
      %s2527 = sshll.u32 [#allocation17], 4
      %s2528 = int_to_ptr.vmem [resolvable:$true] %s2527
      %2533 = dma.vmem_to_hbm [thread:$0]  %s2528, 256, %s10, [#allocation18], 128, 128, 8
    $region81: #{tpu_custom_call.1} parent=1 // pred_fallthru
      _
    // Predicated region
    $region82: #{tpu_custom_call.1} parent=1 // pred_check
      _
    $region83: #{tpu_custom_call.1} parent=1 // pred_check_branch
      %2535 = sbr.rel (0) target = $region85
    $region84: #{tpu_custom_call.1} parent=1 // pred_region
      %s2537 = ssub.s32 256, 256
      %2538 = vsyncadd [#allocation18], %s2537
      %s2539 = sshll.u32 [#allocation19], 4
      %s2540 = int_to_ptr.vmem [resolvable:$true] %s2539
      %2545 = dma.vmem_to_hbm [thread:$0]  %s2540, 256, %s11, [#allocation18], 128, 128, 8
    $region85: #{tpu_custom_call.1} parent=1 // pred_fallthru
      _
    // Predicated region
    $region86: #{tpu_custom_call.1} parent=1 // pred_check
      _
    $region87: #{tpu_custom_call.1} parent=1 // pred_check_branch
      %2547 = sbr.rel (0) target = $region89
    $region88: #{tpu_custom_call.1} parent=1 // pred_region
      %2548 = dma.done [#allocation6], 1024
    $region89: #{tpu_custom_call.1} parent=1 // pred_fallthru
      _
    // Predicated region
    $region90: #{tpu_custom_call.1} parent=1 // pred_check
      _
    $region91: #{tpu_custom_call.1} parent=1 // pred_check_branch
      %2550 = sbr.rel (0) target = $region93
    $region92: #{tpu_custom_call.1} parent=1 // pred_region
      %2551 = dma.done [#allocation18], 256
    $region93: #{tpu_custom_call.1} parent=1 // pred_fallthru
      _
    // Predicated region
    $region94: #{tpu_custom_call.1} parent=1 // pred_check
      _
    $region95: #{tpu_custom_call.1} parent=1 // pred_check_branch
      %2553 = sbr.rel (0) target = $region97
    $region96: #{tpu_custom_call.1} parent=1 // pred_region
      %2554 = dma.done [#allocation18], 256
    $region97: #{tpu_custom_call.1} parent=1 // pred_fallthru
      _
    %2555 = vsyncpa [#allocation5], 1
    %2556 = vsyncpa [#allocation8], 1
    %2557 = vsyncpa [#allocation11], 1
    %2558 = vsyncpa [#allocation14], 1
    %2559 = vsyncpa [#allocation6], 1
    %2560 = vsyncpa [#allocation18], 1

</llo_original>
